<compile_context>
chip_gen: v7x
topology: tpu7x:2x2x1
jax: 0.10.0
libtpu: 0.0.40
codegen_flags: <defaults>
</compile_context>

<pallas_src>
import functools
import math

import jax
import jax.numpy as jnp
import numpy as np
from jax import lax
from jax.experimental import pallas as pl
from jax.experimental.pallas import tpu as pltpu

_LANE = 128


def _round_up(x, m):
    return ((x + m - 1) // m) * m


def _cdiv(a, b):
    return -(-a // b)


def _matcher_kernel(keys_ref, qin_ref, vm_ref, qout_ref, out_ref, *,
                    obj_n, d_val, lane_dense_keys):
    """One grid step == one spatial tile of n.

    keys_ref : (d_key, bank_n) bf16 if lane_dense_keys else (bank_n, d_key) bf16,
               pre-scaled by 1/sqrt(d_key); grid-invariant.
    qin_ref  : (d_key, tile_n)                  bf16
    vm_ref   : (obj_n*d_val + obj_n, bank_n)    bf16  (values rows, then mask rows);
               grid-invariant.
    qout_ref : (obj_q, d_val, tile_n)           out dtype (obj_q = 1 if pre else obj_n)
    out_ref  : (obj_n, 2*d_val, tile_n)         out dtype
    """
    if lane_dense_keys:
        # Contract dim 0 of both operands (K^T q) without relayouting keys.
        s = lax.dot_general(keys_ref[...], qin_ref[...],
                            dimension_numbers=(((0,), (0,)), ((), ())),
                            preferred_element_type=jnp.float32)
    else:
        # Fallback: keys were pre-transposed in the wrapper (lane-sparse).
        s = jnp.dot(keys_ref[...], qin_ref[...],
                    preferred_element_type=jnp.float32)
    # s: (bank_n, tile_n) f32.  Numerically-stable exp over the bank dim;
    # normalization is deferred past the readout matmul.
    e = jnp.exp(s - jnp.max(s, axis=0, keepdims=True))            # (bank_n, tile_n) f32
    inv_denom = pl.reciprocal(jnp.sum(e, axis=0, keepdims=True),
                              approx=False)                        # (1, tile_n) f32

    # Single fused readout matmul for all objects' values and mask rows.
    readout = jnp.dot(vm_ref[...], e.astype(jnp.bfloat16),
                      preferred_element_type=jnp.float32)          # (obj_n*(d_val+1), tile_n)
    readout = readout * inv_denom                                  # deferred softmax norm

    mem_all = readout[: obj_n * d_val, :].reshape(obj_n, d_val, -1)
    mask_all = readout[obj_n * d_val:, :].reshape(obj_n, 1, -1)

    # Two whole-block stores (lane-dense; d_val is a multiple of 8 so the
    # sublane slice is aligned).  qout broadcasts over obj_n when pre=True.
    out_ref[:, :d_val, :] = mem_all.astype(out_ref.dtype)
    out_ref[:, d_val:, :] = (qout_ref[...] * mask_all).astype(out_ref.dtype)


def matcher_forward(keys, q_in, q_out, values, masks, pre=False,
                    tile_n=None, out_dtype=None):
    """Pallas implementation of Matcher.forward (f_i < 0 path).

    keys   : (d_key, bank_n)
    q_in   : (1, d_key, n)
    q_out  : (obj_n, d_val, n) if not pre, else (1, d_val, n) / (d_val, n)
    values : (obj_n, d_val, bank_n)
    masks  : (obj_n, 1, bank_n)
    returns: (1, obj_n, 2*d_val, n)
    """
    d_key, bank_n = keys.shape
    bs, _, n = q_in.shape
    assert bs == 1, "kernel implemented for bs=1 (as used in TELG)"
    obj_n, d_val, _ = values.shape
    if out_dtype is None:
        out_dtype = q_in.dtype                       # set to bf16 to halve HBM writeback

    # ---- one-time HBM-side prep ----------------------------------------------
    # Fold 1/sqrt(d_key) into the keys bf16 cast (once per call, not per tile).
    keys_dense = (keys.astype(jnp.float32) * (1.0 / math.sqrt(d_key))
                  ).astype(jnp.bfloat16)                           # (d_key, bank_n)
    keys_sparse = jnp.transpose(keys_dense, (1, 0))                # fallback layout
    q_in2d = q_in[0].astype(jnp.bfloat16)                          # (d_key, n)

    # Fold all objects' values and mask rows into one readout matrix:
    #   rows [0, obj_n*d_val)                -> values of object i at i*d_val
    #   rows [obj_n*d_val, obj_n*(d_val+1))  -> mask row of object i
    vm_flat = jnp.concatenate(
        [values.reshape(obj_n * d_val, bank_n),
         masks.reshape(obj_n, bank_n)], axis=0).astype(jnp.bfloat16)

    if pre:
        q_out_obj = jnp.reshape(q_out, (1, d_val, n)).astype(out_dtype)
    else:
        q_out_obj = jnp.reshape(q_out, (obj_n, d_val, n)).astype(out_dtype)
    obj_q = q_out_obj.shape[0]

    # ---- chip info ------------------------------------------------------------
    phys_vmem = 64 << 20
    try:  # best effort; v7x has 64 MiB per TC, v5e/v6e have 128 MiB
        phys_vmem = int(pltpu.get_tpu_info().vmem_capacity_bytes)
    except Exception:
        pass

    # ---- spatial tiling: lane-dense, minimal padding, >=2 tiles when possible --
    n128 = _round_up(n, _LANE)
    n_blocks = n128 // _LANE
    if tile_n is None:
        cap_blocks = 8 if phys_vmem >= (96 << 20) else 4   # 1024 on v5e/v6e, 512 on v7x
        num_tiles = max(_cdiv(n_blocks, cap_blocks), 2 if n_blocks >= 2 else 1)
        tile_n = _LANE * _cdiv(n_blocks, num_tiles)
    else:
        tile_n = _round_up(tile_n, _LANE)
    num_tiles = _cdiv(n_blocks, tile_n // _LANE)
    n_pad = num_tiles * tile_n
    if n_pad != n:
        q_in2d = jnp.pad(q_in2d, ((0, 0), (0, n_pad - n)))
        q_out_obj = jnp.pad(q_out_obj, ((0, 0), (0, 0), (0, n_pad - n)))

    # ---- VMEM budget (pessimistic: double-buffered, lane-padded keys) ---------
    out_isize = jnp.dtype(out_dtype).itemsize
    block_bytes = (bank_n * max(d_key, _LANE) * 2                    # keys
                   + obj_n * (d_val + 1) * bank_n * 2                # values+masks
                   + d_key * tile_n * 2                              # q_in
                   + obj_q * d_val * tile_n * out_isize              # q_out
                   + obj_n * 2 * d_val * tile_n * out_isize)         # out
    interm_bytes = (2 * bank_n * tile_n * 4 + bank_n * tile_n * 2
                    + 2 * obj_n * (d_val + 1) * tile_n * 4)
    vmem_limit = int(min(max(2 * block_bytes + interm_bytes + (4 << 20), 32 << 20),
                         (phys_vmem * 3) // 4))

    def run(lane_dense_keys, single_buffer):
        kernel = functools.partial(_matcher_kernel, obj_n=obj_n, d_val=d_val,
                                   lane_dense_keys=lane_dense_keys)
        inv_kwargs = dict(pipeline_mode=pl.Buffered(1)) if single_buffer else {}
        if lane_dense_keys:
            keys_op = keys_dense
            keys_spec = pl.BlockSpec((d_key, bank_n), lambda j: (0, 0), **inv_kwargs)
        else:
            keys_op = keys_sparse
            keys_spec = pl.BlockSpec((bank_n, d_key), lambda j: (0, 0), **inv_kwargs)
        return pl.pallas_call(
            kernel,
            out_shape=jax.ShapeDtypeStruct((obj_n, 2 * d_val, n_pad), out_dtype),
            grid_spec=pltpu.PrefetchScalarGridSpec(
                num_scalar_prefetch=0,
                grid=(num_tiles,),
                in_specs=[
                    keys_spec,                                                  # keys (scaled)
                    pl.BlockSpec((d_key, tile_n), lambda j: (0, j)),            # q_in
                    pl.BlockSpec((obj_n * (d_val + 1), bank_n),
                                 lambda j: (0, 0), **inv_kwargs),               # values+masks
                    pl.BlockSpec((obj_q, d_val, tile_n), lambda j: (0, 0, j)),  # q_out
                ],
                out_specs=pl.BlockSpec((obj_n, 2 * d_val, tile_n),
                                       lambda j: (0, 0, j)),
            ),
            compiler_params=pltpu.CompilerParams(
                dimension_semantics=("parallel",),   # each n-tile is independent
                vmem_limit_bytes=vmem_limit),
        )(keys_op, q_in2d, vm_flat, q_out_obj)

    # Preferred config first; degrade gracefully on jax/Mosaic versions that
    # reject single-buffering or the transposed-lhs (lane-dense keys) matmul.
    out = None
    last_err = None
    for cfg in ((True, True), (True, False), (False, True), (False, False)):
        try:
            out = run(*cfg)
            break
        except Exception as err:  # lowering / API availability differences
            last_err = err
    if out is None:
        raise last_err

    out = out[:, :, :n]
    # torch.stack(..., dim=0).transpose(0, 1) with bs==1 -> (1, obj_n, 2*d_val, n)
    return out.reshape(1, obj_n, 2 * d_val, n)


def _reference(keys, q_in, q_out, values, masks, pre=False):
    """Pure-JAX f32 reference; MXU operands are bf16-rounded exactly like the
    kernel (keys pre-scaled then rounded), everything else in f32."""
    d_key = keys.shape[0]
    rd = lambda x: x.astype(jnp.bfloat16).astype(jnp.float32)
    keys_r = rd(keys * (1.0 / math.sqrt(d_key)))
    q_in_r = rd(q_in)
    values_r = rd(values)
    masks_r = rd(masks)
    s = jnp.einsum("db,sdn->sbn", keys_r, q_in_r)
    p = jax.nn.softmax(s, axis=1)[0]                               # (bank_n, n) f32
    q_out3 = q_out.reshape(-1, q_out.shape[-2], q_out.shape[-1]).astype(jnp.float32)
    outs = []
    for i in range(values.shape[0]):
        mem = values_r[i] @ p                                      # (d_val, n)
        mask_mem = masks_r[i] @ p                                  # (1, n)
        qo = q_out3[0] if pre else q_out3[i]
        outs.append(jnp.concatenate([mem, qo * mask_mem], axis=0))
    return jnp.stack(outs, axis=0)[None]                           # (1, obj_n, 2*d_val, n)


if __name__ == "__main__":
    key = jax.random.PRNGKey(0)
    d_key, d_val = 32, 32
    bank_n = 128          # e.g. one memory frame of 8x16
    h, w = 8, 32
    n = h * w             # 256 -> two 128-wide spatial tiles (both TCs busy on v7x)
    obj_n = 3

    k1, k2, k3, k4, k5 = jax.random.split(key, 5)
    keys = jax.random.normal(k1, (d_key, bank_n), dtype=jnp.float32)
    q_in = jax.random.normal(k2, (1, d_key, n), dtype=jnp.float32)
    values = jax.random.normal(k3, (obj_n, d_val, bank_n), dtype=jnp.float32)
    masks = jax.nn.sigmoid(
        jax.random.normal(k4, (obj_n, 1, bank_n), dtype=jnp.float32))
    q_out = jax.random.normal(k5, (obj_n, d_val, n), dtype=jnp.float32)

    # pre=False path
    out = matcher_forward(keys, q_in, q_out, values, masks, pre=False)
    out = jax.block_until_ready(out)
    ref = jax.block_until_ready(_reference(keys, q_in, q_out, values, masks, pre=False))
    assert out.shape == (1, obj_n, 2 * d_val, n), out.shape
    np.testing.assert_allclose(np.asarray(out), np.asarray(ref),
                               rtol=2e-2, atol=2e-2)

    # pre=True path (shared q_out block broadcast inside the kernel, no HBM broadcast)
    q_out_pre = jax.random.normal(k5, (1, d_val, n), dtype=jnp.float32)
    out_pre = jax.block_until_ready(
        matcher_forward(keys, q_in, q_out_pre, values, masks, pre=True))
    ref_pre = jax.block_until_ready(
        _reference(keys, q_in, q_out_pre, values, masks, pre=True))
    assert out_pre.shape == (1, obj_n, 2 * d_val, n), out_pre.shape
    np.testing.assert_allclose(np.asarray(out_pre), np.asarray(ref_pre),
                               rtol=2e-2, atol=2e-2)

    print("KERNEL_OK")
</pallas_src>

<mosaic_0001>
module attributes {stable_mosaic.version = 11 : i64} {
  func.func @_matcher_kernel(%arg0: i32, %arg1: memref<32x128xbf16, #tpu.memory_space<vmem>>, %arg2: memref<32x128xbf16, #tpu.memory_space<vmem>>, %arg3: memref<99x128xbf16, #tpu.memory_space<vmem>>, %arg4: memref<3x32x128xf32, #tpu.memory_space<vmem>>, %arg5: memref<3x64x128xf32, #tpu.memory_space<vmem>>) attributes {dimension_semantics = [#tpu.dimension_semantics<parallel>], iteration_bounds = array<i64: 2>, scalar_prefetch = 0 : i64, scratch_operands = 0 : i64, tpu.core_type = #tpu.core_type<tc>, window_params = [{pipeline_mode = #tpu.pipeline_mode<synchronous>, transform_indices = @transform_0, window_bounds = array<i64: 32, 128>}, {transform_indices = @transform_1, window_bounds = array<i64: 32, 128>}, {pipeline_mode = #tpu.pipeline_mode<synchronous>, transform_indices = @transform_2, window_bounds = array<i64: 99, 128>}, {transform_indices = @transform_3, window_bounds = array<i64: 3, 32, 128>}, {transform_indices = @transform_4, window_bounds = array<i64: 3, 64, 128>}]} {
    %c0 = arith.constant 0 : index
    %c0_0 = arith.constant 0 : index
    %0 = vector.load %arg1[%c0, %c0_0] : memref<32x128xbf16, #tpu.memory_space<vmem>>, vector<32x128xbf16>
    %c0_1 = arith.constant 0 : index
    %c0_2 = arith.constant 0 : index
    %1 = vector.load %arg2[%c0_1, %c0_2] : memref<32x128xbf16, #tpu.memory_space<vmem>>, vector<32x128xbf16>
    %cst = arith.constant dense<0.000000e+00> : vector<128x128xf32>
    %2 = tpu.matmul %0, %1, %cst {dimension_numbers = #tpu.dot_dimension_numbers<[0], [0], [1], [1], [0, 1, 1, 1], [], []>} : vector<32x128xbf16>, vector<32x128xbf16>, vector<128x128xf32> -> vector<128x128xf32>
    %cst_3 = arith.constant dense<0xFF800000> : vector<128xf32>
    %3 = vector.multi_reduction <maximumf>, %2, %cst_3 [0] : vector<128x128xf32> to vector<128xf32>
    %4 = vector.shape_cast %3 : vector<128xf32> to vector<1x128xf32>
    %5 = vector.broadcast %4 : vector<1x128xf32> to vector<128x128xf32>
    %6 = arith.subf %2, %5 : vector<128x128xf32>
    %7 = math.exp %6 : vector<128x128xf32>
    %cst_4 = arith.constant dense<0.000000e+00> : vector<128xf32>
    %8 = vector.multi_reduction <add>, %7, %cst_4 [0] : vector<128x128xf32> to vector<128xf32>
    %9 = vector.shape_cast %8 : vector<128xf32> to vector<1x128xf32>
    %10 = tpu.reciprocal %9 : vector<1x128xf32> -> vector<1x128xf32>
    %c0_5 = arith.constant 0 : index
    %c0_6 = arith.constant 0 : index
    %11 = vector.load %arg3[%c0_5, %c0_6] : memref<99x128xbf16, #tpu.memory_space<vmem>>, vector<99x128xbf16>
    %12 = arith.truncf %7 : vector<128x128xf32> to vector<128x128xbf16>
    %cst_7 = arith.constant dense<0.000000e+00> : vector<99x128xf32>
    %13 = tpu.matmul %11, %12, %cst_7 {dimension_numbers = #tpu.dot_dimension_numbers<[1], [0], [0], [1], [0, 0, 1, 1], [], []>} : vector<99x128xbf16>, vector<128x128xbf16>, vector<99x128xf32> -> vector<99x128xf32>
    %14 = vector.broadcast %10 : vector<1x128xf32> to vector<99x128xf32>
    %15 = arith.mulf %13, %14 : vector<99x128xf32>
    %16 = vector.extract_strided_slice %15 {offsets = [0, 0], sizes = [96, 128], strides = [1, 1]} : vector<99x128xf32> to vector<96x128xf32>
    %17 = vector.shape_cast %16 : vector<96x128xf32> to vector<3x32x128xf32>
    %18 = vector.extract_strided_slice %15 {offsets = [96, 0], sizes = [3, 128], strides = [1, 1]} : vector<99x128xf32> to vector<3x128xf32>
    %19 = vector.shape_cast %18 : vector<3x128xf32> to vector<3x1x128xf32>
    %c0_8 = arith.constant 0 : index
    %c0_9 = arith.constant 0 : index
    %c0_10 = arith.constant 0 : index
    %20 = vector.load %arg5[%c0_8, %c0_9, %c0_10] : memref<3x64x128xf32, #tpu.memory_space<vmem>>, vector<3x32x128xf32>
    tpu.vector_store %arg5[%c0_8, %c0_9, %c0_10], %17 {strides = array<i32>} : memref<3x64x128xf32, #tpu.memory_space<vmem>>, vector<3x32x128xf32>,
    %c0_11 = arith.constant 0 : index
    %c0_12 = arith.constant 0 : index
    %c0_13 = arith.constant 0 : index
    %21 = vector.load %arg4[%c0_11, %c0_12, %c0_13] : memref<3x32x128xf32, #tpu.memory_space<vmem>>, vector<3x32x128xf32>
    %22 = vector.broadcast %19 : vector<3x1x128xf32> to vector<3x32x128xf32>
    %23 = arith.mulf %21, %22 : vector<3x32x128xf32>
    %c0_14 = arith.constant 0 : index
    %c32 = arith.constant 32 : index
    %c0_15 = arith.constant 0 : index
    %24 = vector.load %arg5[%c0_14, %c32, %c0_15] : memref<3x64x128xf32, #tpu.memory_space<vmem>>, vector<3x32x128xf32>
    tpu.vector_store %arg5[%c0_14, %c32, %c0_15], %23 {strides = array<i32>} : memref<3x64x128xf32, #tpu.memory_space<vmem>>, vector<3x32x128xf32>,
    return
  }
  func.func @transform_0(%arg0: i32) -> (i32, i32) {
    %c0_i32 = arith.constant 0 : i32
    %c0_i32_0 = arith.constant 0 : i32
    %c0_i32_1 = arith.constant 0 : i32
    return %c0_i32, %c0_i32_0 : i32, i32
  }
  func.func @transform_1(%arg0: i32) -> (i32, i32) {
    %c0_i32 = arith.constant 0 : i32
    %c0_i32_0 = arith.constant 0 : i32
    return %c0_i32, %arg0 : i32, i32
  }
  func.func @transform_2(%arg0: i32) -> (i32, i32) {
    %c0_i32 = arith.constant 0 : i32
    %c0_i32_0 = arith.constant 0 : i32
    %c0_i32_1 = arith.constant 0 : i32
    return %c0_i32, %c0_i32_0 : i32, i32
  }
  func.func @transform_3(%arg0: i32) -> (i32, i32, i32) {
    %c0_i32 = arith.constant 0 : i32
    %c0_i32_0 = arith.constant 0 : i32
    %c0_i32_1 = arith.constant 0 : i32
    return %c0_i32, %c0_i32_0, %arg0 : i32, i32, i32
  }
  func.func @transform_4(%arg0: i32) -> (i32, i32, i32) {
    %c0_i32 = arith.constant 0 : i32
    %c0_i32_0 = arith.constant 0 : i32
    %c0_i32_1 = arith.constant 0 : i32
    return %c0_i32, %c0_i32_0, %arg0 : i32, i32, i32
  }
}

module attributes {stable_mosaic.version = 11 : i64} {
  func.func @_matcher_kernel(%arg0: i32, %arg1: memref<32x128xbf16, #tpu.memory_space<vmem>>, %arg2: memref<32x128xbf16, #tpu.memory_space<vmem>>, %arg3: memref<99x128xbf16, #tpu.memory_space<vmem>>, %arg4: memref<3x32x128xf32, #tpu.memory_space<vmem>>, %arg5: memref<3x64x128xf32, #tpu.memory_space<vmem>>) attributes {dimension_semantics = [#tpu.dimension_semantics<parallel>], iteration_bounds = array<i64: 2>, scalar_prefetch = 0 : i64, scratch_operands = 0 : i64, tpu.core_type = #tpu.core_type<tc>, window_params = [{pipeline_mode = #tpu.pipeline_mode<synchronous>, transform_indices = @transform_0, window_bounds = array<i64: 32, 128>}, {transform_indices = @transform_1, window_bounds = array<i64: 32, 128>}, {pipeline_mode = #tpu.pipeline_mode<synchronous>, transform_indices = @transform_2, window_bounds = array<i64: 99, 128>}, {transform_indices = @transform_3, window_bounds = array<i64: 3, 32, 128>}, {transform_indices = @transform_4, window_bounds = array<i64: 3, 64, 128>}]} {
    %c0 = arith.constant 0 : index
    %c0_0 = arith.constant 0 : index
    %0 = vector.load %arg1[%c0, %c0_0] : memref<32x128xbf16, #tpu.memory_space<vmem>>, vector<32x128xbf16>
    %c0_1 = arith.constant 0 : index
    %c0_2 = arith.constant 0 : index
    %1 = vector.load %arg2[%c0_1, %c0_2] : memref<32x128xbf16, #tpu.memory_space<vmem>>, vector<32x128xbf16>
    %cst = arith.constant dense<0.000000e+00> : vector<128x128xf32>
    %2 = tpu.matmul %0, %1, %cst {dimension_numbers = #tpu.dot_dimension_numbers<[0], [0], [1], [1], [0, 1, 1, 1], [], []>} : vector<32x128xbf16>, vector<32x128xbf16>, vector<128x128xf32> -> vector<128x128xf32>
    %cst_3 = arith.constant dense<0xFF800000> : vector<128xf32>
    %3 = vector.multi_reduction <maximumf>, %2, %cst_3 [0] : vector<128x128xf32> to vector<128xf32>
    %4 = vector.shape_cast %3 : vector<128xf32> to vector<1x128xf32>
    %5 = vector.broadcast %4 : vector<1x128xf32> to vector<128x128xf32>
    %6 = arith.subf %2, %5 : vector<128x128xf32>
    %7 = math.exp %6 : vector<128x128xf32>
    %cst_4 = arith.constant dense<0.000000e+00> : vector<128xf32>
    %8 = vector.multi_reduction <add>, %7, %cst_4 [0] : vector<128x128xf32> to vector<128xf32>
    %9 = vector.shape_cast %8 : vector<128xf32> to vector<1x128xf32>
    %10 = tpu.reciprocal %9 : vector<1x128xf32> -> vector<1x128xf32>
    %c0_5 = arith.constant 0 : index
    %c0_6 = arith.constant 0 : index
    %11 = vector.load %arg3[%c0_5, %c0_6] : memref<99x128xbf16, #tpu.memory_space<vmem>>, vector<99x128xbf16>
    %12 = arith.truncf %7 : vector<128x128xf32> to vector<128x128xbf16>
    %cst_7 = arith.constant dense<0.000000e+00> : vector<99x128xf32>
    %13 = tpu.matmul %11, %12, %cst_7 {dimension_numbers = #tpu.dot_dimension_numbers<[1], [0], [0], [1], [0, 0, 1, 1], [], []>} : vector<99x128xbf16>, vector<128x128xbf16>, vector<99x128xf32> -> vector<99x128xf32>
    %14 = vector.broadcast %10 : vector<1x128xf32> to vector<99x128xf32>
    %15 = arith.mulf %13, %14 : vector<99x128xf32>
    %16 = vector.extract_strided_slice %15 {offsets = [0, 0], sizes = [96, 128], strides = [1, 1]} : vector<99x128xf32> to vector<96x128xf32>
    %17 = vector.shape_cast %16 : vector<96x128xf32> to vector<3x32x128xf32>
    %18 = vector.extract_strided_slice %15 {offsets = [96, 0], sizes = [3, 128], strides = [1, 1]} : vector<99x128xf32> to vector<3x128xf32>
    %19 = vector.shape_cast %18 : vector<3x128xf32> to vector<3x1x128xf32>
    %c0_8 = arith.constant 0 : index
    %c0_9 = arith.constant 0 : index
    %c0_10 = arith.constant 0 : index
    %20 = vector.load %arg5[%c0_8, %c0_9, %c0_10] : memref<3x64x128xf32, #tpu.memory_space<vmem>>, vector<3x32x128xf32>
    tpu.vector_store %arg5[%c0_8, %c0_9, %c0_10], %17 {strides = array<i32>} : memref<3x64x128xf32, #tpu.memory_space<vmem>>, vector<3x32x128xf32>,
    %c0_11 = arith.constant 0 : index
    %c0_12 = arith.constant 0 : index
    %c0_13 = arith.constant 0 : index
    %21 = vector.load %arg4[%c0_11, %c0_12, %c0_13] : memref<3x32x128xf32, #tpu.memory_space<vmem>>, vector<3x32x128xf32>
    %22 = vector.broadcast %19 : vector<3x1x128xf32> to vector<3x32x128xf32>
    %23 = arith.mulf %21, %22 : vector<3x32x128xf32>
    %c0_14 = arith.constant 0 : index
    %c32 = arith.constant 32 : index
    %c0_15 = arith.constant 0 : index
    %24 = vector.load %arg5[%c0_14, %c32, %c0_15] : memref<3x64x128xf32, #tpu.memory_space<vmem>>, vector<3x32x128xf32>
    tpu.vector_store %arg5[%c0_14, %c32, %c0_15], %23 {strides = array<i32>} : memref<3x64x128xf32, #tpu.memory_space<vmem>>, vector<3x32x128xf32>,
    return
  }
  func.func @transform_0(%arg0: i32) -> (i32, i32) {
    %c0_i32 = arith.constant 0 : i32
    %c0_i32_0 = arith.constant 0 : i32
    %c0_i32_1 = arith.constant 0 : i32
    return %c0_i32, %c0_i32_0 : i32, i32
  }
  func.func @transform_1(%arg0: i32) -> (i32, i32) {
    %c0_i32 = arith.constant 0 : i32
    %c0_i32_0 = arith.constant 0 : i32
    return %c0_i32, %arg0 : i32, i32
  }
  func.func @transform_2(%arg0: i32) -> (i32, i32) {
    %c0_i32 = arith.constant 0 : i32
    %c0_i32_0 = arith.constant 0 : i32
    %c0_i32_1 = arith.constant 0 : i32
    return %c0_i32, %c0_i32_0 : i32, i32
  }
  func.func @transform_3(%arg0: i32) -> (i32, i32, i32) {
    %c0_i32 = arith.constant 0 : i32
    %c0_i32_0 = arith.constant 0 : i32
    %c0_i32_1 = arith.constant 0 : i32
    return %c0_i32, %c0_i32_0, %arg0 : i32, i32, i32
  }
  func.func @transform_4(%arg0: i32) -> (i32, i32, i32) {
    %c0_i32 = arith.constant 0 : i32
    %c0_i32_0 = arith.constant 0 : i32
    %c0_i32_1 = arith.constant 0 : i32
    return %c0_i32, %c0_i32_0, %arg0 : i32, i32, i32
  }
}

module attributes {stable_mosaic.version = 11 : i64} {
  func.func @_matcher_kernel(%arg0: i32, %arg1: memref<128x32xbf16, #tpu.memory_space<vmem>>, %arg2: memref<32x128xbf16, #tpu.memory_space<vmem>>, %arg3: memref<99x128xbf16, #tpu.memory_space<vmem>>, %arg4: memref<3x32x128xf32, #tpu.memory_space<vmem>>, %arg5: memref<3x64x128xf32, #tpu.memory_space<vmem>>) attributes {dimension_semantics = [#tpu.dimension_semantics<parallel>], iteration_bounds = array<i64: 2>, scalar_prefetch = 0 : i64, scratch_operands = 0 : i64, tpu.core_type = #tpu.core_type<tc>, window_params = [{pipeline_mode = #tpu.pipeline_mode<synchronous>, transform_indices = @transform_0, window_bounds = array<i64: 128, 32>}, {transform_indices = @transform_1, window_bounds = array<i64: 32, 128>}, {pipeline_mode = #tpu.pipeline_mode<synchronous>, transform_indices = @transform_2, window_bounds = array<i64: 99, 128>}, {transform_indices = @transform_3, window_bounds = array<i64: 3, 32, 128>}, {transform_indices = @transform_4, window_bounds = array<i64: 3, 64, 128>}]} {
    %c0 = arith.constant 0 : index
    %c0_0 = arith.constant 0 : index
    %0 = vector.load %arg1[%c0, %c0_0] : memref<128x32xbf16, #tpu.memory_space<vmem>>, vector<128x32xbf16>
    %c0_1 = arith.constant 0 : index
    %c0_2 = arith.constant 0 : index
    %1 = vector.load %arg2[%c0_1, %c0_2] : memref<32x128xbf16, #tpu.memory_space<vmem>>, vector<32x128xbf16>
    %cst = arith.constant dense<0.000000e+00> : vector<128x128xf32>
    %2 = tpu.matmul %0, %1, %cst {dimension_numbers = #tpu.dot_dimension_numbers<[1], [0], [0], [1], [0, 0, 1, 1], [], []>} : vector<128x32xbf16>, vector<32x128xbf16>, vector<128x128xf32> -> vector<128x128xf32>
    %cst_3 = arith.constant dense<0xFF800000> : vector<128xf32>
    %3 = vector.multi_reduction <maximumf>, %2, %cst_3 [0] : vector<128x128xf32> to vector<128xf32>
    %4 = vector.shape_cast %3 : vector<128xf32> to vector<1x128xf32>
    %5 = vector.broadcast %4 : vector<1x128xf32> to vector<128x128xf32>
    %6 = arith.subf %2, %5 : vector<128x128xf32>
    %7 = math.exp %6 : vector<128x128xf32>
    %cst_4 = arith.constant dense<0.000000e+00> : vector<128xf32>
    %8 = vector.multi_reduction <add>, %7, %cst_4 [0] : vector<128x128xf32> to vector<128xf32>
    %9 = vector.shape_cast %8 : vector<128xf32> to vector<1x128xf32>
    %10 = tpu.reciprocal %9 : vector<1x128xf32> -> vector<1x128xf32>
    %c0_5 = arith.constant 0 : index
    %c0_6 = arith.constant 0 : index
    %11 = vector.load %arg3[%c0_5, %c0_6] : memref<99x128xbf16, #tpu.memory_space<vmem>>, vector<99x128xbf16>
    %12 = arith.truncf %7 : vector<128x128xf32> to vector<128x128xbf16>
    %cst_7 = arith.constant dense<0.000000e+00> : vector<99x128xf32>
    %13 = tpu.matmul %11, %12, %cst_7 {dimension_numbers = #tpu.dot_dimension_numbers<[1], [0], [0], [1], [0, 0, 1, 1], [], []>} : vector<99x128xbf16>, vector<128x128xbf16>, vector<99x128xf32> -> vector<99x128xf32>
    %14 = vector.broadcast %10 : vector<1x128xf32> to vector<99x128xf32>
    %15 = arith.mulf %13, %14 : vector<99x128xf32>
    %16 = vector.extract_strided_slice %15 {offsets = [0, 0], sizes = [96, 128], strides = [1, 1]} : vector<99x128xf32> to vector<96x128xf32>
    %17 = vector.shape_cast %16 : vector<96x128xf32> to vector<3x32x128xf32>
    %18 = vector.extract_strided_slice %15 {offsets = [96, 0], sizes = [3, 128], strides = [1, 1]} : vector<99x128xf32> to vector<3x128xf32>
    %19 = vector.shape_cast %18 : vector<3x128xf32> to vector<3x1x128xf32>
    %c0_8 = arith.constant 0 : index
    %c0_9 = arith.constant 0 : index
    %c0_10 = arith.constant 0 : index
    %20 = vector.load %arg5[%c0_8, %c0_9, %c0_10] : memref<3x64x128xf32, #tpu.memory_space<vmem>>, vector<3x32x128xf32>
    tpu.vector_store %arg5[%c0_8, %c0_9, %c0_10], %17 {strides = array<i32>} : memref<3x64x128xf32, #tpu.memory_space<vmem>>, vector<3x32x128xf32>,
    %c0_11 = arith.constant 0 : index
    %c0_12 = arith.constant 0 : index
    %c0_13 = arith.constant 0 : index
    %21 = vector.load %arg4[%c0_11, %c0_12, %c0_13] : memref<3x32x128xf32, #tpu.memory_space<vmem>>, vector<3x32x128xf32>
    %22 = vector.broadcast %19 : vector<3x1x128xf32> to vector<3x32x128xf32>
    %23 = arith.mulf %21, %22 : vector<3x32x128xf32>
    %c0_14 = arith.constant 0 : index
    %c32 = arith.constant 32 : index
    %c0_15 = arith.constant 0 : index
    %24 = vector.load %arg5[%c0_14, %c32, %c0_15] : memref<3x64x128xf32, #tpu.memory_space<vmem>>, vector<3x32x128xf32>
    tpu.vector_store %arg5[%c0_14, %c32, %c0_15], %23 {strides = array<i32>} : memref<3x64x128xf32, #tpu.memory_space<vmem>>, vector<3x32x128xf32>,
    return
  }
  func.func @transform_0(%arg0: i32) -> (i32, i32) {
    %c0_i32 = arith.constant 0 : i32
    %c0_i32_0 = arith.constant 0 : i32
    %c0_i32_1 = arith.constant 0 : i32
    return %c0_i32, %c0_i32_0 : i32, i32
  }
  func.func @transform_1(%arg0: i32) -> (i32, i32) {
    %c0_i32 = arith.constant 0 : i32
    %c0_i32_0 = arith.constant 0 : i32
    return %c0_i32, %arg0 : i32, i32
  }
  func.func @transform_2(%arg0: i32) -> (i32, i32) {
    %c0_i32 = arith.constant 0 : i32
    %c0_i32_0 = arith.constant 0 : i32
    %c0_i32_1 = arith.constant 0 : i32
    return %c0_i32, %c0_i32_0 : i32, i32
  }
  func.func @transform_3(%arg0: i32) -> (i32, i32, i32) {
    %c0_i32 = arith.constant 0 : i32
    %c0_i32_0 = arith.constant 0 : i32
    %c0_i32_1 = arith.constant 0 : i32
    return %c0_i32, %c0_i32_0, %arg0 : i32, i32, i32
  }
  func.func @transform_4(%arg0: i32) -> (i32, i32, i32) {
    %c0_i32 = arith.constant 0 : i32
    %c0_i32_0 = arith.constant 0 : i32
    %c0_i32_1 = arith.constant 0 : i32
    return %c0_i32, %c0_i32_0, %arg0 : i32, i32, i32
  }
}

module attributes {stable_mosaic.version = 11 : i64} {
  func.func @_matcher_kernel(%arg0: i32, %arg1: memref<128x32xbf16, #tpu.memory_space<vmem>>, %arg2: memref<32x128xbf16, #tpu.memory_space<vmem>>, %arg3: memref<99x128xbf16, #tpu.memory_space<vmem>>, %arg4: memref<3x32x128xf32, #tpu.memory_space<vmem>>, %arg5: memref<3x64x128xf32, #tpu.memory_space<vmem>>) attributes {dimension_semantics = [#tpu.dimension_semantics<parallel>], iteration_bounds = array<i64: 2>, scalar_prefetch = 0 : i64, scratch_operands = 0 : i64, tpu.core_type = #tpu.core_type<tc>, window_params = [{pipeline_mode = #tpu.pipeline_mode<synchronous>, transform_indices = @transform_0, window_bounds = array<i64: 128, 32>}, {transform_indices = @transform_1, window_bounds = array<i64: 32, 128>}, {pipeline_mode = #tpu.pipeline_mode<synchronous>, transform_indices = @transform_2, window_bounds = array<i64: 99, 128>}, {transform_indices = @transform_3, window_bounds = array<i64: 3, 32, 128>}, {transform_indices = @transform_4, window_bounds = array<i64: 3, 64, 128>}]} {
    %c0 = arith.constant 0 : index
    %c0_0 = arith.constant 0 : index
    %0 = vector.load %arg1[%c0, %c0_0] : memref<128x32xbf16, #tpu.memory_space<vmem>>, vector<128x32xbf16>
    %c0_1 = arith.constant 0 : index
    %c0_2 = arith.constant 0 : index
    %1 = vector.load %arg2[%c0_1, %c0_2] : memref<32x128xbf16, #tpu.memory_space<vmem>>, vector<32x128xbf16>
    %cst = arith.constant dense<0.000000e+00> : vector<128x128xf32>
    %2 = tpu.matmul %0, %1, %cst {dimension_numbers = #tpu.dot_dimension_numbers<[1], [0], [0], [1], [0, 0, 1, 1], [], []>} : vector<128x32xbf16>, vector<32x128xbf16>, vector<128x128xf32> -> vector<128x128xf32>
    %cst_3 = arith.constant dense<0xFF800000> : vector<128xf32>
    %3 = vector.multi_reduction <maximumf>, %2, %cst_3 [0] : vector<128x128xf32> to vector<128xf32>
    %4 = vector.shape_cast %3 : vector<128xf32> to vector<1x128xf32>
    %5 = vector.broadcast %4 : vector<1x128xf32> to vector<128x128xf32>
    %6 = arith.subf %2, %5 : vector<128x128xf32>
    %7 = math.exp %6 : vector<128x128xf32>
    %cst_4 = arith.constant dense<0.000000e+00> : vector<128xf32>
    %8 = vector.multi_reduction <add>, %7, %cst_4 [0] : vector<128x128xf32> to vector<128xf32>
    %9 = vector.shape_cast %8 : vector<128xf32> to vector<1x128xf32>
    %10 = tpu.reciprocal %9 : vector<1x128xf32> -> vector<1x128xf32>
    %c0_5 = arith.constant 0 : index
    %c0_6 = arith.constant 0 : index
    %11 = vector.load %arg3[%c0_5, %c0_6] : memref<99x128xbf16, #tpu.memory_space<vmem>>, vector<99x128xbf16>
    %12 = arith.truncf %7 : vector<128x128xf32> to vector<128x128xbf16>
    %cst_7 = arith.constant dense<0.000000e+00> : vector<99x128xf32>
    %13 = tpu.matmul %11, %12, %cst_7 {dimension_numbers = #tpu.dot_dimension_numbers<[1], [0], [0], [1], [0, 0, 1, 1], [], []>} : vector<99x128xbf16>, vector<128x128xbf16>, vector<99x128xf32> -> vector<99x128xf32>
    %14 = vector.broadcast %10 : vector<1x128xf32> to vector<99x128xf32>
    %15 = arith.mulf %13, %14 : vector<99x128xf32>
    %16 = vector.extract_strided_slice %15 {offsets = [0, 0], sizes = [96, 128], strides = [1, 1]} : vector<99x128xf32> to vector<96x128xf32>
    %17 = vector.shape_cast %16 : vector<96x128xf32> to vector<3x32x128xf32>
    %18 = vector.extract_strided_slice %15 {offsets = [96, 0], sizes = [3, 128], strides = [1, 1]} : vector<99x128xf32> to vector<3x128xf32>
    %19 = vector.shape_cast %18 : vector<3x128xf32> to vector<3x1x128xf32>
    %c0_8 = arith.constant 0 : index
    %c0_9 = arith.constant 0 : index
    %c0_10 = arith.constant 0 : index
    %20 = vector.load %arg5[%c0_8, %c0_9, %c0_10] : memref<3x64x128xf32, #tpu.memory_space<vmem>>, vector<3x32x128xf32>
    tpu.vector_store %arg5[%c0_8, %c0_9, %c0_10], %17 {strides = array<i32>} : memref<3x64x128xf32, #tpu.memory_space<vmem>>, vector<3x32x128xf32>,
    %c0_11 = arith.constant 0 : index
    %c0_12 = arith.constant 0 : index
    %c0_13 = arith.constant 0 : index
    %21 = vector.load %arg4[%c0_11, %c0_12, %c0_13] : memref<3x32x128xf32, #tpu.memory_space<vmem>>, vector<3x32x128xf32>
    %22 = vector.broadcast %19 : vector<3x1x128xf32> to vector<3x32x128xf32>
    %23 = arith.mulf %21, %22 : vector<3x32x128xf32>
    %c0_14 = arith.constant 0 : index
    %c32 = arith.constant 32 : index
    %c0_15 = arith.constant 0 : index
    %24 = vector.load %arg5[%c0_14, %c32, %c0_15] : memref<3x64x128xf32, #tpu.memory_space<vmem>>, vector<3x32x128xf32>
    tpu.vector_store %arg5[%c0_14, %c32, %c0_15], %23 {strides = array<i32>} : memref<3x64x128xf32, #tpu.memory_space<vmem>>, vector<3x32x128xf32>,
    return
  }
  func.func @transform_0(%arg0: i32) -> (i32, i32) {
    %c0_i32 = arith.constant 0 : i32
    %c0_i32_0 = arith.constant 0 : i32
    %c0_i32_1 = arith.constant 0 : i32
    return %c0_i32, %c0_i32_0 : i32, i32
  }
  func.func @transform_1(%arg0: i32) -> (i32, i32) {
    %c0_i32 = arith.constant 0 : i32
    %c0_i32_0 = arith.constant 0 : i32
    return %c0_i32, %arg0 : i32, i32
  }
  func.func @transform_2(%arg0: i32) -> (i32, i32) {
    %c0_i32 = arith.constant 0 : i32
    %c0_i32_0 = arith.constant 0 : i32
    %c0_i32_1 = arith.constant 0 : i32
    return %c0_i32, %c0_i32_0 : i32, i32
  }
  func.func @transform_3(%arg0: i32) -> (i32, i32, i32) {
    %c0_i32 = arith.constant 0 : i32
    %c0_i32_0 = arith.constant 0 : i32
    %c0_i32_1 = arith.constant 0 : i32
    return %c0_i32, %c0_i32_0, %arg0 : i32, i32, i32
  }
  func.func @transform_4(%arg0: i32) -> (i32, i32, i32) {
    %c0_i32 = arith.constant 0 : i32
    %c0_i32_0 = arith.constant 0 : i32
    %c0_i32_1 = arith.constant 0 : i32
    return %c0_i32, %c0_i32_0, %arg0 : i32, i32, i32
  }
}

</mosaic_0001>

<llo_original>
// kernel: tpu_custom_call.1
$region0: #{tpu_custom_call.1}
  #allocation0 [shape = 'u32[]', space=smem, size = 0x4, offset = 0x4, fixed_abs, tag = 'smem constant byte address 0x4 - core index']
  #allocation1 [shape = 'u32[144,128]{1,0:T(1,128)}', space=vmem, size = 0x12000, scoped, tag = 'internal scratch']
  %s0 = inlined_call_operand.hbm [shape: bf16[32,128], index: 0, kind: input, shape index: {}]
  %s1 = inlined_call_operand.hbm [shape: bf16[32,256], index: 1, kind: input, shape index: {}]
  %s2 = inlined_call_operand.hbm [shape: bf16[99,128], index: 2, kind: input, shape index: {}]
  %s3 = inlined_call_operand.hbm [shape: f32[3,32,256], index: 3, kind: input, shape index: {}]
  %s4 = inlined_call_operand.hbm [shape: f32[3,64,256], index: 4, kind: output, shape index: {}]
  %s5 = sld [smem:[#allocation0]]
  $region65: #{tpu_custom_call.1} parent=0
    _
  %s7 = ssub.s32 1, %s5
  %s8 = scalar_select 0, %s7, %s5
  $region1: #{tpu_custom_call.1} parent=0
    #allocation2 [shape = 'u8[8192]{0}', space=vmem, size = 0x2000, scoped, tag = 'input window, operand 0, single buffered']
    #allocation3 [shape = 's32[2]{0}', space=sflag, size = 0x8, scoped, tag = 'scoped memory for tpu_custom_call.1']
    #allocation4 [shape = 's32[2]{0}', space=sflag, size = 0x8, scoped, tag = 'scoped memory for tpu_custom_call.1']
    #allocation5 [shape = 'u8[16384]{0}', space=vmem, size = 0x4000, scoped, tag = 'input window, operand 1']
    #allocation6 [shape = 's32[2]{0}', space=sflag, size = 0x8, scoped, tag = 'scoped memory for tpu_custom_call.1']
    #allocation7 [shape = 'u8[26624]{0}', space=vmem, size = 0x6800, scoped, tag = 'input window, operand 2, single buffered']
    #allocation8 [shape = 'u8[98304]{0}', space=vmem, size = 0x18000, scoped, tag = 'input window, operand 3']
    #allocation9 [shape = 's32[2]{0}', space=sflag, size = 0x8, scoped, tag = 'scoped memory for tpu_custom_call.1']
    #allocation10 [shape = 'u8[196608]{0}', space=vmem, size = 0x30000, scoped, tag = 'output window, operand 0']
    %9 = vsyncpa [#allocation3], 0
    %10 = vsyncpa [#allocation6], 0
    %s11 = scalar_lea.sflag [#allocation6], 1
    %12 = vsyncpa %s11, 0
    %13 = vsyncpa [#allocation9], 0
    %s14 = scalar_lea.sflag [#allocation9], 1
    %15 = vsyncpa %s14, 0
    %16 = vsyncpa [#allocation4], 0
    %s17 = scalar_lea.sflag [#allocation4], 1
    %18 = vsyncpa %s17, 0
    loop: start=0, step=1, limit=4
    $region2: #{tpu_custom_call.1} parent=1 // loop_pre_header
      _
    $region3: #{tpu_custom_call.1} parent=1 // loop_header
      %s20 = sphi 0, %s24
      %p21 = scmp.ge.s32.totalorder %s20, 4
      %s28 = sphi 0, %s28
      %s30 = sphi 0, %s28
      %s31 = sphi 0, %s30
      %s45 = sphi 0, %s31
      %s51 = sphi 0, %s53
      %s54 = sphi 0, %s51
      %s55 = sphi 0, %s54
      %s71 = sphi 0, %s55
      %s75 = sphi 0, %s75
      %s77 = sphi 0, %s75
      %s78 = sphi 0, %s77
      %s92 = sphi 0, %s78
      %s98 = sphi 0, %s100
      %s101 = sphi 0, %s98
      %s102 = sphi 0, %s101
      %s118 = sphi 0, %s102
      %s124 = sphi 0, %s126
      %s127 = sphi 0, %s124
      %s128 = sphi 0, %s127
      %s144 = sphi 0, %s128
    $region4: #{tpu_custom_call.1} parent=1 // loop_header_branch
      %23 = sbr.rel (%p21) target = $region8
    $region5: #{tpu_custom_call.1} parent=1 // loop_body
      %s25 = ssub.s32 %s20, 1
      %s26 = ssub.s32 %s20, 2
      %s27 = sadd.s32 %s20, 1
      %s29 = sadd.s32 %s28, 1
      %p32 = scmp.eq.s32.totalorder %s20, 1
      %p33 = scmp.ne.s32.totalorder %s28, %s30
      %p34 = scmp.eq.s32.totalorder %s20, 0
      %p35 = por %p33, %p34
      %p36 = scmp.ne.s32.totalorder %s28, %s30
      %p37 = scmp.eq.s32.totalorder %s25, 1
      %p38 = por %p36, %p37
      %p39 = scmp.ne.s32.totalorder %s30, %s31
      %p40 = scmp.eq.s32.totalorder %s25, 0
      %p41 = por %p39, %p40
      %p42 = scmp.ne.s32.totalorder %s30, %s31
      %p43 = scmp.eq.s32.totalorder %s26, 1
      %p44 = por %p42, %p43
      %p46 = scmp.ne.s32.totalorder %s31, %s45
      %p47 = scmp.eq.s32.totalorder %s26, 0
      %p48 = por %p46, %p47
      %s49 = ssub.s32 %s20, %s27
      %p50 = scmp.eq.s32.totalorder %s49, 0
      %s52 = sadd.s32 %s51, 1
      %s53 = scalar_select %p50, %s51, %s52
      %p56 = pneg %p50
      %p57 = scmp.eq.s32.totalorder %s20, 1
      %p58 = por %p56, %p57
      %p59 = scmp.ne.s32.totalorder %s51, %s54
      %p60 = scmp.eq.s32.totalorder %s20, 0
      %p61 = por %p59, %p60
      %p62 = scmp.ne.s32.totalorder %s51, %s54
      %p63 = scmp.eq.s32.totalorder %s25, 1
      %p64 = por %p62, %p63
      %p65 = scmp.ne.s32.totalorder %s54, %s55
      %p66 = scmp.eq.s32.totalorder %s25, 0
      %p67 = por %p65, %p66
      %p68 = scmp.ne.s32.totalorder %s54, %s55
      %p69 = scmp.eq.s32.totalorder %s26, 1
      %p70 = por %p68, %p69
      %p72 = scmp.ne.s32.totalorder %s55, %s71
      %p73 = scmp.eq.s32.totalorder %s26, 0
      %p74 = por %p72, %p73
      %s76 = sadd.s32 %s75, 1
      %p79 = scmp.eq.s32.totalorder %s20, 1
      %p80 = scmp.ne.s32.totalorder %s75, %s77
      %p81 = scmp.eq.s32.totalorder %s20, 0
      %p82 = por %p80, %p81
      %p83 = scmp.ne.s32.totalorder %s75, %s77
      %p84 = scmp.eq.s32.totalorder %s25, 1
      %p85 = por %p83, %p84
      %p86 = scmp.ne.s32.totalorder %s77, %s78
      %p87 = scmp.eq.s32.totalorder %s25, 0
      %p88 = por %p86, %p87
      %p89 = scmp.ne.s32.totalorder %s77, %s78
      %p90 = scmp.eq.s32.totalorder %s26, 1
      %p91 = por %p89, %p90
      %p93 = scmp.ne.s32.totalorder %s78, %s92
      %p94 = scmp.eq.s32.totalorder %s26, 0
      %p95 = por %p93, %p94
      %s96 = ssub.s32 %s20, %s27
      %p97 = scmp.eq.s32.totalorder %s96, 0
      %s99 = sadd.s32 %s98, 1
      %s100 = scalar_select %p97, %s98, %s99
      %p103 = pneg %p97
      %p104 = scmp.eq.s32.totalorder %s20, 1
      %p105 = por %p103, %p104
      %p106 = scmp.ne.s32.totalorder %s98, %s101
      %p107 = scmp.eq.s32.totalorder %s20, 0
      %p108 = por %p106, %p107
      %p109 = scmp.ne.s32.totalorder %s98, %s101
      %p110 = scmp.eq.s32.totalorder %s25, 1
      %p111 = por %p109, %p110
      %p112 = scmp.ne.s32.totalorder %s101, %s102
      %p113 = scmp.eq.s32.totalorder %s25, 0
      %p114 = por %p112, %p113
      %p115 = scmp.ne.s32.totalorder %s101, %s102
      %p116 = scmp.eq.s32.totalorder %s26, 1
      %p117 = por %p115, %p116
      %p119 = scmp.ne.s32.totalorder %s102, %s118
      %p120 = scmp.eq.s32.totalorder %s26, 0
      %p121 = por %p119, %p120
      %s122 = ssub.s32 %s20, %s27
      %p123 = scmp.eq.s32.totalorder %s122, 0
      %s125 = sadd.s32 %s124, 1
      %s126 = scalar_select %p123, %s124, %s125
      %p129 = pneg %p123
      %p130 = scmp.eq.s32.totalorder %s20, 1
      %p131 = por %p129, %p130
      %p132 = scmp.ne.s32.totalorder %s124, %s127
      %p133 = scmp.eq.s32.totalorder %s20, 0
      %p134 = por %p132, %p133
      %p135 = scmp.ne.s32.totalorder %s124, %s127
      %p136 = scmp.eq.s32.totalorder %s25, 1
      %p137 = por %p135, %p136
      %p138 = scmp.ne.s32.totalorder %s127, %s128
      %p139 = scmp.eq.s32.totalorder %s25, 0
      %p140 = por %p138, %p139
      %p141 = scmp.ne.s32.totalorder %s127, %s128
      %p142 = scmp.eq.s32.totalorder %s26, 1
      %p143 = por %p141, %p142
      %p145 = scmp.ne.s32.totalorder %s128, %s144
      %p146 = scmp.eq.s32.totalorder %s26, 0
      %p147 = por %p145, %p146
      %p148 = scmp.le.s32.totalorder 1, %s20
      %p149 = scmp.lt.s32.totalorder %s20, 3
      %p150 = pnand %p148, %p149
      %p151 = pneg %p150
      // Predicated region
      $region9: #{tpu_custom_call.1} parent=5 // pred_check
        _
      $region10: #{tpu_custom_call.1} parent=5 // pred_check_branch
        %153 = sbr.rel (%p150) target = $region12
      $region11: #{tpu_custom_call.1} parent=5 // pred_region
        %s154 = ssub.s32 %s20, 1
        // Predicated region
        $region13: #{tpu_custom_call.1} parent=11 // pred_check
          %p155 = pneg %p41
        $region14: #{tpu_custom_call.1} parent=11 // pred_check_branch
          %157 = sbr.rel (%p155) target = $region16
        $region15: #{tpu_custom_call.1} parent=11 // pred_region
          %s159 = ssub.s32 256, 256
          %160 = vsyncadd [#allocation3], %s159
          %s161 = sshll.u32 [#allocation2], 4
          %s162 = int_to_ptr.vmem [resolvable:$true] %s161
          %167 = dma.hbm_to_vmem [thread:$0]  %s0, 256, %s162, [#allocation3], 64, 64, 4
        $region16: #{tpu_custom_call.1} parent=11 // pred_fallthru
          _
        // Predicated region
        $region17: #{tpu_custom_call.1} parent=11 // pred_check
          %p168 = pneg %p88
        $region18: #{tpu_custom_call.1} parent=11 // pred_check_branch
          %170 = sbr.rel (%p168) target = $region20
        $region19: #{tpu_custom_call.1} parent=11 // pred_region
          %s172 = ssub.s32 832, 832
          %173 = vsyncadd [#allocation6], %s172
          %s174 = sshll.u32 [#allocation7], 4
          %s175 = int_to_ptr.vmem [resolvable:$true] %s174
          %180 = dma.hbm_to_vmem [thread:$0]  %s2, 832, %s175, [#allocation6], 64, 64, 4
        $region20: #{tpu_custom_call.1} parent=11 // pred_fallthru
          _
      $region12: #{tpu_custom_call.1} parent=5 // pred_fallthru
        _
      %p181 = scmp.lt.s32.totalorder %s20, 2
      // Predicated region
      $region21: #{tpu_custom_call.1} parent=5 // pred_check
        %p182 = pneg %p181
      $region22: #{tpu_custom_call.1} parent=5 // pred_check_branch
        %184 = sbr.rel (%p182) target = $region24
      $region23: #{tpu_custom_call.1} parent=5 // pred_region
        // Predicated region
        $region25: #{tpu_custom_call.1} parent=23 // pred_check
          %p185 = pneg %p61
        $region26: #{tpu_custom_call.1} parent=23 // pred_check_branch
          %187 = sbr.rel (%p185) target = $region28
        $region27: #{tpu_custom_call.1} parent=23 // pred_region
          %s188 = sand.u32 %s20, 1
          %s189 = scalar_lea.sflag [#allocation6], %s188
          %s190 = sand.u32 %s51, 1
          %s191 = smul.addr %s190, 16
          %s192 = scalar_lea.vmem [#allocation5], %s191
          %s194 = ssub.s32 256, 256
          %195 = vsyncadd %s189, %s194
          %s196 = smul.addr %s20, 64
          %s197 = scalar_lea.hbm %s1, %s196
          %s198 = sshll.u32 %s192, 4
          %s199 = int_to_ptr.vmem [resolvable:$true] %s198
          %204 = dma.hbm_to_vmem [thread:$0]  %s197, 256, %s199, %s189, 128, 64, 4
        $region28: #{tpu_custom_call.1} parent=23 // pred_fallthru
          _
        // Predicated region
        $region29: #{tpu_custom_call.1} parent=23 // pred_check
          %p205 = pneg %p108
        $region30: #{tpu_custom_call.1} parent=23 // pred_check_branch
          %207 = sbr.rel (%p205) target = $region32
        $region31: #{tpu_custom_call.1} parent=23 // pred_region
          %s208 = sand.u32 %s98, 1
          %s209 = scalar_lea.sflag [#allocation9], %s208
          %s210 = sand.u32 %s98, 1
          %s211 = smul.addr %s210, 96
          %s212 = scalar_lea.vmem [#allocation8], %s211
          %s214 = ssub.s32 1536, 1536
          %215 = vsyncadd %s209, %s214
          %s216 = smul.addr %s20, 128
          %s217 = scalar_lea.hbm %s3, %s216
          %s218 = sshll.u32 %s212, 4
          %s219 = int_to_ptr.vmem [resolvable:$true] %s218
          %224 = dma.hbm_to_vmem [thread:$0]  %s217, 1536, %s219, %s209, 256, 128, 8
        $region32: #{tpu_custom_call.1} parent=23 // pred_fallthru
          _
      $region24: #{tpu_custom_call.1} parent=5 // pred_fallthru
        _
      %p225 = scmp.le.s32.totalorder 1, %s20
      %p226 = scmp.lt.s32.totalorder %s20, 3
      %p227 = pnand %p225, %p226
      %p228 = pneg %p227
      // Predicated region
      $region33: #{tpu_custom_call.1} parent=5 // pred_check
        _
      $region34: #{tpu_custom_call.1} parent=5 // pred_check_branch
        %230 = sbr.rel (%p227) target = $region36
      $region35: #{tpu_custom_call.1} parent=5 // pred_region
        %s231 = ssub.s32 %s20, 1
        // Predicated region
        $region37: #{tpu_custom_call.1} parent=35 // pred_check
          %p232 = pneg %p41
        $region38: #{tpu_custom_call.1} parent=35 // pred_check_branch
          %234 = sbr.rel (%p232) target = $region40
        $region39: #{tpu_custom_call.1} parent=35 // pred_region
          %235 = dma.done [#allocation3], 256
        $region40: #{tpu_custom_call.1} parent=35 // pred_fallthru
          _
        %s236 = sand.u32 %s25, 1
        %s237 = scalar_lea.sflag [#allocation6], %s236
        %s238 = sand.u32 %s54, 1
        %s239 = smul.addr %s238, 16
        %s240 = scalar_lea.vmem [#allocation5], %s239
        // Predicated region
        $region41: #{tpu_custom_call.1} parent=35 // pred_check
          %p241 = pneg %p67
        $region42: #{tpu_custom_call.1} parent=35 // pred_check_branch
          %243 = sbr.rel (%p241) target = $region44
        $region43: #{tpu_custom_call.1} parent=35 // pred_region
          %244 = dma.done %s237, 256
        $region44: #{tpu_custom_call.1} parent=35 // pred_fallthru
          _
        // Predicated region
        $region45: #{tpu_custom_call.1} parent=35 // pred_check
          %p245 = pneg %p88
        $region46: #{tpu_custom_call.1} parent=35 // pred_check_branch
          %247 = sbr.rel (%p245) target = $region48
        $region47: #{tpu_custom_call.1} parent=35 // pred_region
          %248 = dma.done [#allocation6], 832
        $region48: #{tpu_custom_call.1} parent=35 // pred_fallthru
          _
        %s249 = sand.u32 %s101, 1
        %s250 = scalar_lea.sflag [#allocation9], %s249
        %s251 = sand.u32 %s101, 1
        %s252 = smul.addr %s251, 96
        %s253 = scalar_lea.vmem [#allocation8], %s252
        // Predicated region
        $region49: #{tpu_custom_call.1} parent=35 // pred_check
          %p254 = pneg %p114
        $region50: #{tpu_custom_call.1} parent=35 // pred_check_branch
          %256 = sbr.rel (%p254) target = $region52
        $region51: #{tpu_custom_call.1} parent=35 // pred_region
          %257 = dma.done %s250, 1536
        $region52: #{tpu_custom_call.1} parent=35 // pred_fallthru
          _
        %p258 = pneg %p41
        %p259 = pneg %p38
        %s260 = sand.u32 %s25, 1
        %s261 = scalar_lea.sflag [#allocation6], %s260
        %s262 = sand.u32 %s54, 1
        %s263 = smul.addr %s262, 16
        %s264 = scalar_lea.vmem [#allocation5], %s263
        %p265 = pneg %p67
        %p266 = pneg %p64
        %p267 = pneg %p88
        %p268 = pneg %p85
        %s269 = sand.u32 %s101, 1
        %s270 = scalar_lea.sflag [#allocation9], %s269
        %s271 = sand.u32 %s101, 1
        %s272 = smul.addr %s271, 96
        %s273 = scalar_lea.vmem [#allocation8], %s272
        %p274 = pneg %p114
        %p275 = pneg %p111
        %p276 = pneg %p140
        %p277 = pneg %p137
        %s278 = sand.u32 %s127, 1
        %s279 = scalar_lea.sflag [#allocation4], %s278
        %s280 = sand.u32 %s127, 1
        %s281 = smul.addr %s280, 192
        %s282 = scalar_lea.vmem [#allocation10], %s281
        %v284 = vld [vmem:[#allocation2] sm:$0xf]
        %v285 = vld [vmem:[#allocation2 + $0x4] sm:$0xf]
        %v286 = vld [vmem:[#allocation2 + $0x8] sm:$0xf]
        %v287 = vld [vmem:[#allocation2 + $0xc] sm:$0xf]
        %v288 = vld [vmem:[%s240] sm:$0xf]
        %v289 = vld [vmem:[%s240 + $0x4] sm:$0xf]
        %v290 = vld [vmem:[%s240 + $0x8] sm:$0xf]
        %v291 = vld [vmem:[%s240 + $0xc] sm:$0xf]
        %v296 = vunpack.c.l.b16 %v284
        %v297 = vunpack.c.l.b16 %v285
        %v298 = vunpack.c.l.b16 %v286
        %v299 = vunpack.c.l.b16 %v287
        %v300 = vpack.c.b16 %v297, %v296
        %v301 = vpack.c.b16 %v299, %v298
        %304 = vxpose.xlu0.c.b16.start [1/8] %v300, 128
        %305 = vxpose.xlu0.c.b16.cont [2/8] %v301, 128
        %306 = vxpose.xlu0.c.b16.cont [3/8] 0, 128
        %307 = vxpose.xlu0.c.b16.cont [4/8] 0, 128
        %308 = vxpose.xlu0.c.b16.cont [5/8] 0, 128
        %309 = vxpose.xlu0.c.b16.cont [6/8] 0, 128
        %310 = vxpose.xlu0.c.b16.cont [7/8] 0, 128
        %311 = vxpose.xlu0.c.b16.end [8/8] 0, 128
        %v312 = vpop.trf.xlu0
        %v313 = vpop.trf.xlu0
        %v314 = vpop.trf.xlu0
        %v315 = vpop.trf.xlu0
        %v316 = vpop.trf.xlu0
        %v317 = vpop.trf.xlu0
        %v318 = vpop.trf.xlu0
        %v319 = vpop.trf.xlu0
        %v324 = vunpack.c.l.b16 %v288
        %v325 = vunpack.c.l.b16 %v289
        %v326 = vunpack.c.l.b16 %v290
        %v327 = vunpack.c.l.b16 %v291
        %v328 = vpack.c.b16 %v325, %v324
        %v329 = vpack.c.b16 %v327, %v326
        %vm332 = vcmask 261120
        %v334 = vsel %vm332, %v312, 0
        %v337 = vsel %vm332, %v313, 0
        %v340 = vsel %vm332, %v314, 0
        %v343 = vsel %vm332, %v315, 0
        %v346 = vsel %vm332, %v316, 0
        %v349 = vsel %vm332, %v317, 0
        %v352 = vsel %vm332, %v318, 0
        %v355 = vsel %vm332, %v319, 0
        %357 = vmatprep.subr.bf16.mxu0 0
        %358 = vmatpush1.bf16.msra.mxu0 %v328
        %359 = vmatprep.subr.bf16.mxu0 0
        %360 = vmatpush1.bf16.msra.mxu0 %v329
        %361 = vmatprep.subr.bf16.mxu0 0
        %362 = vmatpush1.bf16.msra.mxu0 0
        %363 = vmatprep.subr.bf16.mxu0 0
        %364 = vmatpush1.bf16.msra.mxu0 0
        %365 = vmatprep.subr.bf16.mxu0 0
        %366 = vmatpush1.bf16.msra.mxu0 0
        %367 = vmatprep.subr.bf16.mxu0 0
        %368 = vmatpush1.bf16.msra.mxu0 0
        %369 = vmatprep.subr.bf16.mxu0 0
        %370 = vmatpush1.bf16.msra.mxu0 0
        %371 = vmatprep.subr.bf16.mxu0 0
        %372 = vmatpush1.bf16.msra.mxu0 0
        %373 = vmatprep.subr.bf16.mxu0 0
        %374 = vmatpush1.bf16.msra.mxu0 0
        %375 = vmatprep.subr.bf16.mxu0 0
        %376 = vmatpush1.bf16.msra.mxu0 0
        %377 = vmatprep.subr.bf16.mxu0 0
        %378 = vmatpush1.bf16.msra.mxu0 0
        %379 = vmatprep.subr.bf16.mxu0 0
        %380 = vmatpush1.bf16.msra.mxu0 0
        %381 = vmatprep.subr.bf16.mxu0 0
        %382 = vmatpush1.bf16.msra.mxu0 0
        %383 = vmatprep.subr.bf16.mxu0 0
        %384 = vmatpush1.bf16.msra.mxu0 0
        %385 = vmatprep.subr.bf16.mxu0 0
        %386 = vmatpush1.bf16.msra.mxu0 0
        %387 = vmatprep.subr.bf16.mxu0 0
        %388 = vmatpush1.bf16.msra.mxu0 0
        %389 = vmatprep.mubr.bf16.mxu0 0
        %390 = vmatmul.mubr.bf16.gmra.mrb[0].mxu0 %v334
        %v391 = vpop.f32.mrb[0].mxu0
        %v392 = vadd.f32 0.0, %v391
        %v393 = vpop.f32.mrb[0].mxu0
        %v394 = vpop.f32.mrb[0].mxu0
        %v395 = vadd.f32 0.0, %v394
        %v396 = vpop.f32.mrb[0].mxu0
        %397 = vmatprep.mubr.bf16.mxu0 0
        %398 = vmatmul.mubr.bf16.gmra.mrb[0].mxu0 %v337
        %v399 = vpop.f32.mrb[0].mxu0
        %v400 = vadd.f32 0.0, %v399
        %v401 = vpop.f32.mrb[0].mxu0
        %v402 = vpop.f32.mrb[0].mxu0
        %v403 = vadd.f32 0.0, %v402
        %v404 = vpop.f32.mrb[0].mxu0
        %405 = vmatprep.mubr.bf16.mxu0 0
        %406 = vmatmul.mubr.bf16.gmra.mrb[0].mxu0 %v340
        %v407 = vpop.f32.mrb[0].mxu0
        %v408 = vadd.f32 0.0, %v407
        %v409 = vpop.f32.mrb[0].mxu0
        %v410 = vpop.f32.mrb[0].mxu0
        %v411 = vadd.f32 0.0, %v410
        %v412 = vpop.f32.mrb[0].mxu0
        %413 = vmatprep.mubr.bf16.mxu0 0
        %414 = vmatmul.mubr.bf16.gmra.mrb[0].mxu0 %v343
        %v415 = vpop.f32.mrb[0].mxu0
        %v416 = vadd.f32 0.0, %v415
        %v417 = vpop.f32.mrb[0].mxu0
        %v418 = vpop.f32.mrb[0].mxu0
        %v419 = vadd.f32 0.0, %v418
        %v420 = vpop.f32.mrb[0].mxu0
        %421 = vmatprep.mubr.bf16.mxu0 0
        %422 = vmatmul.mubr.bf16.gmra.mrb[0].mxu0 %v346
        %v423 = vpop.f32.mrb[0].mxu0
        %v424 = vadd.f32 0.0, %v423
        %v425 = vpop.f32.mrb[0].mxu0
        %v426 = vpop.f32.mrb[0].mxu0
        %v427 = vadd.f32 0.0, %v426
        %v428 = vpop.f32.mrb[0].mxu0
        %429 = vmatprep.mubr.bf16.mxu0 0
        %430 = vmatmul.mubr.bf16.gmra.mrb[0].mxu0 %v349
        %v431 = vpop.f32.mrb[0].mxu0
        %v432 = vadd.f32 0.0, %v431
        %v433 = vpop.f32.mrb[0].mxu0
        %v434 = vpop.f32.mrb[0].mxu0
        %v435 = vadd.f32 0.0, %v434
        %v436 = vpop.f32.mrb[0].mxu0
        %437 = vmatprep.mubr.bf16.mxu0 0
        %438 = vmatmul.mubr.bf16.gmra.mrb[0].mxu0 %v352
        %v439 = vpop.f32.mrb[0].mxu0
        %v440 = vadd.f32 0.0, %v439
        %v441 = vpop.f32.mrb[0].mxu0
        %v442 = vpop.f32.mrb[0].mxu0
        %v443 = vadd.f32 0.0, %v442
        %v444 = vpop.f32.mrb[0].mxu0
        %445 = vmatprep.mubr.bf16.mxu0 0
        %446 = vmatmul.mubr.bf16.gmra.mrb[0].mxu0 %v355
        %v447 = vpop.f32.mrb[0].mxu0
        %v448 = vadd.f32 0.0, %v447
        %v449 = vpop.f32.mrb[0].mxu0
        %v450 = vpop.f32.mrb[0].mxu0
        %v451 = vadd.f32 0.0, %v450
        %v452 = vpop.f32.mrb[0].mxu0
        %453 = vdwg.mxu0
        %v454 = vmax.f32 %v392, %v408
        %v455 = vmax.f32 %v395, %v411
        %v456 = vmax.f32 %v400, %v416
        %v457 = vmax.f32 %v403, %v419
        %v458 = vmax.f32 %v454, %v424
        %v459 = vmax.f32 %v455, %v427
        %v460 = vmax.f32 %v456, %v432
        %v461 = vmax.f32 %v457, %v435
        %v462 = vmax.f32 %v458, %v440
        %v463 = vmax.f32 %v459, %v443
        %v464 = vmax.f32 %v460, %v448
        %v465 = vmax.f32 %v461, %v451
        %v466 = vmax.f32 %v462, %v463
        %v467 = vmax.f32 %v464, %v465
        %v468 = vmax.f32 %v466, %v467
        %v469 = vrot.slane %v468, 4
        %v470 = vmax.f32 %v468, %v469
        %v471 = vrot.slane %v470, 2
        %v472 = vmax.f32 %v470, %v471
        %v473 = vrot.slane %v472, 1
        %v474 = vmax.f32 %v472, %v473
        %v475 = vsub.f32 %v392, %v474
        %v476 = vsub.f32 %v395, %v474
        %v477 = vsub.f32 %v400, %v474
        %v478 = vsub.f32 %v403, %v474
        %v479 = vsub.f32 %v408, %v474
        %v480 = vsub.f32 %v411, %v474
        %v481 = vsub.f32 %v416, %v474
        %v482 = vsub.f32 %v419, %v474
        %v483 = vsub.f32 %v424, %v474
        %v484 = vsub.f32 %v427, %v474
        %v485 = vsub.f32 %v432, %v474
        %v486 = vsub.f32 %v435, %v474
        %v487 = vsub.f32 %v440, %v474
        %v488 = vsub.f32 %v443, %v474
        %v489 = vsub.f32 %v448, %v474
        %v490 = vsub.f32 %v451, %v474
        %v491 = vmul.f32 %v475, 1.442695
        %v492 = vpow.pop %v491
        %v493 = vmul.f32 %v476, 1.442695
        %v494 = vpow.pop %v493
        %v495 = vmul.f32 %v477, 1.442695
        %v496 = vpow.pop %v495
        %v497 = vmul.f32 %v478, 1.442695
        %v498 = vpow.pop %v497
        %v499 = vmul.f32 %v479, 1.442695
        %v500 = vpow.pop %v499
        %v501 = vmul.f32 %v480, 1.442695
        %v502 = vpow.pop %v501
        %v503 = vmul.f32 %v481, 1.442695
        %v504 = vpow.pop %v503
        %v505 = vmul.f32 %v482, 1.442695
        %v506 = vpow.pop %v505
        %v507 = vmul.f32 %v483, 1.442695
        %v508 = vpow.pop %v507
        %v509 = vmul.f32 %v484, 1.442695
        %v510 = vpow.pop %v509
        %v511 = vmul.f32 %v485, 1.442695
        %v512 = vpow.pop %v511
        %v513 = vmul.f32 %v486, 1.442695
        %v514 = vpow.pop %v513
        %v515 = vmul.f32 %v487, 1.442695
        %v516 = vpow.pop %v515
        %v517 = vmul.f32 %v488, 1.442695
        %v518 = vpow.pop %v517
        %v519 = vmul.f32 %v489, 1.442695
        %v520 = vpow.pop %v519
        %v521 = vmul.f32 %v490, 1.442695
        %v522 = vpow.pop %v521
        %v523 = vadd.f32 %v492, %v494
        %v524 = vadd.f32 %v523, %v496
        %v525 = vadd.f32 %v524, %v498
        %v526 = vadd.f32 %v525, %v500
        %v527 = vadd.f32 %v526, %v502
        %v528 = vadd.f32 %v527, %v504
        %v529 = vadd.f32 %v528, %v506
        %v530 = vadd.f32 %v529, %v508
        %v531 = vadd.f32 %v530, %v510
        %v532 = vadd.f32 %v531, %v512
        %v533 = vadd.f32 %v532, %v514
        %v534 = vadd.f32 %v533, %v516
        %v535 = vadd.f32 %v534, %v518
        %v536 = vadd.f32 %v535, %v520
        %v537 = vadd.f32 %v536, %v522
        %v538 = vrot.slane %v537, 4
        %v539 = vadd.f32 %v537, %v538
        %v540 = vrot.slane %v539, 2
        %v541 = vadd.f32 %v539, %v540
        %v542 = vrot.slane %v541, 1
        %v543 = vadd.f32 %v541, %v542
        %v544 = vrcp.pop %v543
        %v545 = vld [vmem:[#allocation7] sm:$0xf]
        %v546 = vld [vmem:[#allocation7 + $0x4] sm:$0xf]
        %v547 = vld [vmem:[#allocation7 + $0x8] sm:$0xf]
        %v548 = vld [vmem:[#allocation7 + $0xc] sm:$0xf]
        %v549 = vld [vmem:[#allocation7 + $0x10] sm:$0xf]
        %v550 = vld [vmem:[#allocation7 + $0x14] sm:$0xf]
        %v551 = vld [vmem:[#allocation7 + $0x18] sm:$0xf]
        %v552 = vld [vmem:[#allocation7 + $0x1c] sm:$0xf]
        %v553 = vld [vmem:[#allocation7 + $0x20] sm:$0xf]
        %v554 = vld [vmem:[#allocation7 + $0x24] sm:$0xf]
        %v555 = vld [vmem:[#allocation7 + $0x28] sm:$0xf]
        %v556 = vld [vmem:[#allocation7 + $0x2c] sm:$0xf]
        %v557 = vld [vmem:[#allocation7 + $0x30] sm:$0x3]
        %v558 = vpack.c.bf16 %v494, %v492
        %v559 = vpack.c.bf16 %v498, %v496
        %v560 = vpack.c.bf16 %v502, %v500
        %v561 = vpack.c.bf16 %v506, %v504
        %v562 = vpack.c.bf16 %v510, %v508
        %v563 = vpack.c.bf16 %v514, %v512
        %v564 = vpack.c.bf16 %v518, %v516
        %v565 = vpack.c.bf16 %v522, %v520
        %v579 = vunpack.c.l.b16 %v545
        %v580 = vunpack.c.l.b16 %v546
        %v581 = vunpack.c.l.b16 %v547
        %v582 = vunpack.c.l.b16 %v548
        %v583 = vunpack.c.l.b16 %v549
        %v584 = vunpack.c.l.b16 %v550
        %v585 = vunpack.c.l.b16 %v551
        %v586 = vunpack.c.l.b16 %v552
        %v587 = vunpack.c.l.b16 %v553
        %v588 = vunpack.c.l.b16 %v554
        %v589 = vunpack.c.l.b16 %v555
        %v590 = vunpack.c.l.b16 %v556
        %v591 = vunpack.c.l.b16 %v557
        %v592 = vpack.c.b16 %v580, %v579
        %v593 = vpack.c.b16 %v582, %v581
        %v594 = vpack.c.b16 %v584, %v583
        %v595 = vpack.c.b16 %v586, %v585
        %v596 = vpack.c.b16 %v588, %v587
        %v597 = vpack.c.b16 %v590, %v589
        %v598 = vpack.c.b16 %v591, %v591
        %606 = vmatprep.subr.bf16.mxu0 0
        %607 = vmatpush1.bf16.msra.mxu0 %v558
        %608 = vmatprep.subr.bf16.mxu0 0
        %609 = vmatpush1.bf16.msra.mxu0 %v559
        %610 = vmatprep.subr.bf16.mxu0 0
        %611 = vmatpush1.bf16.msra.mxu0 %v560
        %612 = vmatprep.subr.bf16.mxu0 0
        %613 = vmatpush1.bf16.msra.mxu0 %v561
        %614 = vmatprep.subr.bf16.mxu0 0
        %615 = vmatpush1.bf16.msra.mxu0 %v562
        %616 = vmatprep.subr.bf16.mxu0 0
        %617 = vmatpush1.bf16.msra.mxu0 %v563
        %618 = vmatprep.subr.bf16.mxu0 0
        %619 = vmatpush1.bf16.msra.mxu0 %v564
        %620 = vmatprep.subr.bf16.mxu0 0
        %621 = vmatpush1.bf16.msra.mxu0 %v565
        %622 = vmatprep.subr.bf16.mxu0 0
        %623 = vmatpush1.bf16.msra.mxu0 0
        %624 = vmatprep.subr.bf16.mxu0 0
        %625 = vmatpush1.bf16.msra.mxu0 0
        %626 = vmatprep.subr.bf16.mxu0 0
        %627 = vmatpush1.bf16.msra.mxu0 0
        %628 = vmatprep.subr.bf16.mxu0 0
        %629 = vmatpush1.bf16.msra.mxu0 0
        %630 = vmatprep.subr.bf16.mxu0 0
        %631 = vmatpush1.bf16.msra.mxu0 0
        %632 = vmatprep.subr.bf16.mxu0 0
        %633 = vmatpush1.bf16.msra.mxu0 0
        %634 = vmatprep.subr.bf16.mxu0 0
        %635 = vmatpush1.bf16.msra.mxu0 0
        %636 = vmatprep.subr.bf16.mxu0 0
        %637 = vmatpush1.bf16.msra.mxu0 0
        %638 = vmatprep.mubr.bf16.mxu0 0
        %639 = vmatmul.mubr.bf16.gmra.mrb[0].mxu0 %v592
        %v640 = vpop.f32.mrb[0].mxu0
        %v641 = vadd.f32 0.0, %v640
        %v642 = vpop.f32.mrb[0].mxu0
        %v643 = vpop.f32.mrb[0].mxu0
        %v644 = vadd.f32 0.0, %v643
        %v645 = vpop.f32.mrb[0].mxu0
        %646 = vmatprep.mubr.bf16.mxu0 0
        %647 = vmatmul.mubr.bf16.gmra.mrb[0].mxu0 %v593
        %v648 = vpop.f32.mrb[0].mxu0
        %v649 = vadd.f32 0.0, %v648
        %v650 = vpop.f32.mrb[0].mxu0
        %v651 = vpop.f32.mrb[0].mxu0
        %v652 = vadd.f32 0.0, %v651
        %v653 = vpop.f32.mrb[0].mxu0
        %654 = vmatprep.mubr.bf16.mxu0 0
        %655 = vmatmul.mubr.bf16.gmra.mrb[0].mxu0 %v594
        %v656 = vpop.f32.mrb[0].mxu0
        %v657 = vadd.f32 0.0, %v656
        %v658 = vpop.f32.mrb[0].mxu0
        %v659 = vpop.f32.mrb[0].mxu0
        %v660 = vadd.f32 0.0, %v659
        %v661 = vpop.f32.mrb[0].mxu0
        %662 = vmatprep.mubr.bf16.mxu0 0
        %663 = vmatmul.mubr.bf16.gmra.mrb[0].mxu0 %v595
        %v664 = vpop.f32.mrb[0].mxu0
        %v665 = vadd.f32 0.0, %v664
        %v666 = vpop.f32.mrb[0].mxu0
        %v667 = vpop.f32.mrb[0].mxu0
        %v668 = vadd.f32 0.0, %v667
        %v669 = vpop.f32.mrb[0].mxu0
        %670 = vmatprep.mubr.bf16.mxu0 0
        %671 = vmatmul.mubr.bf16.gmra.mrb[0].mxu0 %v596
        %v672 = vpop.f32.mrb[0].mxu0
        %v673 = vadd.f32 0.0, %v672
        %v674 = vpop.f32.mrb[0].mxu0
        %v675 = vpop.f32.mrb[0].mxu0
        %v676 = vadd.f32 0.0, %v675
        %v677 = vpop.f32.mrb[0].mxu0
        %678 = vmatprep.mubr.bf16.mxu0 0
        %679 = vmatmul.mubr.bf16.gmra.mrb[0].mxu0 %v597
        %v680 = vpop.f32.mrb[0].mxu0
        %v681 = vadd.f32 0.0, %v680
        %v682 = vpop.f32.mrb[0].mxu0
        %v683 = vpop.f32.mrb[0].mxu0
        %v684 = vadd.f32 0.0, %v683
        %v685 = vpop.f32.mrb[0].mxu0
        %686 = vmatprep.mubr.bf16.mxu0 0
        %687 = vmatmul.mubr.bf16.gmra.mrb[0].mxu0 %v598
        %v688 = vpop.f32.mrb[0].mxu0
        %v689 = vadd.f32 0.0, %v688
        %v690 = vpop.f32.mrb[0].mxu0
        %v691 = vpop.f32.mrb[0].mxu0
        %v692 = vpop.f32.mrb[0].mxu0
        %693 = vdwg.mxu0
        %v694 = vmul.f32 %v641, %v544
        %v695 = vmul.f32 %v644, %v544
        %v696 = vmul.f32 %v649, %v544
        %v697 = vmul.f32 %v652, %v544
        %v698 = vmul.f32 %v657, %v544
        %v699 = vmul.f32 %v660, %v544
        %v700 = vmul.f32 %v665, %v544
        %v701 = vmul.f32 %v668, %v544
        %v702 = vmul.f32 %v673, %v544
        %v703 = vmul.f32 %v676, %v544
        %v704 = vmul.f32 %v681, %v544
        %v705 = vmul.f32 %v684, %v544
        %v706 = vmul.f32 %v689, %v544
        %v709 = vunpack.c.l.s4 1966171168
        %v710 = vunpack.c.0.s8 %v709
        %v711 = vlaneseq
        %v712 = vshrl.u32 %v711, 7
        %v713 = vsub.s32 %v710, %v712
        %v714 = vrot.slane %v706, %v713
        %v715 = vcombine.high %v714, %v714
        %v717 = vunpack.c.l.s4 1966171168
        %v718 = vunpack.c.0.s8 %v717
        %v719 = vlaneseq
        %v720 = vshrl.u32 %v719, 7
        %v721 = vsub.s32 %v718, %v720
        %v722 = vrot.slane %v714, %v721
        %v724 = vunpack.c.l.s4 1966171168
        %v725 = vunpack.c.0.s8 %v724
        %v726 = vlaneseq
        %v727 = vshrl.u32 %v726, 7
        %v728 = vsub.s32 %v725, %v727
        %v729 = vrot.slane %v715, %v728
        %v730 = vcombine.high %v722, %v722
        %731 = vst [vmem:[%s282] sm:$0xff] %v694
        %732 = vst [vmem:[%s282 + $0x8] sm:$0xff] %v695
        %733 = vst [vmem:[%s282 + $0x10] sm:$0xff] %v696
        %734 = vst [vmem:[%s282 + $0x18] sm:$0xff] %v697
        %735 = vst [vmem:[%s282 + $0x40] sm:$0xff] %v698
        %736 = vst [vmem:[%s282 + $0x48] sm:$0xff] %v699
        %737 = vst [vmem:[%s282 + $0x50] sm:$0xff] %v700
        %738 = vst [vmem:[%s282 + $0x58] sm:$0xff] %v701
        %739 = vst [vmem:[%s282 + $0x80] sm:$0xff] %v702
        %740 = vst [vmem:[%s282 + $0x88] sm:$0xff] %v703
        %741 = vst [vmem:[%s282 + $0x90] sm:$0xff] %v704
        %742 = vst [vmem:[%s282 + $0x98] sm:$0xff] %v705
        %v743 = vld [vmem:[%s253] sm:$0xff]
        %v744 = vld [vmem:[%s253 + $0x8] sm:$0xff]
        %v745 = vld [vmem:[%s253 + $0x10] sm:$0xff]
        %v746 = vld [vmem:[%s253 + $0x18] sm:$0xff]
        %v747 = vld [vmem:[%s253 + $0x20] sm:$0xff]
        %v748 = vld [vmem:[%s253 + $0x28] sm:$0xff]
        %v749 = vld [vmem:[%s253 + $0x30] sm:$0xff]
        %v750 = vld [vmem:[%s253 + $0x38] sm:$0xff]
        %v751 = vld [vmem:[%s253 + $0x40] sm:$0xff]
        %v752 = vld [vmem:[%s253 + $0x48] sm:$0xff]
        %v753 = vld [vmem:[%s253 + $0x50] sm:$0xff]
        %v754 = vld [vmem:[%s253 + $0x58] sm:$0xff]
        %v755 = vlaneseq
        %v756 = vshrl.u32 %v755, 7
        %v757 = vsub.s32 0, %v756
        %v758 = vrot.slane %v722, %v757
        %v759 = vlaneseq
        %v760 = vshrl.u32 %v759, 7
        %v761 = vsub.s32 0, %v760
        %v762 = vrot.slane %v729, %v761
        %v763 = vlaneseq
        %v764 = vshrl.u32 %v763, 7
        %v765 = vsub.s32 0, %v764
        %v766 = vrot.slane %v730, %v765
        %v770 = vmul.f32 %v743, %v758
        %v771 = vmul.f32 %v744, %v758
        %v772 = vmul.f32 %v745, %v758
        %v773 = vmul.f32 %v746, %v758
        %v774 = vmul.f32 %v747, %v762
        %v775 = vmul.f32 %v748, %v762
        %v776 = vmul.f32 %v749, %v762
        %v777 = vmul.f32 %v750, %v762
        %v778 = vmul.f32 %v751, %v766
        %v779 = vmul.f32 %v752, %v766
        %v780 = vmul.f32 %v753, %v766
        %v781 = vmul.f32 %v754, %v766
        %782 = vst [vmem:[%s282 + $0x20] sm:$0xff] %v770
        %783 = vst [vmem:[%s282 + $0x28] sm:$0xff] %v771
        %784 = vst [vmem:[%s282 + $0x30] sm:$0xff] %v772
        %785 = vst [vmem:[%s282 + $0x38] sm:$0xff] %v773
        %786 = vst [vmem:[%s282 + $0x60] sm:$0xff] %v774
        %787 = vst [vmem:[%s282 + $0x68] sm:$0xff] %v775
        %788 = vst [vmem:[%s282 + $0x70] sm:$0xff] %v776
        %789 = vst [vmem:[%s282 + $0x78] sm:$0xff] %v777
        %790 = vst [vmem:[%s282 + $0xa0] sm:$0xff] %v778
        %791 = vst [vmem:[%s282 + $0xa8] sm:$0xff] %v779
        %792 = vst [vmem:[%s282 + $0xb0] sm:$0xff] %v780
        %793 = vst [vmem:[%s282 + $0xb8] sm:$0xff] %v781
        %s794 = sand.u32 %s127, 1
        %s795 = scalar_lea.sflag [#allocation4], %s794
        %s796 = sand.u32 %s127, 1
        %s797 = smul.addr %s796, 192
        %s798 = scalar_lea.vmem [#allocation10], %s797
        // Predicated region
        $region53: #{tpu_custom_call.1} parent=35 // pred_check
          %p799 = pneg %p137
        $region54: #{tpu_custom_call.1} parent=35 // pred_check_branch
          %801 = sbr.rel (%p799) target = $region56
        $region55: #{tpu_custom_call.1} parent=35 // pred_region
          %s803 = ssub.s32 3072, 3072
          %804 = vsyncadd %s795, %s803
          %s805 = smul.addr %s25, 128
          %s806 = scalar_lea.hbm %s4, %s805
          %s807 = sshll.u32 %s798, 4
          %s808 = int_to_ptr.vmem [resolvable:$true] %s807
          %813 = dma.vmem_to_hbm [thread:$0]  %s808, 3072, %s806, %s795, 128, 256, 8
        $region56: #{tpu_custom_call.1} parent=35 // pred_fallthru
          _
      $region36: #{tpu_custom_call.1} parent=5 // pred_fallthru
        _
      %p814 = scmp.le.s32.totalorder 2, %s20
      // Predicated region
      $region57: #{tpu_custom_call.1} parent=5 // pred_check
        %p815 = pneg %p814
      $region58: #{tpu_custom_call.1} parent=5 // pred_check_branch
        %817 = sbr.rel (%p815) target = $region60
      $region59: #{tpu_custom_call.1} parent=5 // pred_region
        %s818 = ssub.s32 %s20, 2
        // Predicated region
        $region61: #{tpu_custom_call.1} parent=59 // pred_check
          %p819 = pneg %p143
        $region62: #{tpu_custom_call.1} parent=59 // pred_check_branch
          %821 = sbr.rel (%p819) target = $region64
        $region63: #{tpu_custom_call.1} parent=59 // pred_region
          %s822 = sand.u32 %s128, 1
          %s823 = scalar_lea.sflag [#allocation4], %s822
          %s824 = sand.u32 %s128, 1
          %s825 = smul.addr %s824, 192
          %s826 = scalar_lea.vmem [#allocation10], %s825
          %827 = dma.done %s823, 3072
        $region64: #{tpu_custom_call.1} parent=59 // pred_fallthru
          _
      $region60: #{tpu_custom_call.1} parent=5 // pred_fallthru
        _
    $region6: #{tpu_custom_call.1} parent=1 // loop_footer
      %s24 = sadd.s32 1, %s20
    $region7: #{tpu_custom_call.1} parent=1 // loop_footer_branch
      %19 = sbr.rel target = $region3
    $region8: #{tpu_custom_call.1} parent=1 // loop_exit
      _
    %828 = vsyncpa [#allocation3], 1
    %s829 = scalar_lea.sflag [#allocation3], 1
    %830 = vsyncpa %s829, 1
    %831 = vsyncpa [#allocation6], 1
    %s832 = scalar_lea.sflag [#allocation6], 1
    %833 = vsyncpa %s832, 1
    %834 = vsyncpa [#allocation9], 1
    %s835 = scalar_lea.sflag [#allocation9], 1
    %836 = vsyncpa %s835, 1
    %837 = vsyncpa [#allocation4], 1
    %s838 = scalar_lea.sflag [#allocation4], 1
    %839 = vsyncpa %s838, 1

// kernel: tpu_custom_call.1
$region0: #{tpu_custom_call.1}
  #allocation0 [shape = 'u32[]', space=smem, size = 0x4, offset = 0x4, fixed_abs, tag = 'smem constant byte address 0x4 - core index']
  #allocation1 [shape = 'u32[144,128]{1,0:T(1,128)}', space=vmem, size = 0x12000, scoped, tag = 'internal scratch']
  %s0 = inlined_call_operand.hbm [shape: bf16[32,128], index: 0, kind: input, shape index: {}]
  %s1 = inlined_call_operand.hbm [shape: bf16[32,256], index: 1, kind: input, shape index: {}]
  %s2 = inlined_call_operand.hbm [shape: bf16[99,128], index: 2, kind: input, shape index: {}]
  %s3 = inlined_call_operand.hbm [shape: f32[3,32,256], index: 3, kind: input, shape index: {}]
  %s4 = inlined_call_operand.hbm [shape: f32[3,64,256], index: 4, kind: output, shape index: {}]
  %s5 = sld [smem:[#allocation0]]
  $region65: #{tpu_custom_call.1} parent=0
    _
  %s7 = ssub.s32 1, %s5
  %s8 = scalar_select 0, %s7, %s5
  $region1: #{tpu_custom_call.1} parent=0
    #allocation2 [shape = 'u8[8192]{0}', space=vmem, size = 0x2000, scoped, tag = 'input window, operand 0, single buffered']
    #allocation3 [shape = 's32[2]{0}', space=sflag, size = 0x8, scoped, tag = 'scoped memory for tpu_custom_call.1']
    #allocation4 [shape = 's32[2]{0}', space=sflag, size = 0x8, scoped, tag = 'scoped memory for tpu_custom_call.1']
    #allocation5 [shape = 'u8[16384]{0}', space=vmem, size = 0x4000, scoped, tag = 'input window, operand 1']
    #allocation6 [shape = 's32[2]{0}', space=sflag, size = 0x8, scoped, tag = 'scoped memory for tpu_custom_call.1']
    #allocation7 [shape = 'u8[26624]{0}', space=vmem, size = 0x6800, scoped, tag = 'input window, operand 2, single buffered']
    #allocation8 [shape = 'u8[98304]{0}', space=vmem, size = 0x18000, scoped, tag = 'input window, operand 3']
    #allocation9 [shape = 's32[2]{0}', space=sflag, size = 0x8, scoped, tag = 'scoped memory for tpu_custom_call.1']
    #allocation10 [shape = 'u8[196608]{0}', space=vmem, size = 0x30000, scoped, tag = 'output window, operand 0']
    %9 = vsyncpa [#allocation3], 0
    %10 = vsyncpa [#allocation6], 0
    %s11 = scalar_lea.sflag [#allocation6], 1
    %12 = vsyncpa %s11, 0
    %13 = vsyncpa [#allocation9], 0
    %s14 = scalar_lea.sflag [#allocation9], 1
    %15 = vsyncpa %s14, 0
    %16 = vsyncpa [#allocation4], 0
    %s17 = scalar_lea.sflag [#allocation4], 1
    %18 = vsyncpa %s17, 0
    loop: start=0, step=1, limit=4
    $region2: #{tpu_custom_call.1} parent=1 // loop_pre_header
      _
    $region3: #{tpu_custom_call.1} parent=1 // loop_header
      %s20 = sphi 0, %s24
      %p21 = scmp.ge.s32.totalorder %s20, 4
      %s28 = sphi 0, %s28
      %s30 = sphi 0, %s28
      %s31 = sphi 0, %s30
      %s45 = sphi 0, %s31
      %s51 = sphi 0, %s53
      %s54 = sphi 0, %s51
      %s55 = sphi 0, %s54
      %s71 = sphi 0, %s55
      %s75 = sphi 0, %s75
      %s77 = sphi 0, %s75
      %s78 = sphi 0, %s77
      %s92 = sphi 0, %s78
      %s98 = sphi 0, %s100
      %s101 = sphi 0, %s98
      %s102 = sphi 0, %s101
      %s118 = sphi 0, %s102
      %s124 = sphi 0, %s126
      %s127 = sphi 0, %s124
      %s128 = sphi 0, %s127
      %s144 = sphi 0, %s128
    $region4: #{tpu_custom_call.1} parent=1 // loop_header_branch
      %23 = sbr.rel (%p21) target = $region8
    $region5: #{tpu_custom_call.1} parent=1 // loop_body
      %s25 = ssub.s32 %s20, 1
      %s26 = ssub.s32 %s20, 2
      %s27 = sadd.s32 %s20, 1
      %s29 = sadd.s32 %s28, 1
      %p32 = scmp.eq.s32.totalorder %s20, 1
      %p33 = scmp.ne.s32.totalorder %s28, %s30
      %p34 = scmp.eq.s32.totalorder %s20, 0
      %p35 = por %p33, %p34
      %p36 = scmp.ne.s32.totalorder %s28, %s30
      %p37 = scmp.eq.s32.totalorder %s25, 1
      %p38 = por %p36, %p37
      %p39 = scmp.ne.s32.totalorder %s30, %s31
      %p40 = scmp.eq.s32.totalorder %s25, 0
      %p41 = por %p39, %p40
      %p42 = scmp.ne.s32.totalorder %s30, %s31
      %p43 = scmp.eq.s32.totalorder %s26, 1
      %p44 = por %p42, %p43
      %p46 = scmp.ne.s32.totalorder %s31, %s45
      %p47 = scmp.eq.s32.totalorder %s26, 0
      %p48 = por %p46, %p47
      %s49 = ssub.s32 %s20, %s27
      %p50 = scmp.eq.s32.totalorder %s49, 0
      %s52 = sadd.s32 %s51, 1
      %s53 = scalar_select %p50, %s51, %s52
      %p56 = pneg %p50
      %p57 = scmp.eq.s32.totalorder %s20, 1
      %p58 = por %p56, %p57
      %p59 = scmp.ne.s32.totalorder %s51, %s54
      %p60 = scmp.eq.s32.totalorder %s20, 0
      %p61 = por %p59, %p60
      %p62 = scmp.ne.s32.totalorder %s51, %s54
      %p63 = scmp.eq.s32.totalorder %s25, 1
      %p64 = por %p62, %p63
      %p65 = scmp.ne.s32.totalorder %s54, %s55
      %p66 = scmp.eq.s32.totalorder %s25, 0
      %p67 = por %p65, %p66
      %p68 = scmp.ne.s32.totalorder %s54, %s55
      %p69 = scmp.eq.s32.totalorder %s26, 1
      %p70 = por %p68, %p69
      %p72 = scmp.ne.s32.totalorder %s55, %s71
      %p73 = scmp.eq.s32.totalorder %s26, 0
      %p74 = por %p72, %p73
      %s76 = sadd.s32 %s75, 1
      %p79 = scmp.eq.s32.totalorder %s20, 1
      %p80 = scmp.ne.s32.totalorder %s75, %s77
      %p81 = scmp.eq.s32.totalorder %s20, 0
      %p82 = por %p80, %p81
      %p83 = scmp.ne.s32.totalorder %s75, %s77
      %p84 = scmp.eq.s32.totalorder %s25, 1
      %p85 = por %p83, %p84
      %p86 = scmp.ne.s32.totalorder %s77, %s78
      %p87 = scmp.eq.s32.totalorder %s25, 0
      %p88 = por %p86, %p87
      %p89 = scmp.ne.s32.totalorder %s77, %s78
      %p90 = scmp.eq.s32.totalorder %s26, 1
      %p91 = por %p89, %p90
      %p93 = scmp.ne.s32.totalorder %s78, %s92
      %p94 = scmp.eq.s32.totalorder %s26, 0
      %p95 = por %p93, %p94
      %s96 = ssub.s32 %s20, %s27
      %p97 = scmp.eq.s32.totalorder %s96, 0
      %s99 = sadd.s32 %s98, 1
      %s100 = scalar_select %p97, %s98, %s99
      %p103 = pneg %p97
      %p104 = scmp.eq.s32.totalorder %s20, 1
      %p105 = por %p103, %p104
      %p106 = scmp.ne.s32.totalorder %s98, %s101
      %p107 = scmp.eq.s32.totalorder %s20, 0
      %p108 = por %p106, %p107
      %p109 = scmp.ne.s32.totalorder %s98, %s101
      %p110 = scmp.eq.s32.totalorder %s25, 1
      %p111 = por %p109, %p110
      %p112 = scmp.ne.s32.totalorder %s101, %s102
      %p113 = scmp.eq.s32.totalorder %s25, 0
      %p114 = por %p112, %p113
      %p115 = scmp.ne.s32.totalorder %s101, %s102
      %p116 = scmp.eq.s32.totalorder %s26, 1
      %p117 = por %p115, %p116
      %p119 = scmp.ne.s32.totalorder %s102, %s118
      %p120 = scmp.eq.s32.totalorder %s26, 0
      %p121 = por %p119, %p120
      %s122 = ssub.s32 %s20, %s27
      %p123 = scmp.eq.s32.totalorder %s122, 0
      %s125 = sadd.s32 %s124, 1
      %s126 = scalar_select %p123, %s124, %s125
      %p129 = pneg %p123
      %p130 = scmp.eq.s32.totalorder %s20, 1
      %p131 = por %p129, %p130
      %p132 = scmp.ne.s32.totalorder %s124, %s127
      %p133 = scmp.eq.s32.totalorder %s20, 0
      %p134 = por %p132, %p133
      %p135 = scmp.ne.s32.totalorder %s124, %s127
      %p136 = scmp.eq.s32.totalorder %s25, 1
      %p137 = por %p135, %p136
      %p138 = scmp.ne.s32.totalorder %s127, %s128
      %p139 = scmp.eq.s32.totalorder %s25, 0
      %p140 = por %p138, %p139
      %p141 = scmp.ne.s32.totalorder %s127, %s128
      %p142 = scmp.eq.s32.totalorder %s26, 1
      %p143 = por %p141, %p142
      %p145 = scmp.ne.s32.totalorder %s128, %s144
      %p146 = scmp.eq.s32.totalorder %s26, 0
      %p147 = por %p145, %p146
      %p148 = scmp.le.s32.totalorder 1, %s20
      %p149 = scmp.lt.s32.totalorder %s20, 3
      %p150 = pnand %p148, %p149
      %p151 = pneg %p150
      // Predicated region
      $region9: #{tpu_custom_call.1} parent=5 // pred_check
        _
      $region10: #{tpu_custom_call.1} parent=5 // pred_check_branch
        %153 = sbr.rel (%p150) target = $region12
      $region11: #{tpu_custom_call.1} parent=5 // pred_region
        %s154 = ssub.s32 %s20, 1
        // Predicated region
        $region13: #{tpu_custom_call.1} parent=11 // pred_check
          %p155 = pneg %p41
        $region14: #{tpu_custom_call.1} parent=11 // pred_check_branch
          %157 = sbr.rel (%p155) target = $region16
        $region15: #{tpu_custom_call.1} parent=11 // pred_region
          %s159 = ssub.s32 256, 256
          %160 = vsyncadd [#allocation3], %s159
          %s161 = sshll.u32 [#allocation2], 4
          %s162 = int_to_ptr.vmem [resolvable:$true] %s161
          %167 = dma.hbm_to_vmem [thread:$0]  %s0, 256, %s162, [#allocation3], 64, 64, 4
        $region16: #{tpu_custom_call.1} parent=11 // pred_fallthru
          _
        // Predicated region
        $region17: #{tpu_custom_call.1} parent=11 // pred_check
          %p168 = pneg %p88
        $region18: #{tpu_custom_call.1} parent=11 // pred_check_branch
          %170 = sbr.rel (%p168) target = $region20
        $region19: #{tpu_custom_call.1} parent=11 // pred_region
          %s172 = ssub.s32 832, 832
          %173 = vsyncadd [#allocation6], %s172
          %s174 = sshll.u32 [#allocation7], 4
          %s175 = int_to_ptr.vmem [resolvable:$true] %s174
          %180 = dma.hbm_to_vmem [thread:$0]  %s2, 832, %s175, [#allocation6], 64, 64, 4
        $region20: #{tpu_custom_call.1} parent=11 // pred_fallthru
          _
      $region12: #{tpu_custom_call.1} parent=5 // pred_fallthru
        _
      %p181 = scmp.lt.s32.totalorder %s20, 2
      // Predicated region
      $region21: #{tpu_custom_call.1} parent=5 // pred_check
        %p182 = pneg %p181
      $region22: #{tpu_custom_call.1} parent=5 // pred_check_branch
        %184 = sbr.rel (%p182) target = $region24
      $region23: #{tpu_custom_call.1} parent=5 // pred_region
        // Predicated region
        $region25: #{tpu_custom_call.1} parent=23 // pred_check
          %p185 = pneg %p61
        $region26: #{tpu_custom_call.1} parent=23 // pred_check_branch
          %187 = sbr.rel (%p185) target = $region28
        $region27: #{tpu_custom_call.1} parent=23 // pred_region
          %s188 = sand.u32 %s20, 1
          %s189 = scalar_lea.sflag [#allocation6], %s188
          %s190 = sand.u32 %s51, 1
          %s191 = smul.addr %s190, 16
          %s192 = scalar_lea.vmem [#allocation5], %s191
          %s194 = ssub.s32 256, 256
          %195 = vsyncadd %s189, %s194
          %s196 = smul.addr %s20, 64
          %s197 = scalar_lea.hbm %s1, %s196
          %s198 = sshll.u32 %s192, 4
          %s199 = int_to_ptr.vmem [resolvable:$true] %s198
          %204 = dma.hbm_to_vmem [thread:$0]  %s197, 256, %s199, %s189, 128, 64, 4
        $region28: #{tpu_custom_call.1} parent=23 // pred_fallthru
          _
        // Predicated region
        $region29: #{tpu_custom_call.1} parent=23 // pred_check
          %p205 = pneg %p108
        $region30: #{tpu_custom_call.1} parent=23 // pred_check_branch
          %207 = sbr.rel (%p205) target = $region32
        $region31: #{tpu_custom_call.1} parent=23 // pred_region
          %s208 = sand.u32 %s98, 1
          %s209 = scalar_lea.sflag [#allocation9], %s208
          %s210 = sand.u32 %s98, 1
          %s211 = smul.addr %s210, 96
          %s212 = scalar_lea.vmem [#allocation8], %s211
          %s214 = ssub.s32 1536, 1536
          %215 = vsyncadd %s209, %s214
          %s216 = smul.addr %s20, 128
          %s217 = scalar_lea.hbm %s3, %s216
          %s218 = sshll.u32 %s212, 4
          %s219 = int_to_ptr.vmem [resolvable:$true] %s218
          %224 = dma.hbm_to_vmem [thread:$0]  %s217, 1536, %s219, %s209, 256, 128, 8
        $region32: #{tpu_custom_call.1} parent=23 // pred_fallthru
          _
      $region24: #{tpu_custom_call.1} parent=5 // pred_fallthru
        _
      %p225 = scmp.le.s32.totalorder 1, %s20
      %p226 = scmp.lt.s32.totalorder %s20, 3
      %p227 = pnand %p225, %p226
      %p228 = pneg %p227
      // Predicated region
      $region33: #{tpu_custom_call.1} parent=5 // pred_check
        _
      $region34: #{tpu_custom_call.1} parent=5 // pred_check_branch
        %230 = sbr.rel (%p227) target = $region36
      $region35: #{tpu_custom_call.1} parent=5 // pred_region
        %s231 = ssub.s32 %s20, 1
        // Predicated region
        $region37: #{tpu_custom_call.1} parent=35 // pred_check
          %p232 = pneg %p41
        $region38: #{tpu_custom_call.1} parent=35 // pred_check_branch
          %234 = sbr.rel (%p232) target = $region40
        $region39: #{tpu_custom_call.1} parent=35 // pred_region
          %235 = dma.done [#allocation3], 256
        $region40: #{tpu_custom_call.1} parent=35 // pred_fallthru
          _
        %s236 = sand.u32 %s25, 1
        %s237 = scalar_lea.sflag [#allocation6], %s236
        %s238 = sand.u32 %s54, 1
        %s239 = smul.addr %s238, 16
        %s240 = scalar_lea.vmem [#allocation5], %s239
        // Predicated region
        $region41: #{tpu_custom_call.1} parent=35 // pred_check
          %p241 = pneg %p67
        $region42: #{tpu_custom_call.1} parent=35 // pred_check_branch
          %243 = sbr.rel (%p241) target = $region44
        $region43: #{tpu_custom_call.1} parent=35 // pred_region
          %244 = dma.done %s237, 256
        $region44: #{tpu_custom_call.1} parent=35 // pred_fallthru
          _
        // Predicated region
        $region45: #{tpu_custom_call.1} parent=35 // pred_check
          %p245 = pneg %p88
        $region46: #{tpu_custom_call.1} parent=35 // pred_check_branch
          %247 = sbr.rel (%p245) target = $region48
        $region47: #{tpu_custom_call.1} parent=35 // pred_region
          %248 = dma.done [#allocation6], 832
        $region48: #{tpu_custom_call.1} parent=35 // pred_fallthru
          _
        %s249 = sand.u32 %s101, 1
        %s250 = scalar_lea.sflag [#allocation9], %s249
        %s251 = sand.u32 %s101, 1
        %s252 = smul.addr %s251, 96
        %s253 = scalar_lea.vmem [#allocation8], %s252
        // Predicated region
        $region49: #{tpu_custom_call.1} parent=35 // pred_check
          %p254 = pneg %p114
        $region50: #{tpu_custom_call.1} parent=35 // pred_check_branch
          %256 = sbr.rel (%p254) target = $region52
        $region51: #{tpu_custom_call.1} parent=35 // pred_region
          %257 = dma.done %s250, 1536
        $region52: #{tpu_custom_call.1} parent=35 // pred_fallthru
          _
        %p258 = pneg %p41
        %p259 = pneg %p38
        %s260 = sand.u32 %s25, 1
        %s261 = scalar_lea.sflag [#allocation6], %s260
        %s262 = sand.u32 %s54, 1
        %s263 = smul.addr %s262, 16
        %s264 = scalar_lea.vmem [#allocation5], %s263
        %p265 = pneg %p67
        %p266 = pneg %p64
        %p267 = pneg %p88
        %p268 = pneg %p85
        %s269 = sand.u32 %s101, 1
        %s270 = scalar_lea.sflag [#allocation9], %s269
        %s271 = sand.u32 %s101, 1
        %s272 = smul.addr %s271, 96
        %s273 = scalar_lea.vmem [#allocation8], %s272
        %p274 = pneg %p114
        %p275 = pneg %p111
        %p276 = pneg %p140
        %p277 = pneg %p137
        %s278 = sand.u32 %s127, 1
        %s279 = scalar_lea.sflag [#allocation4], %s278
        %s280 = sand.u32 %s127, 1
        %s281 = smul.addr %s280, 192
        %s282 = scalar_lea.vmem [#allocation10], %s281
        %v284 = vld [vmem:[#allocation2] sm:$0xf]
        %v285 = vld [vmem:[#allocation2 + $0x4] sm:$0xf]
        %v286 = vld [vmem:[#allocation2 + $0x8] sm:$0xf]
        %v287 = vld [vmem:[#allocation2 + $0xc] sm:$0xf]
        %v288 = vld [vmem:[%s240] sm:$0xf]
        %v289 = vld [vmem:[%s240 + $0x4] sm:$0xf]
        %v290 = vld [vmem:[%s240 + $0x8] sm:$0xf]
        %v291 = vld [vmem:[%s240 + $0xc] sm:$0xf]
        %v296 = vunpack.c.l.b16 %v284
        %v297 = vunpack.c.l.b16 %v285
        %v298 = vunpack.c.l.b16 %v286
        %v299 = vunpack.c.l.b16 %v287
        %v300 = vpack.c.b16 %v297, %v296
        %v301 = vpack.c.b16 %v299, %v298
        %304 = vxpose.xlu0.c.b16.start [1/8] %v300, 128
        %305 = vxpose.xlu0.c.b16.cont [2/8] %v301, 128
        %306 = vxpose.xlu0.c.b16.cont [3/8] 0, 128
        %307 = vxpose.xlu0.c.b16.cont [4/8] 0, 128
        %308 = vxpose.xlu0.c.b16.cont [5/8] 0, 128
        %309 = vxpose.xlu0.c.b16.cont [6/8] 0, 128
        %310 = vxpose.xlu0.c.b16.cont [7/8] 0, 128
        %311 = vxpose.xlu0.c.b16.end [8/8] 0, 128
        %v312 = vpop.trf.xlu0
        %v313 = vpop.trf.xlu0
        %v314 = vpop.trf.xlu0
        %v315 = vpop.trf.xlu0
        %v316 = vpop.trf.xlu0
        %v317 = vpop.trf.xlu0
        %v318 = vpop.trf.xlu0
        %v319 = vpop.trf.xlu0
        %v324 = vunpack.c.l.b16 %v288
        %v325 = vunpack.c.l.b16 %v289
        %v326 = vunpack.c.l.b16 %v290
        %v327 = vunpack.c.l.b16 %v291
        %v328 = vpack.c.b16 %v325, %v324
        %v329 = vpack.c.b16 %v327, %v326
        %vm332 = vcmask 261120
        %v334 = vsel %vm332, %v312, 0
        %v337 = vsel %vm332, %v313, 0
        %v340 = vsel %vm332, %v314, 0
        %v343 = vsel %vm332, %v315, 0
        %v346 = vsel %vm332, %v316, 0
        %v349 = vsel %vm332, %v317, 0
        %v352 = vsel %vm332, %v318, 0
        %v355 = vsel %vm332, %v319, 0
        %357 = vmatprep.subr.bf16.mxu0 0
        %358 = vmatpush1.bf16.msra.mxu0 %v328
        %359 = vmatprep.subr.bf16.mxu0 0
        %360 = vmatpush1.bf16.msra.mxu0 %v329
        %361 = vmatprep.subr.bf16.mxu0 0
        %362 = vmatpush1.bf16.msra.mxu0 0
        %363 = vmatprep.subr.bf16.mxu0 0
        %364 = vmatpush1.bf16.msra.mxu0 0
        %365 = vmatprep.subr.bf16.mxu0 0
        %366 = vmatpush1.bf16.msra.mxu0 0
        %367 = vmatprep.subr.bf16.mxu0 0
        %368 = vmatpush1.bf16.msra.mxu0 0
        %369 = vmatprep.subr.bf16.mxu0 0
        %370 = vmatpush1.bf16.msra.mxu0 0
        %371 = vmatprep.subr.bf16.mxu0 0
        %372 = vmatpush1.bf16.msra.mxu0 0
        %373 = vmatprep.subr.bf16.mxu0 0
        %374 = vmatpush1.bf16.msra.mxu0 0
        %375 = vmatprep.subr.bf16.mxu0 0
        %376 = vmatpush1.bf16.msra.mxu0 0
        %377 = vmatprep.subr.bf16.mxu0 0
        %378 = vmatpush1.bf16.msra.mxu0 0
        %379 = vmatprep.subr.bf16.mxu0 0
        %380 = vmatpush1.bf16.msra.mxu0 0
        %381 = vmatprep.subr.bf16.mxu0 0
        %382 = vmatpush1.bf16.msra.mxu0 0
        %383 = vmatprep.subr.bf16.mxu0 0
        %384 = vmatpush1.bf16.msra.mxu0 0
        %385 = vmatprep.subr.bf16.mxu0 0
        %386 = vmatpush1.bf16.msra.mxu0 0
        %387 = vmatprep.subr.bf16.mxu0 0
        %388 = vmatpush1.bf16.msra.mxu0 0
        %389 = vmatprep.mubr.bf16.mxu0 0
        %390 = vmatmul.mubr.bf16.gmra.mrb[0].mxu0 %v334
        %v391 = vpop.f32.mrb[0].mxu0
        %v392 = vadd.f32 0.0, %v391
        %v393 = vpop.f32.mrb[0].mxu0
        %v394 = vpop.f32.mrb[0].mxu0
        %v395 = vadd.f32 0.0, %v394
        %v396 = vpop.f32.mrb[0].mxu0
        %397 = vmatprep.mubr.bf16.mxu0 0
        %398 = vmatmul.mubr.bf16.gmra.mrb[0].mxu0 %v337
        %v399 = vpop.f32.mrb[0].mxu0
        %v400 = vadd.f32 0.0, %v399
        %v401 = vpop.f32.mrb[0].mxu0
        %v402 = vpop.f32.mrb[0].mxu0
        %v403 = vadd.f32 0.0, %v402
        %v404 = vpop.f32.mrb[0].mxu0
        %405 = vmatprep.mubr.bf16.mxu0 0
        %406 = vmatmul.mubr.bf16.gmra.mrb[0].mxu0 %v340
        %v407 = vpop.f32.mrb[0].mxu0
        %v408 = vadd.f32 0.0, %v407
        %v409 = vpop.f32.mrb[0].mxu0
        %v410 = vpop.f32.mrb[0].mxu0
        %v411 = vadd.f32 0.0, %v410
        %v412 = vpop.f32.mrb[0].mxu0
        %413 = vmatprep.mubr.bf16.mxu0 0
        %414 = vmatmul.mubr.bf16.gmra.mrb[0].mxu0 %v343
        %v415 = vpop.f32.mrb[0].mxu0
        %v416 = vadd.f32 0.0, %v415
        %v417 = vpop.f32.mrb[0].mxu0
        %v418 = vpop.f32.mrb[0].mxu0
        %v419 = vadd.f32 0.0, %v418
        %v420 = vpop.f32.mrb[0].mxu0
        %421 = vmatprep.mubr.bf16.mxu0 0
        %422 = vmatmul.mubr.bf16.gmra.mrb[0].mxu0 %v346
        %v423 = vpop.f32.mrb[0].mxu0
        %v424 = vadd.f32 0.0, %v423
        %v425 = vpop.f32.mrb[0].mxu0
        %v426 = vpop.f32.mrb[0].mxu0
        %v427 = vadd.f32 0.0, %v426
        %v428 = vpop.f32.mrb[0].mxu0
        %429 = vmatprep.mubr.bf16.mxu0 0
        %430 = vmatmul.mubr.bf16.gmra.mrb[0].mxu0 %v349
        %v431 = vpop.f32.mrb[0].mxu0
        %v432 = vadd.f32 0.0, %v431
        %v433 = vpop.f32.mrb[0].mxu0
        %v434 = vpop.f32.mrb[0].mxu0
        %v435 = vadd.f32 0.0, %v434
        %v436 = vpop.f32.mrb[0].mxu0
        %437 = vmatprep.mubr.bf16.mxu0 0
        %438 = vmatmul.mubr.bf16.gmra.mrb[0].mxu0 %v352
        %v439 = vpop.f32.mrb[0].mxu0
        %v440 = vadd.f32 0.0, %v439
        %v441 = vpop.f32.mrb[0].mxu0
        %v442 = vpop.f32.mrb[0].mxu0
        %v443 = vadd.f32 0.0, %v442
        %v444 = vpop.f32.mrb[0].mxu0
        %445 = vmatprep.mubr.bf16.mxu0 0
        %446 = vmatmul.mubr.bf16.gmra.mrb[0].mxu0 %v355
        %v447 = vpop.f32.mrb[0].mxu0
        %v448 = vadd.f32 0.0, %v447
        %v449 = vpop.f32.mrb[0].mxu0
        %v450 = vpop.f32.mrb[0].mxu0
        %v451 = vadd.f32 0.0, %v450
        %v452 = vpop.f32.mrb[0].mxu0
        %453 = vdwg.mxu0
        %v454 = vmax.f32 %v392, %v408
        %v455 = vmax.f32 %v395, %v411
        %v456 = vmax.f32 %v400, %v416
        %v457 = vmax.f32 %v403, %v419
        %v458 = vmax.f32 %v454, %v424
        %v459 = vmax.f32 %v455, %v427
        %v460 = vmax.f32 %v456, %v432
        %v461 = vmax.f32 %v457, %v435
        %v462 = vmax.f32 %v458, %v440
        %v463 = vmax.f32 %v459, %v443
        %v464 = vmax.f32 %v460, %v448
        %v465 = vmax.f32 %v461, %v451
        %v466 = vmax.f32 %v462, %v463
        %v467 = vmax.f32 %v464, %v465
        %v468 = vmax.f32 %v466, %v467
        %v469 = vrot.slane %v468, 4
        %v470 = vmax.f32 %v468, %v469
        %v471 = vrot.slane %v470, 2
        %v472 = vmax.f32 %v470, %v471
        %v473 = vrot.slane %v472, 1
        %v474 = vmax.f32 %v472, %v473
        %v475 = vsub.f32 %v392, %v474
        %v476 = vsub.f32 %v395, %v474
        %v477 = vsub.f32 %v400, %v474
        %v478 = vsub.f32 %v403, %v474
        %v479 = vsub.f32 %v408, %v474
        %v480 = vsub.f32 %v411, %v474
        %v481 = vsub.f32 %v416, %v474
        %v482 = vsub.f32 %v419, %v474
        %v483 = vsub.f32 %v424, %v474
        %v484 = vsub.f32 %v427, %v474
        %v485 = vsub.f32 %v432, %v474
        %v486 = vsub.f32 %v435, %v474
        %v487 = vsub.f32 %v440, %v474
        %v488 = vsub.f32 %v443, %v474
        %v489 = vsub.f32 %v448, %v474
        %v490 = vsub.f32 %v451, %v474
        %v491 = vmul.f32 %v475, 1.442695
        %v492 = vpow.pop %v491
        %v493 = vmul.f32 %v476, 1.442695
        %v494 = vpow.pop %v493
        %v495 = vmul.f32 %v477, 1.442695
        %v496 = vpow.pop %v495
        %v497 = vmul.f32 %v478, 1.442695
        %v498 = vpow.pop %v497
        %v499 = vmul.f32 %v479, 1.442695
        %v500 = vpow.pop %v499
        %v501 = vmul.f32 %v480, 1.442695
        %v502 = vpow.pop %v501
        %v503 = vmul.f32 %v481, 1.442695
        %v504 = vpow.pop %v503
        %v505 = vmul.f32 %v482, 1.442695
        %v506 = vpow.pop %v505
        %v507 = vmul.f32 %v483, 1.442695
        %v508 = vpow.pop %v507
        %v509 = vmul.f32 %v484, 1.442695
        %v510 = vpow.pop %v509
        %v511 = vmul.f32 %v485, 1.442695
        %v512 = vpow.pop %v511
        %v513 = vmul.f32 %v486, 1.442695
        %v514 = vpow.pop %v513
        %v515 = vmul.f32 %v487, 1.442695
        %v516 = vpow.pop %v515
        %v517 = vmul.f32 %v488, 1.442695
        %v518 = vpow.pop %v517
        %v519 = vmul.f32 %v489, 1.442695
        %v520 = vpow.pop %v519
        %v521 = vmul.f32 %v490, 1.442695
        %v522 = vpow.pop %v521
        %v523 = vadd.f32 %v492, %v494
        %v524 = vadd.f32 %v523, %v496
        %v525 = vadd.f32 %v524, %v498
        %v526 = vadd.f32 %v525, %v500
        %v527 = vadd.f32 %v526, %v502
        %v528 = vadd.f32 %v527, %v504
        %v529 = vadd.f32 %v528, %v506
        %v530 = vadd.f32 %v529, %v508
        %v531 = vadd.f32 %v530, %v510
        %v532 = vadd.f32 %v531, %v512
        %v533 = vadd.f32 %v532, %v514
        %v534 = vadd.f32 %v533, %v516
        %v535 = vadd.f32 %v534, %v518
        %v536 = vadd.f32 %v535, %v520
        %v537 = vadd.f32 %v536, %v522
        %v538 = vrot.slane %v537, 4
        %v539 = vadd.f32 %v537, %v538
        %v540 = vrot.slane %v539, 2
        %v541 = vadd.f32 %v539, %v540
        %v542 = vrot.slane %v541, 1
        %v543 = vadd.f32 %v541, %v542
        %v544 = vrcp.pop %v543
        %v545 = vld [vmem:[#allocation7] sm:$0xf]
        %v546 = vld [vmem:[#allocation7 + $0x4] sm:$0xf]
        %v547 = vld [vmem:[#allocation7 + $0x8] sm:$0xf]
        %v548 = vld [vmem:[#allocation7 + $0xc] sm:$0xf]
        %v549 = vld [vmem:[#allocation7 + $0x10] sm:$0xf]
        %v550 = vld [vmem:[#allocation7 + $0x14] sm:$0xf]
        %v551 = vld [vmem:[#allocation7 + $0x18] sm:$0xf]
        %v552 = vld [vmem:[#allocation7 + $0x1c] sm:$0xf]
        %v553 = vld [vmem:[#allocation7 + $0x20] sm:$0xf]
        %v554 = vld [vmem:[#allocation7 + $0x24] sm:$0xf]
        %v555 = vld [vmem:[#allocation7 + $0x28] sm:$0xf]
        %v556 = vld [vmem:[#allocation7 + $0x2c] sm:$0xf]
        %v557 = vld [vmem:[#allocation7 + $0x30] sm:$0x3]
        %v558 = vpack.c.bf16 %v494, %v492
        %v559 = vpack.c.bf16 %v498, %v496
        %v560 = vpack.c.bf16 %v502, %v500
        %v561 = vpack.c.bf16 %v506, %v504
        %v562 = vpack.c.bf16 %v510, %v508
        %v563 = vpack.c.bf16 %v514, %v512
        %v564 = vpack.c.bf16 %v518, %v516
        %v565 = vpack.c.bf16 %v522, %v520
        %v579 = vunpack.c.l.b16 %v545
        %v580 = vunpack.c.l.b16 %v546
        %v581 = vunpack.c.l.b16 %v547
        %v582 = vunpack.c.l.b16 %v548
        %v583 = vunpack.c.l.b16 %v549
        %v584 = vunpack.c.l.b16 %v550
        %v585 = vunpack.c.l.b16 %v551
        %v586 = vunpack.c.l.b16 %v552
        %v587 = vunpack.c.l.b16 %v553
        %v588 = vunpack.c.l.b16 %v554
        %v589 = vunpack.c.l.b16 %v555
        %v590 = vunpack.c.l.b16 %v556
        %v591 = vunpack.c.l.b16 %v557
        %v592 = vpack.c.b16 %v580, %v579
        %v593 = vpack.c.b16 %v582, %v581
        %v594 = vpack.c.b16 %v584, %v583
        %v595 = vpack.c.b16 %v586, %v585
        %v596 = vpack.c.b16 %v588, %v587
        %v597 = vpack.c.b16 %v590, %v589
        %v598 = vpack.c.b16 %v591, %v591
        %606 = vmatprep.subr.bf16.mxu0 0
        %607 = vmatpush1.bf16.msra.mxu0 %v558
        %608 = vmatprep.subr.bf16.mxu0 0
        %609 = vmatpush1.bf16.msra.mxu0 %v559
        %610 = vmatprep.subr.bf16.mxu0 0
        %611 = vmatpush1.bf16.msra.mxu0 %v560
        %612 = vmatprep.subr.bf16.mxu0 0
        %613 = vmatpush1.bf16.msra.mxu0 %v561
        %614 = vmatprep.subr.bf16.mxu0 0
        %615 = vmatpush1.bf16.msra.mxu0 %v562
        %616 = vmatprep.subr.bf16.mxu0 0
        %617 = vmatpush1.bf16.msra.mxu0 %v563
        %618 = vmatprep.subr.bf16.mxu0 0
        %619 = vmatpush1.bf16.msra.mxu0 %v564
        %620 = vmatprep.subr.bf16.mxu0 0
        %621 = vmatpush1.bf16.msra.mxu0 %v565
        %622 = vmatprep.subr.bf16.mxu0 0
        %623 = vmatpush1.bf16.msra.mxu0 0
        %624 = vmatprep.subr.bf16.mxu0 0
        %625 = vmatpush1.bf16.msra.mxu0 0
        %626 = vmatprep.subr.bf16.mxu0 0
        %627 = vmatpush1.bf16.msra.mxu0 0
        %628 = vmatprep.subr.bf16.mxu0 0
        %629 = vmatpush1.bf16.msra.mxu0 0
        %630 = vmatprep.subr.bf16.mxu0 0
        %631 = vmatpush1.bf16.msra.mxu0 0
        %632 = vmatprep.subr.bf16.mxu0 0
        %633 = vmatpush1.bf16.msra.mxu0 0
        %634 = vmatprep.subr.bf16.mxu0 0
        %635 = vmatpush1.bf16.msra.mxu0 0
        %636 = vmatprep.subr.bf16.mxu0 0
        %637 = vmatpush1.bf16.msra.mxu0 0
        %638 = vmatprep.mubr.bf16.mxu0 0
        %639 = vmatmul.mubr.bf16.gmra.mrb[0].mxu0 %v592
        %v640 = vpop.f32.mrb[0].mxu0
        %v641 = vadd.f32 0.0, %v640
        %v642 = vpop.f32.mrb[0].mxu0
        %v643 = vpop.f32.mrb[0].mxu0
        %v644 = vadd.f32 0.0, %v643
        %v645 = vpop.f32.mrb[0].mxu0
        %646 = vmatprep.mubr.bf16.mxu0 0
        %647 = vmatmul.mubr.bf16.gmra.mrb[0].mxu0 %v593
        %v648 = vpop.f32.mrb[0].mxu0
        %v649 = vadd.f32 0.0, %v648
        %v650 = vpop.f32.mrb[0].mxu0
        %v651 = vpop.f32.mrb[0].mxu0
        %v652 = vadd.f32 0.0, %v651
        %v653 = vpop.f32.mrb[0].mxu0
        %654 = vmatprep.mubr.bf16.mxu0 0
        %655 = vmatmul.mubr.bf16.gmra.mrb[0].mxu0 %v594
        %v656 = vpop.f32.mrb[0].mxu0
        %v657 = vadd.f32 0.0, %v656
        %v658 = vpop.f32.mrb[0].mxu0
        %v659 = vpop.f32.mrb[0].mxu0
        %v660 = vadd.f32 0.0, %v659
        %v661 = vpop.f32.mrb[0].mxu0
        %662 = vmatprep.mubr.bf16.mxu0 0
        %663 = vmatmul.mubr.bf16.gmra.mrb[0].mxu0 %v595
        %v664 = vpop.f32.mrb[0].mxu0
        %v665 = vadd.f32 0.0, %v664
        %v666 = vpop.f32.mrb[0].mxu0
        %v667 = vpop.f32.mrb[0].mxu0
        %v668 = vadd.f32 0.0, %v667
        %v669 = vpop.f32.mrb[0].mxu0
        %670 = vmatprep.mubr.bf16.mxu0 0
        %671 = vmatmul.mubr.bf16.gmra.mrb[0].mxu0 %v596
        %v672 = vpop.f32.mrb[0].mxu0
        %v673 = vadd.f32 0.0, %v672
        %v674 = vpop.f32.mrb[0].mxu0
        %v675 = vpop.f32.mrb[0].mxu0
        %v676 = vadd.f32 0.0, %v675
        %v677 = vpop.f32.mrb[0].mxu0
        %678 = vmatprep.mubr.bf16.mxu0 0
        %679 = vmatmul.mubr.bf16.gmra.mrb[0].mxu0 %v597
        %v680 = vpop.f32.mrb[0].mxu0
        %v681 = vadd.f32 0.0, %v680
        %v682 = vpop.f32.mrb[0].mxu0
        %v683 = vpop.f32.mrb[0].mxu0
        %v684 = vadd.f32 0.0, %v683
        %v685 = vpop.f32.mrb[0].mxu0
        %686 = vmatprep.mubr.bf16.mxu0 0
        %687 = vmatmul.mubr.bf16.gmra.mrb[0].mxu0 %v598
        %v688 = vpop.f32.mrb[0].mxu0
        %v689 = vadd.f32 0.0, %v688
        %v690 = vpop.f32.mrb[0].mxu0
        %v691 = vpop.f32.mrb[0].mxu0
        %v692 = vpop.f32.mrb[0].mxu0
        %693 = vdwg.mxu0
        %v694 = vmul.f32 %v641, %v544
        %v695 = vmul.f32 %v644, %v544
        %v696 = vmul.f32 %v649, %v544
        %v697 = vmul.f32 %v652, %v544
        %v698 = vmul.f32 %v657, %v544
        %v699 = vmul.f32 %v660, %v544
        %v700 = vmul.f32 %v665, %v544
        %v701 = vmul.f32 %v668, %v544
        %v702 = vmul.f32 %v673, %v544
        %v703 = vmul.f32 %v676, %v544
        %v704 = vmul.f32 %v681, %v544
        %v705 = vmul.f32 %v684, %v544
        %v706 = vmul.f32 %v689, %v544
        %v709 = vunpack.c.l.s4 1966171168
        %v710 = vunpack.c.0.s8 %v709
        %v711 = vlaneseq
        %v712 = vshrl.u32 %v711, 7
        %v713 = vsub.s32 %v710, %v712
        %v714 = vrot.slane %v706, %v713
        %v715 = vcombine.high %v714, %v714
        %v717 = vunpack.c.l.s4 1966171168
        %v718 = vunpack.c.0.s8 %v717
        %v719 = vlaneseq
        %v720 = vshrl.u32 %v719, 7
        %v721 = vsub.s32 %v718, %v720
        %v722 = vrot.slane %v714, %v721
        %v724 = vunpack.c.l.s4 1966171168
        %v725 = vunpack.c.0.s8 %v724
        %v726 = vlaneseq
        %v727 = vshrl.u32 %v726, 7
        %v728 = vsub.s32 %v725, %v727
        %v729 = vrot.slane %v715, %v728
        %v730 = vcombine.high %v722, %v722
        %731 = vst [vmem:[%s282] sm:$0xff] %v694
        %732 = vst [vmem:[%s282 + $0x8] sm:$0xff] %v695
        %733 = vst [vmem:[%s282 + $0x10] sm:$0xff] %v696
        %734 = vst [vmem:[%s282 + $0x18] sm:$0xff] %v697
        %735 = vst [vmem:[%s282 + $0x40] sm:$0xff] %v698
        %736 = vst [vmem:[%s282 + $0x48] sm:$0xff] %v699
        %737 = vst [vmem:[%s282 + $0x50] sm:$0xff] %v700
        %738 = vst [vmem:[%s282 + $0x58] sm:$0xff] %v701
        %739 = vst [vmem:[%s282 + $0x80] sm:$0xff] %v702
        %740 = vst [vmem:[%s282 + $0x88] sm:$0xff] %v703
        %741 = vst [vmem:[%s282 + $0x90] sm:$0xff] %v704
        %742 = vst [vmem:[%s282 + $0x98] sm:$0xff] %v705
        %v743 = vld [vmem:[%s253] sm:$0xff]
        %v744 = vld [vmem:[%s253 + $0x8] sm:$0xff]
        %v745 = vld [vmem:[%s253 + $0x10] sm:$0xff]
        %v746 = vld [vmem:[%s253 + $0x18] sm:$0xff]
        %v747 = vld [vmem:[%s253 + $0x20] sm:$0xff]
        %v748 = vld [vmem:[%s253 + $0x28] sm:$0xff]
        %v749 = vld [vmem:[%s253 + $0x30] sm:$0xff]
        %v750 = vld [vmem:[%s253 + $0x38] sm:$0xff]
        %v751 = vld [vmem:[%s253 + $0x40] sm:$0xff]
        %v752 = vld [vmem:[%s253 + $0x48] sm:$0xff]
        %v753 = vld [vmem:[%s253 + $0x50] sm:$0xff]
        %v754 = vld [vmem:[%s253 + $0x58] sm:$0xff]
        %v755 = vlaneseq
        %v756 = vshrl.u32 %v755, 7
        %v757 = vsub.s32 0, %v756
        %v758 = vrot.slane %v722, %v757
        %v759 = vlaneseq
        %v760 = vshrl.u32 %v759, 7
        %v761 = vsub.s32 0, %v760
        %v762 = vrot.slane %v729, %v761
        %v763 = vlaneseq
        %v764 = vshrl.u32 %v763, 7
        %v765 = vsub.s32 0, %v764
        %v766 = vrot.slane %v730, %v765
        %v770 = vmul.f32 %v743, %v758
        %v771 = vmul.f32 %v744, %v758
        %v772 = vmul.f32 %v745, %v758
        %v773 = vmul.f32 %v746, %v758
        %v774 = vmul.f32 %v747, %v762
        %v775 = vmul.f32 %v748, %v762
        %v776 = vmul.f32 %v749, %v762
        %v777 = vmul.f32 %v750, %v762
        %v778 = vmul.f32 %v751, %v766
        %v779 = vmul.f32 %v752, %v766
        %v780 = vmul.f32 %v753, %v766
        %v781 = vmul.f32 %v754, %v766
        %782 = vst [vmem:[%s282 + $0x20] sm:$0xff] %v770
        %783 = vst [vmem:[%s282 + $0x28] sm:$0xff] %v771
        %784 = vst [vmem:[%s282 + $0x30] sm:$0xff] %v772
        %785 = vst [vmem:[%s282 + $0x38] sm:$0xff] %v773
        %786 = vst [vmem:[%s282 + $0x60] sm:$0xff] %v774
        %787 = vst [vmem:[%s282 + $0x68] sm:$0xff] %v775
        %788 = vst [vmem:[%s282 + $0x70] sm:$0xff] %v776
        %789 = vst [vmem:[%s282 + $0x78] sm:$0xff] %v777
        %790 = vst [vmem:[%s282 + $0xa0] sm:$0xff] %v778
        %791 = vst [vmem:[%s282 + $0xa8] sm:$0xff] %v779
        %792 = vst [vmem:[%s282 + $0xb0] sm:$0xff] %v780
        %793 = vst [vmem:[%s282 + $0xb8] sm:$0xff] %v781
        %s794 = sand.u32 %s127, 1
        %s795 = scalar_lea.sflag [#allocation4], %s794
        %s796 = sand.u32 %s127, 1
        %s797 = smul.addr %s796, 192
        %s798 = scalar_lea.vmem [#allocation10], %s797
        // Predicated region
        $region53: #{tpu_custom_call.1} parent=35 // pred_check
          %p799 = pneg %p137
        $region54: #{tpu_custom_call.1} parent=35 // pred_check_branch
          %801 = sbr.rel (%p799) target = $region56
        $region55: #{tpu_custom_call.1} parent=35 // pred_region
          %s803 = ssub.s32 3072, 3072
          %804 = vsyncadd %s795, %s803
          %s805 = smul.addr %s25, 128
          %s806 = scalar_lea.hbm %s4, %s805
          %s807 = sshll.u32 %s798, 4
          %s808 = int_to_ptr.vmem [resolvable:$true] %s807
          %813 = dma.vmem_to_hbm [thread:$0]  %s808, 3072, %s806, %s795, 128, 256, 8
        $region56: #{tpu_custom_call.1} parent=35 // pred_fallthru
          _
      $region36: #{tpu_custom_call.1} parent=5 // pred_fallthru
        _
      %p814 = scmp.le.s32.totalorder 2, %s20
      // Predicated region
      $region57: #{tpu_custom_call.1} parent=5 // pred_check
        %p815 = pneg %p814
      $region58: #{tpu_custom_call.1} parent=5 // pred_check_branch
        %817 = sbr.rel (%p815) target = $region60
      $region59: #{tpu_custom_call.1} parent=5 // pred_region
        %s818 = ssub.s32 %s20, 2
        // Predicated region
        $region61: #{tpu_custom_call.1} parent=59 // pred_check
          %p819 = pneg %p143
        $region62: #{tpu_custom_call.1} parent=59 // pred_check_branch
          %821 = sbr.rel (%p819) target = $region64
        $region63: #{tpu_custom_call.1} parent=59 // pred_region
          %s822 = sand.u32 %s128, 1
          %s823 = scalar_lea.sflag [#allocation4], %s822
          %s824 = sand.u32 %s128, 1
          %s825 = smul.addr %s824, 192
          %s826 = scalar_lea.vmem [#allocation10], %s825
          %827 = dma.done %s823, 3072
        $region64: #{tpu_custom_call.1} parent=59 // pred_fallthru
          _
      $region60: #{tpu_custom_call.1} parent=5 // pred_fallthru
        _
    $region6: #{tpu_custom_call.1} parent=1 // loop_footer
      %s24 = sadd.s32 1, %s20
    $region7: #{tpu_custom_call.1} parent=1 // loop_footer_branch
      %19 = sbr.rel target = $region3
    $region8: #{tpu_custom_call.1} parent=1 // loop_exit
      _
    %828 = vsyncpa [#allocation3], 1
    %s829 = scalar_lea.sflag [#allocation3], 1
    %830 = vsyncpa %s829, 1
    %831 = vsyncpa [#allocation6], 1
    %s832 = scalar_lea.sflag [#allocation6], 1
    %833 = vsyncpa %s832, 1
    %834 = vsyncpa [#allocation9], 1
    %s835 = scalar_lea.sflag [#allocation9], 1
    %836 = vsyncpa %s835, 1
    %837 = vsyncpa [#allocation4], 1
    %s838 = scalar_lea.sflag [#allocation4], 1
    %839 = vsyncpa %s838, 1

// kernel: tpu_custom_call.1
$region0: #{tpu_custom_call.1}
  #allocation0 [shape = 'u32[]', space=smem, size = 0x4, offset = 0x4, fixed_abs, tag = 'smem constant byte address 0x4 - core index']
  #allocation1 [shape = 'u32[144,128]{1,0:T(1,128)}', space=vmem, size = 0x12000, scoped, tag = 'internal scratch']
  %s0 = inlined_call_operand.vmem [shape: bf16[128,32], index: 0, kind: input, shape index: {}]
  %s1 = inlined_call_operand.vmem [shape: bf16[32,256], index: 1, kind: input, shape index: {}]
  %s2 = inlined_call_operand.vmem [shape: bf16[99,128], index: 2, kind: input, shape index: {}]
  %s3 = inlined_call_operand.hbm [shape: f32[3,32,256], index: 3, kind: input, shape index: {}]
  %s4 = inlined_call_operand.hbm [shape: f32[3,64,256], index: 4, kind: output, shape index: {}]
  %s5 = sld [smem:[#allocation0]]
  $region94: #{tpu_custom_call.1} parent=0
    _
  %s7 = ssub.s32 1, %s5
  %s8 = scalar_select 0, %s7, %s5
  $region1: #{tpu_custom_call.1} parent=0
    #allocation2 [shape = 'u8[16384]{0}', space=vmem, size = 0x4000, scoped, tag = 'input window, operand 1']
    #allocation3 [shape = 'u8[98304]{0}', space=vmem, size = 0x18000, scoped, tag = 'input window, operand 3']
    #allocation4 [shape = 's32[2]{0}', space=sflag, size = 0x8, scoped, tag = 'scoped memory for tpu_custom_call.1']
    #allocation5 [shape = 's32[2]{0}', space=sflag, size = 0x8, scoped, tag = 'scoped memory for tpu_custom_call.1']
    #allocation6 [shape = 'u8[196608]{0}', space=vmem, size = 0x30000, scoped, tag = 'output window, operand 0']
    %9 = vsyncpa [#allocation4], 0
    %s10 = scalar_lea.sflag [#allocation4], 1
    %11 = vsyncpa %s10, 0
    %12 = vsyncpa [#allocation5], 0
    %s13 = scalar_lea.sflag [#allocation5], 1
    %14 = vsyncpa %s13, 0
    loop: start=0, step=1, limit=4
    $region2: #{tpu_custom_call.1} parent=1 // loop_pre_header
      _
    $region3: #{tpu_custom_call.1} parent=1 // loop_header
      %s16 = sphi 0, %s20
      %p17 = scmp.ge.s32.totalorder %s16, 4
      %s24 = sphi 0, %s24
      %s26 = sphi 0, %s24
      %s27 = sphi 0, %s26
      %s41 = sphi 0, %s27
      %s47 = sphi 0, %s49
      %s50 = sphi 0, %s47
      %s51 = sphi 0, %s50
      %s67 = sphi 0, %s51
      %s71 = sphi 0, %s71
      %s73 = sphi 0, %s71
      %s74 = sphi 0, %s73
      %s88 = sphi 0, %s74
      %s94 = sphi 0, %s96
      %s97 = sphi 0, %s94
      %s98 = sphi 0, %s97
      %s114 = sphi 0, %s98
      %s120 = sphi 0, %s122
      %s123 = sphi 0, %s120
      %s124 = sphi 0, %s123
      %s140 = sphi 0, %s124
    $region4: #{tpu_custom_call.1} parent=1 // loop_header_branch
      %19 = sbr.rel (%p17) target = $region8
    $region5: #{tpu_custom_call.1} parent=1 // loop_body
      %s21 = ssub.s32 %s16, 1
      %s22 = ssub.s32 %s16, 2
      %s23 = sadd.s32 %s16, 1
      %s25 = sadd.s32 %s24, 1
      %p28 = scmp.eq.s32.totalorder %s16, 1
      %p29 = scmp.ne.s32.totalorder %s24, %s26
      %p30 = scmp.eq.s32.totalorder %s16, 0
      %p31 = por %p29, %p30
      %p32 = scmp.ne.s32.totalorder %s24, %s26
      %p33 = scmp.eq.s32.totalorder %s21, 1
      %p34 = por %p32, %p33
      %p35 = scmp.ne.s32.totalorder %s26, %s27
      %p36 = scmp.eq.s32.totalorder %s21, 0
      %p37 = por %p35, %p36
      %p38 = scmp.ne.s32.totalorder %s26, %s27
      %p39 = scmp.eq.s32.totalorder %s22, 1
      %p40 = por %p38, %p39
      %p42 = scmp.ne.s32.totalorder %s27, %s41
      %p43 = scmp.eq.s32.totalorder %s22, 0
      %p44 = por %p42, %p43
      %s45 = ssub.s32 %s16, %s23
      %p46 = scmp.eq.s32.totalorder %s45, 0
      %s48 = sadd.s32 %s47, 1
      %s49 = scalar_select %p46, %s47, %s48
      %p52 = pneg %p46
      %p53 = scmp.eq.s32.totalorder %s16, 1
      %p54 = por %p52, %p53
      %p55 = scmp.ne.s32.totalorder %s47, %s50
      %p56 = scmp.eq.s32.totalorder %s16, 0
      %p57 = por %p55, %p56
      %p58 = scmp.ne.s32.totalorder %s47, %s50
      %p59 = scmp.eq.s32.totalorder %s21, 1
      %p60 = por %p58, %p59
      %p61 = scmp.ne.s32.totalorder %s50, %s51
      %p62 = scmp.eq.s32.totalorder %s21, 0
      %p63 = por %p61, %p62
      %p64 = scmp.ne.s32.totalorder %s50, %s51
      %p65 = scmp.eq.s32.totalorder %s22, 1
      %p66 = por %p64, %p65
      %p68 = scmp.ne.s32.totalorder %s51, %s67
      %p69 = scmp.eq.s32.totalorder %s22, 0
      %p70 = por %p68, %p69
      %s72 = sadd.s32 %s71, 1
      %p75 = scmp.eq.s32.totalorder %s16, 1
      %p76 = scmp.ne.s32.totalorder %s71, %s73
      %p77 = scmp.eq.s32.totalorder %s16, 0
      %p78 = por %p76, %p77
      %p79 = scmp.ne.s32.totalorder %s71, %s73
      %p80 = scmp.eq.s32.totalorder %s21, 1
      %p81 = por %p79, %p80
      %p82 = scmp.ne.s32.totalorder %s73, %s74
      %p83 = scmp.eq.s32.totalorder %s21, 0
      %p84 = por %p82, %p83
      %p85 = scmp.ne.s32.totalorder %s73, %s74
      %p86 = scmp.eq.s32.totalorder %s22, 1
      %p87 = por %p85, %p86
      %p89 = scmp.ne.s32.totalorder %s74, %s88
      %p90 = scmp.eq.s32.totalorder %s22, 0
      %p91 = por %p89, %p90
      %s92 = ssub.s32 %s16, %s23
      %p93 = scmp.eq.s32.totalorder %s92, 0
      %s95 = sadd.s32 %s94, 1
      %s96 = scalar_select %p93, %s94, %s95
      %p99 = pneg %p93
      %p100 = scmp.eq.s32.totalorder %s16, 1
      %p101 = por %p99, %p100
      %p102 = scmp.ne.s32.totalorder %s94, %s97
      %p103 = scmp.eq.s32.totalorder %s16, 0
      %p104 = por %p102, %p103
      %p105 = scmp.ne.s32.totalorder %s94, %s97
      %p106 = scmp.eq.s32.totalorder %s21, 1
      %p107 = por %p105, %p106
      %p108 = scmp.ne.s32.totalorder %s97, %s98
      %p109 = scmp.eq.s32.totalorder %s21, 0
      %p110 = por %p108, %p109
      %p111 = scmp.ne.s32.totalorder %s97, %s98
      %p112 = scmp.eq.s32.totalorder %s22, 1
      %p113 = por %p111, %p112
      %p115 = scmp.ne.s32.totalorder %s98, %s114
      %p116 = scmp.eq.s32.totalorder %s22, 0
      %p117 = por %p115, %p116
      %s118 = ssub.s32 %s16, %s23
      %p119 = scmp.eq.s32.totalorder %s118, 0
      %s121 = sadd.s32 %s120, 1
      %s122 = scalar_select %p119, %s120, %s121
      %p125 = pneg %p119
      %p126 = scmp.eq.s32.totalorder %s16, 1
      %p127 = por %p125, %p126
      %p128 = scmp.ne.s32.totalorder %s120, %s123
      %p129 = scmp.eq.s32.totalorder %s16, 0
      %p130 = por %p128, %p129
      %p131 = scmp.ne.s32.totalorder %s120, %s123
      %p132 = scmp.eq.s32.totalorder %s21, 1
      %p133 = por %p131, %p132
      %p134 = scmp.ne.s32.totalorder %s123, %s124
      %p135 = scmp.eq.s32.totalorder %s21, 0
      %p136 = por %p134, %p135
      %p137 = scmp.ne.s32.totalorder %s123, %s124
      %p138 = scmp.eq.s32.totalorder %s22, 1
      %p139 = por %p137, %p138
      %p141 = scmp.ne.s32.totalorder %s124, %s140
      %p142 = scmp.eq.s32.totalorder %s22, 0
      %p143 = por %p141, %p142
      %p144 = scmp.le.s32.totalorder 1, %s16
      %p145 = scmp.lt.s32.totalorder %s16, 3
      %p146 = pnand %p144, %p145
      %p147 = pneg %p146
      // Predicated region
      $region9: #{tpu_custom_call.1} parent=5 // pred_check
        _
      $region10: #{tpu_custom_call.1} parent=5 // pred_check_branch
        %149 = sbr.rel (%p146) target = $region12
      $region11: #{tpu_custom_call.1} parent=5 // pred_region
        %s150 = ssub.s32 %s16, 1
        // Predicated region
        $region13: #{tpu_custom_call.1} parent=11 // pred_check
          %p151 = pneg %p37
        $region14: #{tpu_custom_call.1} parent=11 // pred_check_branch
          %153 = sbr.rel (%p151) target = $region16
        $region15: #{tpu_custom_call.1} parent=11 // pred_region
          _
        $region16: #{tpu_custom_call.1} parent=11 // pred_fallthru
          _
        // Predicated region
        $region17: #{tpu_custom_call.1} parent=11 // pred_check
          %p154 = pneg %p84
        $region18: #{tpu_custom_call.1} parent=11 // pred_check_branch
          %156 = sbr.rel (%p154) target = $region20
        $region19: #{tpu_custom_call.1} parent=11 // pred_region
          _
        $region20: #{tpu_custom_call.1} parent=11 // pred_fallthru
          _
      $region12: #{tpu_custom_call.1} parent=5 // pred_fallthru
        _
      %p157 = scmp.lt.s32.totalorder %s16, 2
      // Predicated region
      $region21: #{tpu_custom_call.1} parent=5 // pred_check
        %p158 = pneg %p157
      $region22: #{tpu_custom_call.1} parent=5 // pred_check_branch
        %160 = sbr.rel (%p158) target = $region24
      $region23: #{tpu_custom_call.1} parent=5 // pred_region
        // Predicated region
        $region25: #{tpu_custom_call.1} parent=23 // pred_check
          %p161 = pneg %p57
        $region26: #{tpu_custom_call.1} parent=23 // pred_check_branch
          %163 = sbr.rel (%p161) target = $region28
        $region27: #{tpu_custom_call.1} parent=23 // pred_region
          %s164 = sand.u32 %s47, 1
          %s165 = sand.u32 %s47, 1
          %s166 = smul.addr %s165, 16
          %s167 = scalar_lea.vmem [#allocation2], %s166
          %s168 = smul.addr %s16, 4
          %s169 = scalar_lea.vmem %s1, %s168
          // Predicated region
          $region29: #{tpu_custom_call.1} parent=27 // pred_check
            _
          $region30: #{tpu_custom_call.1} parent=27 // pred_check_branch
            %171 = sbr.rel (0) target = $region32
          $region31: #{tpu_custom_call.1} parent=27 // pred_region
            // Predicated region
            $region33: #{tpu_custom_call.1} parent=31 // pred_check
              _
            $region34: #{tpu_custom_call.1} parent=31 // pred_check_branch
              %173 = sbr.rel target = $region36
            $region35: #{tpu_custom_call.1} parent=31 // pred_region
              // Predicated region
              $region48: #{tpu_custom_call.1} parent=35 // pred_check
                _
              $region49: #{tpu_custom_call.1} parent=35 // pred_check_branch
                %194 = sbr.rel (0) target = $region51
              $region50: #{tpu_custom_call.1} parent=35 // pred_region
                loop: start=0, step=1, limit=1
                $region52: #{tpu_custom_call.1} parent=50 // loop_pre_header
                  _
                $region53: #{tpu_custom_call.1} parent=50 // loop_header
                  %s196 = sphi 0, %s200
                  %p197 = scmp.ge.s32.totalorder %s196, 1
                  %s201 = sphi %s169, %s169
                  %s202 = sphi %s167, %s167
                $region54: #{tpu_custom_call.1} parent=50 // loop_header_branch
                  %199 = sbr.rel (%p197) target = $region58
                $region55: #{tpu_custom_call.1} parent=50 // loop_body
                  _
                $region56: #{tpu_custom_call.1} parent=50 // loop_footer
                  %s200 = sadd.s32 1, %s196
                $region57: #{tpu_custom_call.1} parent=50 // loop_footer_branch
                  %195 = sbr.rel target = $region53
                $region58: #{tpu_custom_call.1} parent=50 // loop_exit
                  _
                loop: start=0, step=1, limit=1
                $region59: #{tpu_custom_call.1} parent=50 // loop_pre_header
                  _
                $region60: #{tpu_custom_call.1} parent=50 // loop_header
                  %s205 = sphi 0, %s209
                  %p206 = scmp.ge.s32.totalorder %s205, 1
                  %s210 = sphi %s169, %s169
                  %s211 = sphi %s167, %s167
                $region61: #{tpu_custom_call.1} parent=50 // loop_header_branch
                  %208 = sbr.rel (%p206) target = $region65
                $region62: #{tpu_custom_call.1} parent=50 // loop_body
                  %v212 = vld [vmem:[%s210] sm:$0xf]
                  %213 = vst [vmem:[%s211] sm:$0xf] %v212
                  %v214 = vld [vmem:[%s210 + $0x8] sm:$0xf]
                  %215 = vst [vmem:[%s211 + $0x4] sm:$0xf] %v214
                  %v216 = vld [vmem:[%s210 + $0x10] sm:$0xf]
                  %217 = vst [vmem:[%s211 + $0x8] sm:$0xf] %v216
                  %v218 = vld [vmem:[%s210 + $0x18] sm:$0xf]
                  %219 = vst [vmem:[%s211 + $0xc] sm:$0xf] %v218
                $region63: #{tpu_custom_call.1} parent=50 // loop_footer
                  %s209 = sadd.s32 1, %s205
                $region64: #{tpu_custom_call.1} parent=50 // loop_footer_branch
                  %204 = sbr.rel target = $region60
                $region65: #{tpu_custom_call.1} parent=50 // loop_exit
                  _
              $region51: #{tpu_custom_call.1} parent=35 // pred_fallthru
                _
            $region36: #{tpu_custom_call.1} parent=31 // pred_fallthru
              _
            // Predicated region
            $region37: #{tpu_custom_call.1} parent=31 // pred_check
              _
            $region38: #{tpu_custom_call.1} parent=31 // pred_check_branch
              %175 = sbr.rel (0) target = $region40
            $region39: #{tpu_custom_call.1} parent=31 // pred_region
              loop: start=0, step=1, limit=1
              $region41: #{tpu_custom_call.1} parent=39 // loop_pre_header
                _
              $region42: #{tpu_custom_call.1} parent=39 // loop_header
                %s178 = sphi 0, %s182
                %p179 = scmp.ge.s32.totalorder %s178, 1
                %s183 = sphi %s169, %s169
                %s184 = sphi %s167, %s167
              $region43: #{tpu_custom_call.1} parent=39 // loop_header_branch
                %181 = sbr.rel (%p179) target = $region47
              $region44: #{tpu_custom_call.1} parent=39 // loop_body
                %v185 = vld [vmem:[%s183] sm:$0xf]
                %186 = vst [vmem:[%s184] sm:$0xf] %v185
                %v187 = vld [vmem:[%s183 + $0x8] sm:$0xf]
                %188 = vst [vmem:[%s184 + $0x4] sm:$0xf] %v187
                %v189 = vld [vmem:[%s183 + $0x10] sm:$0xf]
                %190 = vst [vmem:[%s184 + $0x8] sm:$0xf] %v189
                %v191 = vld [vmem:[%s183 + $0x18] sm:$0xf]
                %192 = vst [vmem:[%s184 + $0xc] sm:$0xf] %v191
              $region45: #{tpu_custom_call.1} parent=39 // loop_footer
                %s182 = sadd.s32 1, %s178
              $region46: #{tpu_custom_call.1} parent=39 // loop_footer_branch
                %177 = sbr.rel target = $region42
              $region47: #{tpu_custom_call.1} parent=39 // loop_exit
                _
            $region40: #{tpu_custom_call.1} parent=31 // pred_fallthru
              _
          $region32: #{tpu_custom_call.1} parent=27 // pred_fallthru
            _
          %220 = vnop
        $region28: #{tpu_custom_call.1} parent=23 // pred_fallthru
          _
        // Predicated region
        $region66: #{tpu_custom_call.1} parent=23 // pred_check
          %p221 = pneg %p104
        $region67: #{tpu_custom_call.1} parent=23 // pred_check_branch
          %223 = sbr.rel (%p221) target = $region69
        $region68: #{tpu_custom_call.1} parent=23 // pred_region
          %s224 = sand.u32 %s94, 1
          %s225 = scalar_lea.sflag [#allocation4], %s224
          %s226 = sand.u32 %s94, 1
          %s227 = smul.addr %s226, 96
          %s228 = scalar_lea.vmem [#allocation3], %s227
          %s230 = ssub.s32 1536, 1536
          %231 = vsyncadd %s225, %s230
          %s232 = smul.addr %s16, 128
          %s233 = scalar_lea.hbm %s3, %s232
          %s234 = sshll.u32 %s228, 4
          %s235 = int_to_ptr.vmem [resolvable:$true] %s234
          %240 = dma.hbm_to_vmem [thread:$0]  %s233, 1536, %s235, %s225, 256, 128, 8
        $region69: #{tpu_custom_call.1} parent=23 // pred_fallthru
          _
      $region24: #{tpu_custom_call.1} parent=5 // pred_fallthru
        _
      %p241 = scmp.le.s32.totalorder 1, %s16
      %p242 = scmp.lt.s32.totalorder %s16, 3
      %p243 = pnand %p241, %p242
      %p244 = pneg %p243
      // Predicated region
      $region70: #{tpu_custom_call.1} parent=5 // pred_check
        _
      $region71: #{tpu_custom_call.1} parent=5 // pred_check_branch
        %246 = sbr.rel (%p243) target = $region73
      $region72: #{tpu_custom_call.1} parent=5 // pred_region
        %s247 = ssub.s32 %s16, 1
        %s248 = sand.u32 %s50, 1
        %s249 = sand.u32 %s50, 1
        %s250 = smul.addr %s249, 16
        %s251 = scalar_lea.vmem [#allocation2], %s250
        // Predicated region
        $region74: #{tpu_custom_call.1} parent=72 // pred_check
          %p252 = pneg %p63
        $region75: #{tpu_custom_call.1} parent=72 // pred_check_branch
          %254 = sbr.rel (%p252) target = $region77
        $region76: #{tpu_custom_call.1} parent=72 // pred_region
          _
        $region77: #{tpu_custom_call.1} parent=72 // pred_fallthru
          _
        %s255 = sand.u32 %s97, 1
        %s256 = scalar_lea.sflag [#allocation4], %s255
        %s257 = sand.u32 %s97, 1
        %s258 = smul.addr %s257, 96
        %s259 = scalar_lea.vmem [#allocation3], %s258
        // Predicated region
        $region78: #{tpu_custom_call.1} parent=72 // pred_check
          %p260 = pneg %p110
        $region79: #{tpu_custom_call.1} parent=72 // pred_check_branch
          %262 = sbr.rel (%p260) target = $region81
        $region80: #{tpu_custom_call.1} parent=72 // pred_region
          %263 = dma.done %s256, 1536
        $region81: #{tpu_custom_call.1} parent=72 // pred_fallthru
          _
        %p264 = pneg %p37
        %p265 = pneg %p34
        %s266 = sand.u32 %s50, 1
        %s267 = sand.u32 %s50, 1
        %s268 = smul.addr %s267, 16
        %s269 = scalar_lea.vmem [#allocation2], %s268
        %p270 = pneg %p63
        %p271 = pneg %p60
        %p272 = pneg %p84
        %p273 = pneg %p81
        %s274 = sand.u32 %s97, 1
        %s275 = scalar_lea.sflag [#allocation4], %s274
        %s276 = sand.u32 %s97, 1
        %s277 = smul.addr %s276, 96
        %s278 = scalar_lea.vmem [#allocation3], %s277
        %p279 = pneg %p110
        %p280 = pneg %p107
        %p281 = pneg %p136
        %p282 = pneg %p133
        %s283 = sand.u32 %s123, 1
        %s284 = scalar_lea.sflag [#allocation5], %s283
        %s285 = sand.u32 %s123, 1
        %s286 = smul.addr %s285, 192
        %s287 = scalar_lea.vmem [#allocation6], %s286
        %v289 = vld [vmem:[%s0] sm:$0xf]
        %v290 = vld [vmem:[%s0 + $0x4] sm:$0xf]
        %v291 = vld [vmem:[%s0 + $0x8] sm:$0xf]
        %v292 = vld [vmem:[%s0 + $0xc] sm:$0xf]
        %v293 = vld [vmem:[%s0 + $0x10] sm:$0xf]
        %v294 = vld [vmem:[%s0 + $0x14] sm:$0xf]
        %v295 = vld [vmem:[%s0 + $0x18] sm:$0xf]
        %v296 = vld [vmem:[%s0 + $0x1c] sm:$0xf]
        %v297 = vld [vmem:[%s0 + $0x20] sm:$0xf]
        %v298 = vld [vmem:[%s0 + $0x24] sm:$0xf]
        %v299 = vld [vmem:[%s0 + $0x28] sm:$0xf]
        %v300 = vld [vmem:[%s0 + $0x2c] sm:$0xf]
        %v301 = vld [vmem:[%s0 + $0x30] sm:$0xf]
        %v302 = vld [vmem:[%s0 + $0x34] sm:$0xf]
        %v303 = vld [vmem:[%s0 + $0x38] sm:$0xf]
        %v304 = vld [vmem:[%s0 + $0x3c] sm:$0xf]
        %v305 = vld [vmem:[%s251] sm:$0xf]
        %v306 = vld [vmem:[%s251 + $0x4] sm:$0xf]
        %v307 = vld [vmem:[%s251 + $0x8] sm:$0xf]
        %v308 = vld [vmem:[%s251 + $0xc] sm:$0xf]
        %v325 = vunpack.c.l.b16 %v289
        %v326 = vunpack.c.l.b16 %v290
        %v327 = vunpack.c.l.b16 %v291
        %v328 = vunpack.c.l.b16 %v292
        %v329 = vunpack.c.l.b16 %v293
        %v330 = vunpack.c.l.b16 %v294
        %v331 = vunpack.c.l.b16 %v295
        %v332 = vunpack.c.l.b16 %v296
        %v333 = vunpack.c.l.b16 %v297
        %v334 = vunpack.c.l.b16 %v298
        %v335 = vunpack.c.l.b16 %v299
        %v336 = vunpack.c.l.b16 %v300
        %v337 = vunpack.c.l.b16 %v301
        %v338 = vunpack.c.l.b16 %v302
        %v339 = vunpack.c.l.b16 %v303
        %v340 = vunpack.c.l.b16 %v304
        %v341 = vpack.c.b16 %v326, %v325
        %v342 = vpack.c.b16 %v328, %v327
        %v343 = vpack.c.b16 %v330, %v329
        %v344 = vpack.c.b16 %v332, %v331
        %v345 = vpack.c.b16 %v334, %v333
        %v346 = vpack.c.b16 %v336, %v335
        %v347 = vpack.c.b16 %v338, %v337
        %v348 = vpack.c.b16 %v340, %v339
        %v353 = vunpack.c.l.b16 %v305
        %v354 = vunpack.c.l.b16 %v306
        %v355 = vunpack.c.l.b16 %v307
        %v356 = vunpack.c.l.b16 %v308
        %v357 = vpack.c.b16 %v354, %v353
        %v358 = vpack.c.b16 %v356, %v355
        %vm361 = vcmask 261120
        %v363 = vsel %vm361, %v341, 0
        %v366 = vsel %vm361, %v342, 0
        %v369 = vsel %vm361, %v343, 0
        %v372 = vsel %vm361, %v344, 0
        %v375 = vsel %vm361, %v345, 0
        %v378 = vsel %vm361, %v346, 0
        %v381 = vsel %vm361, %v347, 0
        %v384 = vsel %vm361, %v348, 0
        %386 = vmatprep.subr.bf16.mxu0 0
        %387 = vmatpush1.bf16.msra.mxu0 %v357
        %388 = vmatprep.subr.bf16.mxu0 0
        %389 = vmatpush1.bf16.msra.mxu0 %v358
        %390 = vmatprep.subr.bf16.mxu0 0
        %391 = vmatpush1.bf16.msra.mxu0 0
        %392 = vmatprep.subr.bf16.mxu0 0
        %393 = vmatpush1.bf16.msra.mxu0 0
        %394 = vmatprep.subr.bf16.mxu0 0
        %395 = vmatpush1.bf16.msra.mxu0 0
        %396 = vmatprep.subr.bf16.mxu0 0
        %397 = vmatpush1.bf16.msra.mxu0 0
        %398 = vmatprep.subr.bf16.mxu0 0
        %399 = vmatpush1.bf16.msra.mxu0 0
        %400 = vmatprep.subr.bf16.mxu0 0
        %401 = vmatpush1.bf16.msra.mxu0 0
        %402 = vmatprep.subr.bf16.mxu0 0
        %403 = vmatpush1.bf16.msra.mxu0 0
        %404 = vmatprep.subr.bf16.mxu0 0
        %405 = vmatpush1.bf16.msra.mxu0 0
        %406 = vmatprep.subr.bf16.mxu0 0
        %407 = vmatpush1.bf16.msra.mxu0 0
        %408 = vmatprep.subr.bf16.mxu0 0
        %409 = vmatpush1.bf16.msra.mxu0 0
        %410 = vmatprep.subr.bf16.mxu0 0
        %411 = vmatpush1.bf16.msra.mxu0 0
        %412 = vmatprep.subr.bf16.mxu0 0
        %413 = vmatpush1.bf16.msra.mxu0 0
        %414 = vmatprep.subr.bf16.mxu0 0
        %415 = vmatpush1.bf16.msra.mxu0 0
        %416 = vmatprep.subr.bf16.mxu0 0
        %417 = vmatpush1.bf16.msra.mxu0 0
        %418 = vmatprep.mubr.bf16.mxu0 0
        %419 = vmatmul.mubr.bf16.gmra.mrb[0].mxu0 %v363
        %v420 = vpop.f32.mrb[0].mxu0
        %v421 = vadd.f32 0.0, %v420
        %v422 = vpop.f32.mrb[0].mxu0
        %v423 = vpop.f32.mrb[0].mxu0
        %v424 = vadd.f32 0.0, %v423
        %v425 = vpop.f32.mrb[0].mxu0
        %426 = vmatprep.mubr.bf16.mxu0 0
        %427 = vmatmul.mubr.bf16.gmra.mrb[0].mxu0 %v366
        %v428 = vpop.f32.mrb[0].mxu0
        %v429 = vadd.f32 0.0, %v428
        %v430 = vpop.f32.mrb[0].mxu0
        %v431 = vpop.f32.mrb[0].mxu0
        %v432 = vadd.f32 0.0, %v431
        %v433 = vpop.f32.mrb[0].mxu0
        %434 = vmatprep.mubr.bf16.mxu0 0
        %435 = vmatmul.mubr.bf16.gmra.mrb[0].mxu0 %v369
        %v436 = vpop.f32.mrb[0].mxu0
        %v437 = vadd.f32 0.0, %v436
        %v438 = vpop.f32.mrb[0].mxu0
        %v439 = vpop.f32.mrb[0].mxu0
        %v440 = vadd.f32 0.0, %v439
        %v441 = vpop.f32.mrb[0].mxu0
        %442 = vmatprep.mubr.bf16.mxu0 0
        %443 = vmatmul.mubr.bf16.gmra.mrb[0].mxu0 %v372
        %v444 = vpop.f32.mrb[0].mxu0
        %v445 = vadd.f32 0.0, %v444
        %v446 = vpop.f32.mrb[0].mxu0
        %v447 = vpop.f32.mrb[0].mxu0
        %v448 = vadd.f32 0.0, %v447
        %v449 = vpop.f32.mrb[0].mxu0
        %450 = vmatprep.mubr.bf16.mxu0 0
        %451 = vmatmul.mubr.bf16.gmra.mrb[0].mxu0 %v375
        %v452 = vpop.f32.mrb[0].mxu0
        %v453 = vadd.f32 0.0, %v452
        %v454 = vpop.f32.mrb[0].mxu0
        %v455 = vpop.f32.mrb[0].mxu0
        %v456 = vadd.f32 0.0, %v455
        %v457 = vpop.f32.mrb[0].mxu0
        %458 = vmatprep.mubr.bf16.mxu0 0
        %459 = vmatmul.mubr.bf16.gmra.mrb[0].mxu0 %v378
        %v460 = vpop.f32.mrb[0].mxu0
        %v461 = vadd.f32 0.0, %v460
        %v462 = vpop.f32.mrb[0].mxu0
        %v463 = vpop.f32.mrb[0].mxu0
        %v464 = vadd.f32 0.0, %v463
        %v465 = vpop.f32.mrb[0].mxu0
        %466 = vmatprep.mubr.bf16.mxu0 0
        %467 = vmatmul.mubr.bf16.gmra.mrb[0].mxu0 %v381
        %v468 = vpop.f32.mrb[0].mxu0
        %v469 = vadd.f32 0.0, %v468
        %v470 = vpop.f32.mrb[0].mxu0
        %v471 = vpop.f32.mrb[0].mxu0
        %v472 = vadd.f32 0.0, %v471
        %v473 = vpop.f32.mrb[0].mxu0
        %474 = vmatprep.mubr.bf16.mxu0 0
        %475 = vmatmul.mubr.bf16.gmra.mrb[0].mxu0 %v384
        %v476 = vpop.f32.mrb[0].mxu0
        %v477 = vadd.f32 0.0, %v476
        %v478 = vpop.f32.mrb[0].mxu0
        %v479 = vpop.f32.mrb[0].mxu0
        %v480 = vadd.f32 0.0, %v479
        %v481 = vpop.f32.mrb[0].mxu0
        %482 = vdwg.mxu0
        %v483 = vmax.f32 %v421, %v437
        %v484 = vmax.f32 %v424, %v440
        %v485 = vmax.f32 %v429, %v445
        %v486 = vmax.f32 %v432, %v448
        %v487 = vmax.f32 %v483, %v453
        %v488 = vmax.f32 %v484, %v456
        %v489 = vmax.f32 %v485, %v461
        %v490 = vmax.f32 %v486, %v464
        %v491 = vmax.f32 %v487, %v469
        %v492 = vmax.f32 %v488, %v472
        %v493 = vmax.f32 %v489, %v477
        %v494 = vmax.f32 %v490, %v480
        %v495 = vmax.f32 %v491, %v492
        %v496 = vmax.f32 %v493, %v494
        %v497 = vmax.f32 %v495, %v496
        %v498 = vrot.slane %v497, 4
        %v499 = vmax.f32 %v497, %v498
        %v500 = vrot.slane %v499, 2
        %v501 = vmax.f32 %v499, %v500
        %v502 = vrot.slane %v501, 1
        %v503 = vmax.f32 %v501, %v502
        %v504 = vsub.f32 %v421, %v503
        %v505 = vsub.f32 %v424, %v503
        %v506 = vsub.f32 %v429, %v503
        %v507 = vsub.f32 %v432, %v503
        %v508 = vsub.f32 %v437, %v503
        %v509 = vsub.f32 %v440, %v503
        %v510 = vsub.f32 %v445, %v503
        %v511 = vsub.f32 %v448, %v503
        %v512 = vsub.f32 %v453, %v503
        %v513 = vsub.f32 %v456, %v503
        %v514 = vsub.f32 %v461, %v503
        %v515 = vsub.f32 %v464, %v503
        %v516 = vsub.f32 %v469, %v503
        %v517 = vsub.f32 %v472, %v503
        %v518 = vsub.f32 %v477, %v503
        %v519 = vsub.f32 %v480, %v503
        %v520 = vmul.f32 %v504, 1.442695
        %v521 = vpow.pop %v520
        %v522 = vmul.f32 %v505, 1.442695
        %v523 = vpow.pop %v522
        %v524 = vmul.f32 %v506, 1.442695
        %v525 = vpow.pop %v524
        %v526 = vmul.f32 %v507, 1.442695
        %v527 = vpow.pop %v526
        %v528 = vmul.f32 %v508, 1.442695
        %v529 = vpow.pop %v528
        %v530 = vmul.f32 %v509, 1.442695
        %v531 = vpow.pop %v530
        %v532 = vmul.f32 %v510, 1.442695
        %v533 = vpow.pop %v532
        %v534 = vmul.f32 %v511, 1.442695
        %v535 = vpow.pop %v534
        %v536 = vmul.f32 %v512, 1.442695
        %v537 = vpow.pop %v536
        %v538 = vmul.f32 %v513, 1.442695
        %v539 = vpow.pop %v538
        %v540 = vmul.f32 %v514, 1.442695
        %v541 = vpow.pop %v540
        %v542 = vmul.f32 %v515, 1.442695
        %v543 = vpow.pop %v542
        %v544 = vmul.f32 %v516, 1.442695
        %v545 = vpow.pop %v544
        %v546 = vmul.f32 %v517, 1.442695
        %v547 = vpow.pop %v546
        %v548 = vmul.f32 %v518, 1.442695
        %v549 = vpow.pop %v548
        %v550 = vmul.f32 %v519, 1.442695
        %v551 = vpow.pop %v550
        %v552 = vadd.f32 %v521, %v523
        %v553 = vadd.f32 %v552, %v525
        %v554 = vadd.f32 %v553, %v527
        %v555 = vadd.f32 %v554, %v529
        %v556 = vadd.f32 %v555, %v531
        %v557 = vadd.f32 %v556, %v533
        %v558 = vadd.f32 %v557, %v535
        %v559 = vadd.f32 %v558, %v537
        %v560 = vadd.f32 %v559, %v539
        %v561 = vadd.f32 %v560, %v541
        %v562 = vadd.f32 %v561, %v543
        %v563 = vadd.f32 %v562, %v545
        %v564 = vadd.f32 %v563, %v547
        %v565 = vadd.f32 %v564, %v549
        %v566 = vadd.f32 %v565, %v551
        %v567 = vrot.slane %v566, 4
        %v568 = vadd.f32 %v566, %v567
        %v569 = vrot.slane %v568, 2
        %v570 = vadd.f32 %v568, %v569
        %v571 = vrot.slane %v570, 1
        %v572 = vadd.f32 %v570, %v571
        %v573 = vrcp.pop %v572
        %v574 = vld [vmem:[%s2] sm:$0xf]
        %v575 = vld [vmem:[%s2 + $0x4] sm:$0xf]
        %v576 = vld [vmem:[%s2 + $0x8] sm:$0xf]
        %v577 = vld [vmem:[%s2 + $0xc] sm:$0xf]
        %v578 = vld [vmem:[%s2 + $0x10] sm:$0xf]
        %v579 = vld [vmem:[%s2 + $0x14] sm:$0xf]
        %v580 = vld [vmem:[%s2 + $0x18] sm:$0xf]
        %v581 = vld [vmem:[%s2 + $0x1c] sm:$0xf]
        %v582 = vld [vmem:[%s2 + $0x20] sm:$0xf]
        %v583 = vld [vmem:[%s2 + $0x24] sm:$0xf]
        %v584 = vld [vmem:[%s2 + $0x28] sm:$0xf]
        %v585 = vld [vmem:[%s2 + $0x2c] sm:$0xf]
        %v586 = vld [vmem:[%s2 + $0x30] sm:$0x3]
        %v587 = vpack.c.bf16 %v523, %v521
        %v588 = vpack.c.bf16 %v527, %v525
        %v589 = vpack.c.bf16 %v531, %v529
        %v590 = vpack.c.bf16 %v535, %v533
        %v591 = vpack.c.bf16 %v539, %v537
        %v592 = vpack.c.bf16 %v543, %v541
        %v593 = vpack.c.bf16 %v547, %v545
        %v594 = vpack.c.bf16 %v551, %v549
        %v608 = vunpack.c.l.b16 %v574
        %v609 = vunpack.c.l.b16 %v575
        %v610 = vunpack.c.l.b16 %v576
        %v611 = vunpack.c.l.b16 %v577
        %v612 = vunpack.c.l.b16 %v578
        %v613 = vunpack.c.l.b16 %v579
        %v614 = vunpack.c.l.b16 %v580
        %v615 = vunpack.c.l.b16 %v581
        %v616 = vunpack.c.l.b16 %v582
        %v617 = vunpack.c.l.b16 %v583
        %v618 = vunpack.c.l.b16 %v584
        %v619 = vunpack.c.l.b16 %v585
        %v620 = vunpack.c.l.b16 %v586
        %v621 = vpack.c.b16 %v609, %v608
        %v622 = vpack.c.b16 %v611, %v610
        %v623 = vpack.c.b16 %v613, %v612
        %v624 = vpack.c.b16 %v615, %v614
        %v625 = vpack.c.b16 %v617, %v616
        %v626 = vpack.c.b16 %v619, %v618
        %v627 = vpack.c.b16 %v620, %v620
        %635 = vmatprep.subr.bf16.mxu0 0
        %636 = vmatpush1.bf16.msra.mxu0 %v587
        %637 = vmatprep.subr.bf16.mxu0 0
        %638 = vmatpush1.bf16.msra.mxu0 %v588
        %639 = vmatprep.subr.bf16.mxu0 0
        %640 = vmatpush1.bf16.msra.mxu0 %v589
        %641 = vmatprep.subr.bf16.mxu0 0
        %642 = vmatpush1.bf16.msra.mxu0 %v590
        %643 = vmatprep.subr.bf16.mxu0 0
        %644 = vmatpush1.bf16.msra.mxu0 %v591
        %645 = vmatprep.subr.bf16.mxu0 0
        %646 = vmatpush1.bf16.msra.mxu0 %v592
        %647 = vmatprep.subr.bf16.mxu0 0
        %648 = vmatpush1.bf16.msra.mxu0 %v593
        %649 = vmatprep.subr.bf16.mxu0 0
        %650 = vmatpush1.bf16.msra.mxu0 %v594
        %651 = vmatprep.subr.bf16.mxu0 0
        %652 = vmatpush1.bf16.msra.mxu0 0
        %653 = vmatprep.subr.bf16.mxu0 0
        %654 = vmatpush1.bf16.msra.mxu0 0
        %655 = vmatprep.subr.bf16.mxu0 0
        %656 = vmatpush1.bf16.msra.mxu0 0
        %657 = vmatprep.subr.bf16.mxu0 0
        %658 = vmatpush1.bf16.msra.mxu0 0
        %659 = vmatprep.subr.bf16.mxu0 0
        %660 = vmatpush1.bf16.msra.mxu0 0
        %661 = vmatprep.subr.bf16.mxu0 0
        %662 = vmatpush1.bf16.msra.mxu0 0
        %663 = vmatprep.subr.bf16.mxu0 0
        %664 = vmatpush1.bf16.msra.mxu0 0
        %665 = vmatprep.subr.bf16.mxu0 0
        %666 = vmatpush1.bf16.msra.mxu0 0
        %667 = vmatprep.mubr.bf16.mxu0 0
        %668 = vmatmul.mubr.bf16.gmra.mrb[0].mxu0 %v621
        %v669 = vpop.f32.mrb[0].mxu0
        %v670 = vadd.f32 0.0, %v669
        %v671 = vpop.f32.mrb[0].mxu0
        %v672 = vpop.f32.mrb[0].mxu0
        %v673 = vadd.f32 0.0, %v672
        %v674 = vpop.f32.mrb[0].mxu0
        %675 = vmatprep.mubr.bf16.mxu0 0
        %676 = vmatmul.mubr.bf16.gmra.mrb[0].mxu0 %v622
        %v677 = vpop.f32.mrb[0].mxu0
        %v678 = vadd.f32 0.0, %v677
        %v679 = vpop.f32.mrb[0].mxu0
        %v680 = vpop.f32.mrb[0].mxu0
        %v681 = vadd.f32 0.0, %v680
        %v682 = vpop.f32.mrb[0].mxu0
        %683 = vmatprep.mubr.bf16.mxu0 0
        %684 = vmatmul.mubr.bf16.gmra.mrb[0].mxu0 %v623
        %v685 = vpop.f32.mrb[0].mxu0
        %v686 = vadd.f32 0.0, %v685
        %v687 = vpop.f32.mrb[0].mxu0
        %v688 = vpop.f32.mrb[0].mxu0
        %v689 = vadd.f32 0.0, %v688
        %v690 = vpop.f32.mrb[0].mxu0
        %691 = vmatprep.mubr.bf16.mxu0 0
        %692 = vmatmul.mubr.bf16.gmra.mrb[0].mxu0 %v624
        %v693 = vpop.f32.mrb[0].mxu0
        %v694 = vadd.f32 0.0, %v693
        %v695 = vpop.f32.mrb[0].mxu0
        %v696 = vpop.f32.mrb[0].mxu0
        %v697 = vadd.f32 0.0, %v696
        %v698 = vpop.f32.mrb[0].mxu0
        %699 = vmatprep.mubr.bf16.mxu0 0
        %700 = vmatmul.mubr.bf16.gmra.mrb[0].mxu0 %v625
        %v701 = vpop.f32.mrb[0].mxu0
        %v702 = vadd.f32 0.0, %v701
        %v703 = vpop.f32.mrb[0].mxu0
        %v704 = vpop.f32.mrb[0].mxu0
        %v705 = vadd.f32 0.0, %v704
        %v706 = vpop.f32.mrb[0].mxu0
        %707 = vmatprep.mubr.bf16.mxu0 0
        %708 = vmatmul.mubr.bf16.gmra.mrb[0].mxu0 %v626
        %v709 = vpop.f32.mrb[0].mxu0
        %v710 = vadd.f32 0.0, %v709
        %v711 = vpop.f32.mrb[0].mxu0
        %v712 = vpop.f32.mrb[0].mxu0
        %v713 = vadd.f32 0.0, %v712
        %v714 = vpop.f32.mrb[0].mxu0
        %715 = vmatprep.mubr.bf16.mxu0 0
        %716 = vmatmul.mubr.bf16.gmra.mrb[0].mxu0 %v627
        %v717 = vpop.f32.mrb[0].mxu0
        %v718 = vadd.f32 0.0, %v717
        %v719 = vpop.f32.mrb[0].mxu0
        %v720 = vpop.f32.mrb[0].mxu0
        %v721 = vpop.f32.mrb[0].mxu0
        %722 = vdwg.mxu0
        %v723 = vmul.f32 %v670, %v573
        %v724 = vmul.f32 %v673, %v573
        %v725 = vmul.f32 %v678, %v573
        %v726 = vmul.f32 %v681, %v573
        %v727 = vmul.f32 %v686, %v573
        %v728 = vmul.f32 %v689, %v573
        %v729 = vmul.f32 %v694, %v573
        %v730 = vmul.f32 %v697, %v573
        %v731 = vmul.f32 %v702, %v573
        %v732 = vmul.f32 %v705, %v573
        %v733 = vmul.f32 %v710, %v573
        %v734 = vmul.f32 %v713, %v573
        %v735 = vmul.f32 %v718, %v573
        %v738 = vunpack.c.l.s4 1966171168
        %v739 = vunpack.c.0.s8 %v738
        %v740 = vlaneseq
        %v741 = vshrl.u32 %v740, 7
        %v742 = vsub.s32 %v739, %v741
        %v743 = vrot.slane %v735, %v742
        %v744 = vcombine.high %v743, %v743
        %v746 = vunpack.c.l.s4 1966171168
        %v747 = vunpack.c.0.s8 %v746
        %v748 = vlaneseq
        %v749 = vshrl.u32 %v748, 7
        %v750 = vsub.s32 %v747, %v749
        %v751 = vrot.slane %v743, %v750
        %v753 = vunpack.c.l.s4 1966171168
        %v754 = vunpack.c.0.s8 %v753
        %v755 = vlaneseq
        %v756 = vshrl.u32 %v755, 7
        %v757 = vsub.s32 %v754, %v756
        %v758 = vrot.slane %v744, %v757
        %v759 = vcombine.high %v751, %v751
        %760 = vst [vmem:[%s287] sm:$0xff] %v723
        %761 = vst [vmem:[%s287 + $0x8] sm:$0xff] %v724
        %762 = vst [vmem:[%s287 + $0x10] sm:$0xff] %v725
        %763 = vst [vmem:[%s287 + $0x18] sm:$0xff] %v726
        %764 = vst [vmem:[%s287 + $0x40] sm:$0xff] %v727
        %765 = vst [vmem:[%s287 + $0x48] sm:$0xff] %v728
        %766 = vst [vmem:[%s287 + $0x50] sm:$0xff] %v729
        %767 = vst [vmem:[%s287 + $0x58] sm:$0xff] %v730
        %768 = vst [vmem:[%s287 + $0x80] sm:$0xff] %v731
        %769 = vst [vmem:[%s287 + $0x88] sm:$0xff] %v732
        %770 = vst [vmem:[%s287 + $0x90] sm:$0xff] %v733
        %771 = vst [vmem:[%s287 + $0x98] sm:$0xff] %v734
        %v772 = vld [vmem:[%s259] sm:$0xff]
        %v773 = vld [vmem:[%s259 + $0x8] sm:$0xff]
        %v774 = vld [vmem:[%s259 + $0x10] sm:$0xff]
        %v775 = vld [vmem:[%s259 + $0x18] sm:$0xff]
        %v776 = vld [vmem:[%s259 + $0x20] sm:$0xff]
        %v777 = vld [vmem:[%s259 + $0x28] sm:$0xff]
        %v778 = vld [vmem:[%s259 + $0x30] sm:$0xff]
        %v779 = vld [vmem:[%s259 + $0x38] sm:$0xff]
        %v780 = vld [vmem:[%s259 + $0x40] sm:$0xff]
        %v781 = vld [vmem:[%s259 + $0x48] sm:$0xff]
        %v782 = vld [vmem:[%s259 + $0x50] sm:$0xff]
        %v783 = vld [vmem:[%s259 + $0x58] sm:$0xff]
        %v784 = vlaneseq
        %v785 = vshrl.u32 %v784, 7
        %v786 = vsub.s32 0, %v785
        %v787 = vrot.slane %v751, %v786
        %v788 = vlaneseq
        %v789 = vshrl.u32 %v788, 7
        %v790 = vsub.s32 0, %v789
        %v791 = vrot.slane %v758, %v790
        %v792 = vlaneseq
        %v793 = vshrl.u32 %v792, 7
        %v794 = vsub.s32 0, %v793
        %v795 = vrot.slane %v759, %v794
        %v799 = vmul.f32 %v772, %v787
        %v800 = vmul.f32 %v773, %v787
        %v801 = vmul.f32 %v774, %v787
        %v802 = vmul.f32 %v775, %v787
        %v803 = vmul.f32 %v776, %v791
        %v804 = vmul.f32 %v777, %v791
        %v805 = vmul.f32 %v778, %v791
        %v806 = vmul.f32 %v779, %v791
        %v807 = vmul.f32 %v780, %v795
        %v808 = vmul.f32 %v781, %v795
        %v809 = vmul.f32 %v782, %v795
        %v810 = vmul.f32 %v783, %v795
        %811 = vst [vmem:[%s287 + $0x20] sm:$0xff] %v799
        %812 = vst [vmem:[%s287 + $0x28] sm:$0xff] %v800
        %813 = vst [vmem:[%s287 + $0x30] sm:$0xff] %v801
        %814 = vst [vmem:[%s287 + $0x38] sm:$0xff] %v802
        %815 = vst [vmem:[%s287 + $0x60] sm:$0xff] %v803
        %816 = vst [vmem:[%s287 + $0x68] sm:$0xff] %v804
        %817 = vst [vmem:[%s287 + $0x70] sm:$0xff] %v805
        %818 = vst [vmem:[%s287 + $0x78] sm:$0xff] %v806
        %819 = vst [vmem:[%s287 + $0xa0] sm:$0xff] %v807
        %820 = vst [vmem:[%s287 + $0xa8] sm:$0xff] %v808
        %821 = vst [vmem:[%s287 + $0xb0] sm:$0xff] %v809
        %822 = vst [vmem:[%s287 + $0xb8] sm:$0xff] %v810
        %s823 = sand.u32 %s123, 1
        %s824 = scalar_lea.sflag [#allocation5], %s823
        %s825 = sand.u32 %s123, 1
        %s826 = smul.addr %s825, 192
        %s827 = scalar_lea.vmem [#allocation6], %s826
        // Predicated region
        $region82: #{tpu_custom_call.1} parent=72 // pred_check
          %p828 = pneg %p133
        $region83: #{tpu_custom_call.1} parent=72 // pred_check_branch
          %830 = sbr.rel (%p828) target = $region85
        $region84: #{tpu_custom_call.1} parent=72 // pred_region
          %s832 = ssub.s32 3072, 3072
          %833 = vsyncadd %s824, %s832
          %s834 = smul.addr %s21, 128
          %s835 = scalar_lea.hbm %s4, %s834
          %s836 = sshll.u32 %s827, 4
          %s837 = int_to_ptr.vmem [resolvable:$true] %s836
          %842 = dma.vmem_to_hbm [thread:$0]  %s837, 3072, %s835, %s824, 128, 256, 8
        $region85: #{tpu_custom_call.1} parent=72 // pred_fallthru
          _
      $region73: #{tpu_custom_call.1} parent=5 // pred_fallthru
        _
      %p843 = scmp.le.s32.totalorder 2, %s16
      // Predicated region
      $region86: #{tpu_custom_call.1} parent=5 // pred_check
        %p844 = pneg %p843
      $region87: #{tpu_custom_call.1} parent=5 // pred_check_branch
        %846 = sbr.rel (%p844) target = $region89
      $region88: #{tpu_custom_call.1} parent=5 // pred_region
        %s847 = ssub.s32 %s16, 2
        // Predicated region
        $region90: #{tpu_custom_call.1} parent=88 // pred_check
          %p848 = pneg %p139
        $region91: #{tpu_custom_call.1} parent=88 // pred_check_branch
          %850 = sbr.rel (%p848) target = $region93
        $region92: #{tpu_custom_call.1} parent=88 // pred_region
          %s851 = sand.u32 %s124, 1
          %s852 = scalar_lea.sflag [#allocation5], %s851
          %s853 = sand.u32 %s124, 1
          %s854 = smul.addr %s853, 192
          %s855 = scalar_lea.vmem [#allocation6], %s854
          %856 = dma.done %s852, 3072
        $region93: #{tpu_custom_call.1} parent=88 // pred_fallthru
          _
      $region89: #{tpu_custom_call.1} parent=5 // pred_fallthru
        _
    $region6: #{tpu_custom_call.1} parent=1 // loop_footer
      %s20 = sadd.s32 1, %s16
    $region7: #{tpu_custom_call.1} parent=1 // loop_footer_branch
      %15 = sbr.rel target = $region3
    $region8: #{tpu_custom_call.1} parent=1 // loop_exit
      _
    %857 = vsyncpa [#allocation4], 1
    %s858 = scalar_lea.sflag [#allocation4], 1
    %859 = vsyncpa %s858, 1
    %860 = vsyncpa [#allocation5], 1
    %s861 = scalar_lea.sflag [#allocation5], 1
    %862 = vsyncpa %s861, 1

// kernel: tpu_custom_call.1
$region0: #{tpu_custom_call.1}
  #allocation0 [shape = 'u32[]', space=smem, size = 0x4, offset = 0x4, fixed_abs, tag = 'smem constant byte address 0x4 - core index']
  #allocation1 [shape = 'u32[144,128]{1,0:T(1,128)}', space=vmem, size = 0x12000, scoped, tag = 'internal scratch']
  %s0 = inlined_call_operand.vmem [shape: bf16[128,32], index: 0, kind: input, shape index: {}]
  %s1 = inlined_call_operand.vmem [shape: bf16[32,256], index: 1, kind: input, shape index: {}]
  %s2 = inlined_call_operand.vmem [shape: bf16[99,128], index: 2, kind: input, shape index: {}]
  %s3 = inlined_call_operand.hbm [shape: f32[3,32,256], index: 3, kind: input, shape index: {}]
  %s4 = inlined_call_operand.hbm [shape: f32[3,64,256], index: 4, kind: output, shape index: {}]
  %s5 = sld [smem:[#allocation0]]
  $region94: #{tpu_custom_call.1} parent=0
    _
  %s7 = ssub.s32 1, %s5
  %s8 = scalar_select 0, %s7, %s5
  $region1: #{tpu_custom_call.1} parent=0
    #allocation2 [shape = 'u8[16384]{0}', space=vmem, size = 0x4000, scoped, tag = 'input window, operand 1']
    #allocation3 [shape = 'u8[98304]{0}', space=vmem, size = 0x18000, scoped, tag = 'input window, operand 3']
    #allocation4 [shape = 's32[2]{0}', space=sflag, size = 0x8, scoped, tag = 'scoped memory for tpu_custom_call.1']
    #allocation5 [shape = 's32[2]{0}', space=sflag, size = 0x8, scoped, tag = 'scoped memory for tpu_custom_call.1']
    #allocation6 [shape = 'u8[196608]{0}', space=vmem, size = 0x30000, scoped, tag = 'output window, operand 0']
    %9 = vsyncpa [#allocation4], 0
    %s10 = scalar_lea.sflag [#allocation4], 1
    %11 = vsyncpa %s10, 0
    %12 = vsyncpa [#allocation5], 0
    %s13 = scalar_lea.sflag [#allocation5], 1
    %14 = vsyncpa %s13, 0
    loop: start=0, step=1, limit=4
    $region2: #{tpu_custom_call.1} parent=1 // loop_pre_header
      _
    $region3: #{tpu_custom_call.1} parent=1 // loop_header
      %s16 = sphi 0, %s20
      %p17 = scmp.ge.s32.totalorder %s16, 4
      %s24 = sphi 0, %s24
      %s26 = sphi 0, %s24
      %s27 = sphi 0, %s26
      %s41 = sphi 0, %s27
      %s47 = sphi 0, %s49
      %s50 = sphi 0, %s47
      %s51 = sphi 0, %s50
      %s67 = sphi 0, %s51
      %s71 = sphi 0, %s71
      %s73 = sphi 0, %s71
      %s74 = sphi 0, %s73
      %s88 = sphi 0, %s74
      %s94 = sphi 0, %s96
      %s97 = sphi 0, %s94
      %s98 = sphi 0, %s97
      %s114 = sphi 0, %s98
      %s120 = sphi 0, %s122
      %s123 = sphi 0, %s120
      %s124 = sphi 0, %s123
      %s140 = sphi 0, %s124
    $region4: #{tpu_custom_call.1} parent=1 // loop_header_branch
      %19 = sbr.rel (%p17) target = $region8
    $region5: #{tpu_custom_call.1} parent=1 // loop_body
      %s21 = ssub.s32 %s16, 1
      %s22 = ssub.s32 %s16, 2
      %s23 = sadd.s32 %s16, 1
      %s25 = sadd.s32 %s24, 1
      %p28 = scmp.eq.s32.totalorder %s16, 1
      %p29 = scmp.ne.s32.totalorder %s24, %s26
      %p30 = scmp.eq.s32.totalorder %s16, 0
      %p31 = por %p29, %p30
      %p32 = scmp.ne.s32.totalorder %s24, %s26
      %p33 = scmp.eq.s32.totalorder %s21, 1
      %p34 = por %p32, %p33
      %p35 = scmp.ne.s32.totalorder %s26, %s27
      %p36 = scmp.eq.s32.totalorder %s21, 0
      %p37 = por %p35, %p36
      %p38 = scmp.ne.s32.totalorder %s26, %s27
      %p39 = scmp.eq.s32.totalorder %s22, 1
      %p40 = por %p38, %p39
      %p42 = scmp.ne.s32.totalorder %s27, %s41
      %p43 = scmp.eq.s32.totalorder %s22, 0
      %p44 = por %p42, %p43
      %s45 = ssub.s32 %s16, %s23
      %p46 = scmp.eq.s32.totalorder %s45, 0
      %s48 = sadd.s32 %s47, 1
      %s49 = scalar_select %p46, %s47, %s48
      %p52 = pneg %p46
      %p53 = scmp.eq.s32.totalorder %s16, 1
      %p54 = por %p52, %p53
      %p55 = scmp.ne.s32.totalorder %s47, %s50
      %p56 = scmp.eq.s32.totalorder %s16, 0
      %p57 = por %p55, %p56
      %p58 = scmp.ne.s32.totalorder %s47, %s50
      %p59 = scmp.eq.s32.totalorder %s21, 1
      %p60 = por %p58, %p59
      %p61 = scmp.ne.s32.totalorder %s50, %s51
      %p62 = scmp.eq.s32.totalorder %s21, 0
      %p63 = por %p61, %p62
      %p64 = scmp.ne.s32.totalorder %s50, %s51
      %p65 = scmp.eq.s32.totalorder %s22, 1
      %p66 = por %p64, %p65
      %p68 = scmp.ne.s32.totalorder %s51, %s67
      %p69 = scmp.eq.s32.totalorder %s22, 0
      %p70 = por %p68, %p69
      %s72 = sadd.s32 %s71, 1
      %p75 = scmp.eq.s32.totalorder %s16, 1
      %p76 = scmp.ne.s32.totalorder %s71, %s73
      %p77 = scmp.eq.s32.totalorder %s16, 0
      %p78 = por %p76, %p77
      %p79 = scmp.ne.s32.totalorder %s71, %s73
      %p80 = scmp.eq.s32.totalorder %s21, 1
      %p81 = por %p79, %p80
      %p82 = scmp.ne.s32.totalorder %s73, %s74
      %p83 = scmp.eq.s32.totalorder %s21, 0
      %p84 = por %p82, %p83
      %p85 = scmp.ne.s32.totalorder %s73, %s74
      %p86 = scmp.eq.s32.totalorder %s22, 1
      %p87 = por %p85, %p86
      %p89 = scmp.ne.s32.totalorder %s74, %s88
      %p90 = scmp.eq.s32.totalorder %s22, 0
      %p91 = por %p89, %p90
      %s92 = ssub.s32 %s16, %s23
      %p93 = scmp.eq.s32.totalorder %s92, 0
      %s95 = sadd.s32 %s94, 1
      %s96 = scalar_select %p93, %s94, %s95
      %p99 = pneg %p93
      %p100 = scmp.eq.s32.totalorder %s16, 1
      %p101 = por %p99, %p100
      %p102 = scmp.ne.s32.totalorder %s94, %s97
      %p103 = scmp.eq.s32.totalorder %s16, 0
      %p104 = por %p102, %p103
      %p105 = scmp.ne.s32.totalorder %s94, %s97
      %p106 = scmp.eq.s32.totalorder %s21, 1
      %p107 = por %p105, %p106
      %p108 = scmp.ne.s32.totalorder %s97, %s98
      %p109 = scmp.eq.s32.totalorder %s21, 0
      %p110 = por %p108, %p109
      %p111 = scmp.ne.s32.totalorder %s97, %s98
      %p112 = scmp.eq.s32.totalorder %s22, 1
      %p113 = por %p111, %p112
      %p115 = scmp.ne.s32.totalorder %s98, %s114
      %p116 = scmp.eq.s32.totalorder %s22, 0
      %p117 = por %p115, %p116
      %s118 = ssub.s32 %s16, %s23
      %p119 = scmp.eq.s32.totalorder %s118, 0
      %s121 = sadd.s32 %s120, 1
      %s122 = scalar_select %p119, %s120, %s121
      %p125 = pneg %p119
      %p126 = scmp.eq.s32.totalorder %s16, 1
      %p127 = por %p125, %p126
      %p128 = scmp.ne.s32.totalorder %s120, %s123
      %p129 = scmp.eq.s32.totalorder %s16, 0
      %p130 = por %p128, %p129
      %p131 = scmp.ne.s32.totalorder %s120, %s123
      %p132 = scmp.eq.s32.totalorder %s21, 1
      %p133 = por %p131, %p132
      %p134 = scmp.ne.s32.totalorder %s123, %s124
      %p135 = scmp.eq.s32.totalorder %s21, 0
      %p136 = por %p134, %p135
      %p137 = scmp.ne.s32.totalorder %s123, %s124
      %p138 = scmp.eq.s32.totalorder %s22, 1
      %p139 = por %p137, %p138
      %p141 = scmp.ne.s32.totalorder %s124, %s140
      %p142 = scmp.eq.s32.totalorder %s22, 0
      %p143 = por %p141, %p142
      %p144 = scmp.le.s32.totalorder 1, %s16
      %p145 = scmp.lt.s32.totalorder %s16, 3
      %p146 = pnand %p144, %p145
      %p147 = pneg %p146
      // Predicated region
      $region9: #{tpu_custom_call.1} parent=5 // pred_check
        _
      $region10: #{tpu_custom_call.1} parent=5 // pred_check_branch
        %149 = sbr.rel (%p146) target = $region12
      $region11: #{tpu_custom_call.1} parent=5 // pred_region
        %s150 = ssub.s32 %s16, 1
        // Predicated region
        $region13: #{tpu_custom_call.1} parent=11 // pred_check
          %p151 = pneg %p37
        $region14: #{tpu_custom_call.1} parent=11 // pred_check_branch
          %153 = sbr.rel (%p151) target = $region16
        $region15: #{tpu_custom_call.1} parent=11 // pred_region
          _
        $region16: #{tpu_custom_call.1} parent=11 // pred_fallthru
          _
        // Predicated region
        $region17: #{tpu_custom_call.1} parent=11 // pred_check
          %p154 = pneg %p84
        $region18: #{tpu_custom_call.1} parent=11 // pred_check_branch
          %156 = sbr.rel (%p154) target = $region20
        $region19: #{tpu_custom_call.1} parent=11 // pred_region
          _
        $region20: #{tpu_custom_call.1} parent=11 // pred_fallthru
          _
      $region12: #{tpu_custom_call.1} parent=5 // pred_fallthru
        _
      %p157 = scmp.lt.s32.totalorder %s16, 2
      // Predicated region
      $region21: #{tpu_custom_call.1} parent=5 // pred_check
        %p158 = pneg %p157
      $region22: #{tpu_custom_call.1} parent=5 // pred_check_branch
        %160 = sbr.rel (%p158) target = $region24
      $region23: #{tpu_custom_call.1} parent=5 // pred_region
        // Predicated region
        $region25: #{tpu_custom_call.1} parent=23 // pred_check
          %p161 = pneg %p57
        $region26: #{tpu_custom_call.1} parent=23 // pred_check_branch
          %163 = sbr.rel (%p161) target = $region28
        $region27: #{tpu_custom_call.1} parent=23 // pred_region
          %s164 = sand.u32 %s47, 1
          %s165 = sand.u32 %s47, 1
          %s166 = smul.addr %s165, 16
          %s167 = scalar_lea.vmem [#allocation2], %s166
          %s168 = smul.addr %s16, 4
          %s169 = scalar_lea.vmem %s1, %s168
          // Predicated region
          $region29: #{tpu_custom_call.1} parent=27 // pred_check
            _
          $region30: #{tpu_custom_call.1} parent=27 // pred_check_branch
            %171 = sbr.rel (0) target = $region32
          $region31: #{tpu_custom_call.1} parent=27 // pred_region
            // Predicated region
            $region33: #{tpu_custom_call.1} parent=31 // pred_check
              _
            $region34: #{tpu_custom_call.1} parent=31 // pred_check_branch
              %173 = sbr.rel target = $region36
            $region35: #{tpu_custom_call.1} parent=31 // pred_region
              // Predicated region
              $region48: #{tpu_custom_call.1} parent=35 // pred_check
                _
              $region49: #{tpu_custom_call.1} parent=35 // pred_check_branch
                %194 = sbr.rel (0) target = $region51
              $region50: #{tpu_custom_call.1} parent=35 // pred_region
                loop: start=0, step=1, limit=1
                $region52: #{tpu_custom_call.1} parent=50 // loop_pre_header
                  _
                $region53: #{tpu_custom_call.1} parent=50 // loop_header
                  %s196 = sphi 0, %s200
                  %p197 = scmp.ge.s32.totalorder %s196, 1
                  %s201 = sphi %s169, %s169
                  %s202 = sphi %s167, %s167
                $region54: #{tpu_custom_call.1} parent=50 // loop_header_branch
                  %199 = sbr.rel (%p197) target = $region58
                $region55: #{tpu_custom_call.1} parent=50 // loop_body
                  _
                $region56: #{tpu_custom_call.1} parent=50 // loop_footer
                  %s200 = sadd.s32 1, %s196
                $region57: #{tpu_custom_call.1} parent=50 // loop_footer_branch
                  %195 = sbr.rel target = $region53
                $region58: #{tpu_custom_call.1} parent=50 // loop_exit
                  _
                loop: start=0, step=1, limit=1
                $region59: #{tpu_custom_call.1} parent=50 // loop_pre_header
                  _
                $region60: #{tpu_custom_call.1} parent=50 // loop_header
                  %s205 = sphi 0, %s209
                  %p206 = scmp.ge.s32.totalorder %s205, 1
                  %s210 = sphi %s169, %s169
                  %s211 = sphi %s167, %s167
                $region61: #{tpu_custom_call.1} parent=50 // loop_header_branch
                  %208 = sbr.rel (%p206) target = $region65
                $region62: #{tpu_custom_call.1} parent=50 // loop_body
                  %v212 = vld [vmem:[%s210] sm:$0xf]
                  %213 = vst [vmem:[%s211] sm:$0xf] %v212
                  %v214 = vld [vmem:[%s210 + $0x8] sm:$0xf]
                  %215 = vst [vmem:[%s211 + $0x4] sm:$0xf] %v214
                  %v216 = vld [vmem:[%s210 + $0x10] sm:$0xf]
                  %217 = vst [vmem:[%s211 + $0x8] sm:$0xf] %v216
                  %v218 = vld [vmem:[%s210 + $0x18] sm:$0xf]
                  %219 = vst [vmem:[%s211 + $0xc] sm:$0xf] %v218
                $region63: #{tpu_custom_call.1} parent=50 // loop_footer
                  %s209 = sadd.s32 1, %s205
                $region64: #{tpu_custom_call.1} parent=50 // loop_footer_branch
                  %204 = sbr.rel target = $region60
                $region65: #{tpu_custom_call.1} parent=50 // loop_exit
                  _
              $region51: #{tpu_custom_call.1} parent=35 // pred_fallthru
                _
            $region36: #{tpu_custom_call.1} parent=31 // pred_fallthru
              _
            // Predicated region
            $region37: #{tpu_custom_call.1} parent=31 // pred_check
              _
            $region38: #{tpu_custom_call.1} parent=31 // pred_check_branch
              %175 = sbr.rel (0) target = $region40
            $region39: #{tpu_custom_call.1} parent=31 // pred_region
              loop: start=0, step=1, limit=1
              $region41: #{tpu_custom_call.1} parent=39 // loop_pre_header
                _
              $region42: #{tpu_custom_call.1} parent=39 // loop_header
                %s178 = sphi 0, %s182
                %p179 = scmp.ge.s32.totalorder %s178, 1
                %s183 = sphi %s169, %s169
                %s184 = sphi %s167, %s167
              $region43: #{tpu_custom_call.1} parent=39 // loop_header_branch
                %181 = sbr.rel (%p179) target = $region47
              $region44: #{tpu_custom_call.1} parent=39 // loop_body
                %v185 = vld [vmem:[%s183] sm:$0xf]
                %186 = vst [vmem:[%s184] sm:$0xf] %v185
                %v187 = vld [vmem:[%s183 + $0x8] sm:$0xf]
                %188 = vst [vmem:[%s184 + $0x4] sm:$0xf] %v187
                %v189 = vld [vmem:[%s183 + $0x10] sm:$0xf]
                %190 = vst [vmem:[%s184 + $0x8] sm:$0xf] %v189
                %v191 = vld [vmem:[%s183 + $0x18] sm:$0xf]
                %192 = vst [vmem:[%s184 + $0xc] sm:$0xf] %v191
              $region45: #{tpu_custom_call.1} parent=39 // loop_footer
                %s182 = sadd.s32 1, %s178
              $region46: #{tpu_custom_call.1} parent=39 // loop_footer_branch
                %177 = sbr.rel target = $region42
              $region47: #{tpu_custom_call.1} parent=39 // loop_exit
                _
            $region40: #{tpu_custom_call.1} parent=31 // pred_fallthru
              _
          $region32: #{tpu_custom_call.1} parent=27 // pred_fallthru
            _
          %220 = vnop
        $region28: #{tpu_custom_call.1} parent=23 // pred_fallthru
          _
        // Predicated region
        $region66: #{tpu_custom_call.1} parent=23 // pred_check
          %p221 = pneg %p104
        $region67: #{tpu_custom_call.1} parent=23 // pred_check_branch
          %223 = sbr.rel (%p221) target = $region69
        $region68: #{tpu_custom_call.1} parent=23 // pred_region
          %s224 = sand.u32 %s94, 1
          %s225 = scalar_lea.sflag [#allocation4], %s224
          %s226 = sand.u32 %s94, 1
          %s227 = smul.addr %s226, 96
          %s228 = scalar_lea.vmem [#allocation3], %s227
          %s230 = ssub.s32 1536, 1536
          %231 = vsyncadd %s225, %s230
          %s232 = smul.addr %s16, 128
          %s233 = scalar_lea.hbm %s3, %s232
          %s234 = sshll.u32 %s228, 4
          %s235 = int_to_ptr.vmem [resolvable:$true] %s234
          %240 = dma.hbm_to_vmem [thread:$0]  %s233, 1536, %s235, %s225, 256, 128, 8
        $region69: #{tpu_custom_call.1} parent=23 // pred_fallthru
          _
      $region24: #{tpu_custom_call.1} parent=5 // pred_fallthru
        _
      %p241 = scmp.le.s32.totalorder 1, %s16
      %p242 = scmp.lt.s32.totalorder %s16, 3
      %p243 = pnand %p241, %p242
      %p244 = pneg %p243
      // Predicated region
      $region70: #{tpu_custom_call.1} parent=5 // pred_check
        _
      $region71: #{tpu_custom_call.1} parent=5 // pred_check_branch
        %246 = sbr.rel (%p243) target = $region73
      $region72: #{tpu_custom_call.1} parent=5 // pred_region
        %s247 = ssub.s32 %s16, 1
        %s248 = sand.u32 %s50, 1
        %s249 = sand.u32 %s50, 1
        %s250 = smul.addr %s249, 16
        %s251 = scalar_lea.vmem [#allocation2], %s250
        // Predicated region
        $region74: #{tpu_custom_call.1} parent=72 // pred_check
          %p252 = pneg %p63
        $region75: #{tpu_custom_call.1} parent=72 // pred_check_branch
          %254 = sbr.rel (%p252) target = $region77
        $region76: #{tpu_custom_call.1} parent=72 // pred_region
          _
        $region77: #{tpu_custom_call.1} parent=72 // pred_fallthru
          _
        %s255 = sand.u32 %s97, 1
        %s256 = scalar_lea.sflag [#allocation4], %s255
        %s257 = sand.u32 %s97, 1
        %s258 = smul.addr %s257, 96
        %s259 = scalar_lea.vmem [#allocation3], %s258
        // Predicated region
        $region78: #{tpu_custom_call.1} parent=72 // pred_check
          %p260 = pneg %p110
        $region79: #{tpu_custom_call.1} parent=72 // pred_check_branch
          %262 = sbr.rel (%p260) target = $region81
        $region80: #{tpu_custom_call.1} parent=72 // pred_region
          %263 = dma.done %s256, 1536
        $region81: #{tpu_custom_call.1} parent=72 // pred_fallthru
          _
        %p264 = pneg %p37
        %p265 = pneg %p34
        %s266 = sand.u32 %s50, 1
        %s267 = sand.u32 %s50, 1
        %s268 = smul.addr %s267, 16
        %s269 = scalar_lea.vmem [#allocation2], %s268
        %p270 = pneg %p63
        %p271 = pneg %p60
        %p272 = pneg %p84
        %p273 = pneg %p81
        %s274 = sand.u32 %s97, 1
        %s275 = scalar_lea.sflag [#allocation4], %s274
        %s276 = sand.u32 %s97, 1
        %s277 = smul.addr %s276, 96
        %s278 = scalar_lea.vmem [#allocation3], %s277
        %p279 = pneg %p110
        %p280 = pneg %p107
        %p281 = pneg %p136
        %p282 = pneg %p133
        %s283 = sand.u32 %s123, 1
        %s284 = scalar_lea.sflag [#allocation5], %s283
        %s285 = sand.u32 %s123, 1
        %s286 = smul.addr %s285, 192
        %s287 = scalar_lea.vmem [#allocation6], %s286
        %v289 = vld [vmem:[%s0] sm:$0xf]
        %v290 = vld [vmem:[%s0 + $0x4] sm:$0xf]
        %v291 = vld [vmem:[%s0 + $0x8] sm:$0xf]
        %v292 = vld [vmem:[%s0 + $0xc] sm:$0xf]
        %v293 = vld [vmem:[%s0 + $0x10] sm:$0xf]
        %v294 = vld [vmem:[%s0 + $0x14] sm:$0xf]
        %v295 = vld [vmem:[%s0 + $0x18] sm:$0xf]
        %v296 = vld [vmem:[%s0 + $0x1c] sm:$0xf]
        %v297 = vld [vmem:[%s0 + $0x20] sm:$0xf]
        %v298 = vld [vmem:[%s0 + $0x24] sm:$0xf]
        %v299 = vld [vmem:[%s0 + $0x28] sm:$0xf]
        %v300 = vld [vmem:[%s0 + $0x2c] sm:$0xf]
        %v301 = vld [vmem:[%s0 + $0x30] sm:$0xf]
        %v302 = vld [vmem:[%s0 + $0x34] sm:$0xf]
        %v303 = vld [vmem:[%s0 + $0x38] sm:$0xf]
        %v304 = vld [vmem:[%s0 + $0x3c] sm:$0xf]
        %v305 = vld [vmem:[%s251] sm:$0xf]
        %v306 = vld [vmem:[%s251 + $0x4] sm:$0xf]
        %v307 = vld [vmem:[%s251 + $0x8] sm:$0xf]
        %v308 = vld [vmem:[%s251 + $0xc] sm:$0xf]
        %v325 = vunpack.c.l.b16 %v289
        %v326 = vunpack.c.l.b16 %v290
        %v327 = vunpack.c.l.b16 %v291
        %v328 = vunpack.c.l.b16 %v292
        %v329 = vunpack.c.l.b16 %v293
        %v330 = vunpack.c.l.b16 %v294
        %v331 = vunpack.c.l.b16 %v295
        %v332 = vunpack.c.l.b16 %v296
        %v333 = vunpack.c.l.b16 %v297
        %v334 = vunpack.c.l.b16 %v298
        %v335 = vunpack.c.l.b16 %v299
        %v336 = vunpack.c.l.b16 %v300
        %v337 = vunpack.c.l.b16 %v301
        %v338 = vunpack.c.l.b16 %v302
        %v339 = vunpack.c.l.b16 %v303
        %v340 = vunpack.c.l.b16 %v304
        %v341 = vpack.c.b16 %v326, %v325
        %v342 = vpack.c.b16 %v328, %v327
        %v343 = vpack.c.b16 %v330, %v329
        %v344 = vpack.c.b16 %v332, %v331
        %v345 = vpack.c.b16 %v334, %v333
        %v346 = vpack.c.b16 %v336, %v335
        %v347 = vpack.c.b16 %v338, %v337
        %v348 = vpack.c.b16 %v340, %v339
        %v353 = vunpack.c.l.b16 %v305
        %v354 = vunpack.c.l.b16 %v306
        %v355 = vunpack.c.l.b16 %v307
        %v356 = vunpack.c.l.b16 %v308
        %v357 = vpack.c.b16 %v354, %v353
        %v358 = vpack.c.b16 %v356, %v355
        %vm361 = vcmask 261120
        %v363 = vsel %vm361, %v341, 0
        %v366 = vsel %vm361, %v342, 0
        %v369 = vsel %vm361, %v343, 0
        %v372 = vsel %vm361, %v344, 0
        %v375 = vsel %vm361, %v345, 0
        %v378 = vsel %vm361, %v346, 0
        %v381 = vsel %vm361, %v347, 0
        %v384 = vsel %vm361, %v348, 0
        %386 = vmatprep.subr.bf16.mxu0 0
        %387 = vmatpush1.bf16.msra.mxu0 %v357
        %388 = vmatprep.subr.bf16.mxu0 0
        %389 = vmatpush1.bf16.msra.mxu0 %v358
        %390 = vmatprep.subr.bf16.mxu0 0
        %391 = vmatpush1.bf16.msra.mxu0 0
        %392 = vmatprep.subr.bf16.mxu0 0
        %393 = vmatpush1.bf16.msra.mxu0 0
        %394 = vmatprep.subr.bf16.mxu0 0
        %395 = vmatpush1.bf16.msra.mxu0 0
        %396 = vmatprep.subr.bf16.mxu0 0
        %397 = vmatpush1.bf16.msra.mxu0 0
        %398 = vmatprep.subr.bf16.mxu0 0
        %399 = vmatpush1.bf16.msra.mxu0 0
        %400 = vmatprep.subr.bf16.mxu0 0
        %401 = vmatpush1.bf16.msra.mxu0 0
        %402 = vmatprep.subr.bf16.mxu0 0
        %403 = vmatpush1.bf16.msra.mxu0 0
        %404 = vmatprep.subr.bf16.mxu0 0
        %405 = vmatpush1.bf16.msra.mxu0 0
        %406 = vmatprep.subr.bf16.mxu0 0
        %407 = vmatpush1.bf16.msra.mxu0 0
        %408 = vmatprep.subr.bf16.mxu0 0
        %409 = vmatpush1.bf16.msra.mxu0 0
        %410 = vmatprep.subr.bf16.mxu0 0
        %411 = vmatpush1.bf16.msra.mxu0 0
        %412 = vmatprep.subr.bf16.mxu0 0
        %413 = vmatpush1.bf16.msra.mxu0 0
        %414 = vmatprep.subr.bf16.mxu0 0
        %415 = vmatpush1.bf16.msra.mxu0 0
        %416 = vmatprep.subr.bf16.mxu0 0
        %417 = vmatpush1.bf16.msra.mxu0 0
        %418 = vmatprep.mubr.bf16.mxu0 0
        %419 = vmatmul.mubr.bf16.gmra.mrb[0].mxu0 %v363
        %v420 = vpop.f32.mrb[0].mxu0
        %v421 = vadd.f32 0.0, %v420
        %v422 = vpop.f32.mrb[0].mxu0
        %v423 = vpop.f32.mrb[0].mxu0
        %v424 = vadd.f32 0.0, %v423
        %v425 = vpop.f32.mrb[0].mxu0
        %426 = vmatprep.mubr.bf16.mxu0 0
        %427 = vmatmul.mubr.bf16.gmra.mrb[0].mxu0 %v366
        %v428 = vpop.f32.mrb[0].mxu0
        %v429 = vadd.f32 0.0, %v428
        %v430 = vpop.f32.mrb[0].mxu0
        %v431 = vpop.f32.mrb[0].mxu0
        %v432 = vadd.f32 0.0, %v431
        %v433 = vpop.f32.mrb[0].mxu0
        %434 = vmatprep.mubr.bf16.mxu0 0
        %435 = vmatmul.mubr.bf16.gmra.mrb[0].mxu0 %v369
        %v436 = vpop.f32.mrb[0].mxu0
        %v437 = vadd.f32 0.0, %v436
        %v438 = vpop.f32.mrb[0].mxu0
        %v439 = vpop.f32.mrb[0].mxu0
        %v440 = vadd.f32 0.0, %v439
        %v441 = vpop.f32.mrb[0].mxu0
        %442 = vmatprep.mubr.bf16.mxu0 0
        %443 = vmatmul.mubr.bf16.gmra.mrb[0].mxu0 %v372
        %v444 = vpop.f32.mrb[0].mxu0
        %v445 = vadd.f32 0.0, %v444
        %v446 = vpop.f32.mrb[0].mxu0
        %v447 = vpop.f32.mrb[0].mxu0
        %v448 = vadd.f32 0.0, %v447
        %v449 = vpop.f32.mrb[0].mxu0
        %450 = vmatprep.mubr.bf16.mxu0 0
        %451 = vmatmul.mubr.bf16.gmra.mrb[0].mxu0 %v375
        %v452 = vpop.f32.mrb[0].mxu0
        %v453 = vadd.f32 0.0, %v452
        %v454 = vpop.f32.mrb[0].mxu0
        %v455 = vpop.f32.mrb[0].mxu0
        %v456 = vadd.f32 0.0, %v455
        %v457 = vpop.f32.mrb[0].mxu0
        %458 = vmatprep.mubr.bf16.mxu0 0
        %459 = vmatmul.mubr.bf16.gmra.mrb[0].mxu0 %v378
        %v460 = vpop.f32.mrb[0].mxu0
        %v461 = vadd.f32 0.0, %v460
        %v462 = vpop.f32.mrb[0].mxu0
        %v463 = vpop.f32.mrb[0].mxu0
        %v464 = vadd.f32 0.0, %v463
        %v465 = vpop.f32.mrb[0].mxu0
        %466 = vmatprep.mubr.bf16.mxu0 0
        %467 = vmatmul.mubr.bf16.gmra.mrb[0].mxu0 %v381
        %v468 = vpop.f32.mrb[0].mxu0
        %v469 = vadd.f32 0.0, %v468
        %v470 = vpop.f32.mrb[0].mxu0
        %v471 = vpop.f32.mrb[0].mxu0
        %v472 = vadd.f32 0.0, %v471
        %v473 = vpop.f32.mrb[0].mxu0
        %474 = vmatprep.mubr.bf16.mxu0 0
        %475 = vmatmul.mubr.bf16.gmra.mrb[0].mxu0 %v384
        %v476 = vpop.f32.mrb[0].mxu0
        %v477 = vadd.f32 0.0, %v476
        %v478 = vpop.f32.mrb[0].mxu0
        %v479 = vpop.f32.mrb[0].mxu0
        %v480 = vadd.f32 0.0, %v479
        %v481 = vpop.f32.mrb[0].mxu0
        %482 = vdwg.mxu0
        %v483 = vmax.f32 %v421, %v437
        %v484 = vmax.f32 %v424, %v440
        %v485 = vmax.f32 %v429, %v445
        %v486 = vmax.f32 %v432, %v448
        %v487 = vmax.f32 %v483, %v453
        %v488 = vmax.f32 %v484, %v456
        %v489 = vmax.f32 %v485, %v461
        %v490 = vmax.f32 %v486, %v464
        %v491 = vmax.f32 %v487, %v469
        %v492 = vmax.f32 %v488, %v472
        %v493 = vmax.f32 %v489, %v477
        %v494 = vmax.f32 %v490, %v480
        %v495 = vmax.f32 %v491, %v492
        %v496 = vmax.f32 %v493, %v494
        %v497 = vmax.f32 %v495, %v496
        %v498 = vrot.slane %v497, 4
        %v499 = vmax.f32 %v497, %v498
        %v500 = vrot.slane %v499, 2
        %v501 = vmax.f32 %v499, %v500
        %v502 = vrot.slane %v501, 1
        %v503 = vmax.f32 %v501, %v502
        %v504 = vsub.f32 %v421, %v503
        %v505 = vsub.f32 %v424, %v503
        %v506 = vsub.f32 %v429, %v503
        %v507 = vsub.f32 %v432, %v503
        %v508 = vsub.f32 %v437, %v503
        %v509 = vsub.f32 %v440, %v503
        %v510 = vsub.f32 %v445, %v503
        %v511 = vsub.f32 %v448, %v503
        %v512 = vsub.f32 %v453, %v503
        %v513 = vsub.f32 %v456, %v503
        %v514 = vsub.f32 %v461, %v503
        %v515 = vsub.f32 %v464, %v503
        %v516 = vsub.f32 %v469, %v503
        %v517 = vsub.f32 %v472, %v503
        %v518 = vsub.f32 %v477, %v503
        %v519 = vsub.f32 %v480, %v503
        %v520 = vmul.f32 %v504, 1.442695
        %v521 = vpow.pop %v520
        %v522 = vmul.f32 %v505, 1.442695
        %v523 = vpow.pop %v522
        %v524 = vmul.f32 %v506, 1.442695
        %v525 = vpow.pop %v524
        %v526 = vmul.f32 %v507, 1.442695
        %v527 = vpow.pop %v526
        %v528 = vmul.f32 %v508, 1.442695
        %v529 = vpow.pop %v528
        %v530 = vmul.f32 %v509, 1.442695
        %v531 = vpow.pop %v530
        %v532 = vmul.f32 %v510, 1.442695
        %v533 = vpow.pop %v532
        %v534 = vmul.f32 %v511, 1.442695
        %v535 = vpow.pop %v534
        %v536 = vmul.f32 %v512, 1.442695
        %v537 = vpow.pop %v536
        %v538 = vmul.f32 %v513, 1.442695
        %v539 = vpow.pop %v538
        %v540 = vmul.f32 %v514, 1.442695
        %v541 = vpow.pop %v540
        %v542 = vmul.f32 %v515, 1.442695
        %v543 = vpow.pop %v542
        %v544 = vmul.f32 %v516, 1.442695
        %v545 = vpow.pop %v544
        %v546 = vmul.f32 %v517, 1.442695
        %v547 = vpow.pop %v546
        %v548 = vmul.f32 %v518, 1.442695
        %v549 = vpow.pop %v548
        %v550 = vmul.f32 %v519, 1.442695
        %v551 = vpow.pop %v550
        %v552 = vadd.f32 %v521, %v523
        %v553 = vadd.f32 %v552, %v525
        %v554 = vadd.f32 %v553, %v527
        %v555 = vadd.f32 %v554, %v529
        %v556 = vadd.f32 %v555, %v531
        %v557 = vadd.f32 %v556, %v533
        %v558 = vadd.f32 %v557, %v535
        %v559 = vadd.f32 %v558, %v537
        %v560 = vadd.f32 %v559, %v539
        %v561 = vadd.f32 %v560, %v541
        %v562 = vadd.f32 %v561, %v543
        %v563 = vadd.f32 %v562, %v545
        %v564 = vadd.f32 %v563, %v547
        %v565 = vadd.f32 %v564, %v549
        %v566 = vadd.f32 %v565, %v551
        %v567 = vrot.slane %v566, 4
        %v568 = vadd.f32 %v566, %v567
        %v569 = vrot.slane %v568, 2
        %v570 = vadd.f32 %v568, %v569
        %v571 = vrot.slane %v570, 1
        %v572 = vadd.f32 %v570, %v571
        %v573 = vrcp.pop %v572
        %v574 = vld [vmem:[%s2] sm:$0xf]
        %v575 = vld [vmem:[%s2 + $0x4] sm:$0xf]
        %v576 = vld [vmem:[%s2 + $0x8] sm:$0xf]
        %v577 = vld [vmem:[%s2 + $0xc] sm:$0xf]
        %v578 = vld [vmem:[%s2 + $0x10] sm:$0xf]
        %v579 = vld [vmem:[%s2 + $0x14] sm:$0xf]
        %v580 = vld [vmem:[%s2 + $0x18] sm:$0xf]
        %v581 = vld [vmem:[%s2 + $0x1c] sm:$0xf]
        %v582 = vld [vmem:[%s2 + $0x20] sm:$0xf]
        %v583 = vld [vmem:[%s2 + $0x24] sm:$0xf]
        %v584 = vld [vmem:[%s2 + $0x28] sm:$0xf]
        %v585 = vld [vmem:[%s2 + $0x2c] sm:$0xf]
        %v586 = vld [vmem:[%s2 + $0x30] sm:$0x3]
        %v587 = vpack.c.bf16 %v523, %v521
        %v588 = vpack.c.bf16 %v527, %v525
        %v589 = vpack.c.bf16 %v531, %v529
        %v590 = vpack.c.bf16 %v535, %v533
        %v591 = vpack.c.bf16 %v539, %v537
        %v592 = vpack.c.bf16 %v543, %v541
        %v593 = vpack.c.bf16 %v547, %v545
        %v594 = vpack.c.bf16 %v551, %v549
        %v608 = vunpack.c.l.b16 %v574
        %v609 = vunpack.c.l.b16 %v575
        %v610 = vunpack.c.l.b16 %v576
        %v611 = vunpack.c.l.b16 %v577
        %v612 = vunpack.c.l.b16 %v578
        %v613 = vunpack.c.l.b16 %v579
        %v614 = vunpack.c.l.b16 %v580
        %v615 = vunpack.c.l.b16 %v581
        %v616 = vunpack.c.l.b16 %v582
        %v617 = vunpack.c.l.b16 %v583
        %v618 = vunpack.c.l.b16 %v584
        %v619 = vunpack.c.l.b16 %v585
        %v620 = vunpack.c.l.b16 %v586
        %v621 = vpack.c.b16 %v609, %v608
        %v622 = vpack.c.b16 %v611, %v610
        %v623 = vpack.c.b16 %v613, %v612
        %v624 = vpack.c.b16 %v615, %v614
        %v625 = vpack.c.b16 %v617, %v616
        %v626 = vpack.c.b16 %v619, %v618
        %v627 = vpack.c.b16 %v620, %v620
        %635 = vmatprep.subr.bf16.mxu0 0
        %636 = vmatpush1.bf16.msra.mxu0 %v587
        %637 = vmatprep.subr.bf16.mxu0 0
        %638 = vmatpush1.bf16.msra.mxu0 %v588
        %639 = vmatprep.subr.bf16.mxu0 0
        %640 = vmatpush1.bf16.msra.mxu0 %v589
        %641 = vmatprep.subr.bf16.mxu0 0
        %642 = vmatpush1.bf16.msra.mxu0 %v590
        %643 = vmatprep.subr.bf16.mxu0 0
        %644 = vmatpush1.bf16.msra.mxu0 %v591
        %645 = vmatprep.subr.bf16.mxu0 0
        %646 = vmatpush1.bf16.msra.mxu0 %v592
        %647 = vmatprep.subr.bf16.mxu0 0
        %648 = vmatpush1.bf16.msra.mxu0 %v593
        %649 = vmatprep.subr.bf16.mxu0 0
        %650 = vmatpush1.bf16.msra.mxu0 %v594
        %651 = vmatprep.subr.bf16.mxu0 0
        %652 = vmatpush1.bf16.msra.mxu0 0
        %653 = vmatprep.subr.bf16.mxu0 0
        %654 = vmatpush1.bf16.msra.mxu0 0
        %655 = vmatprep.subr.bf16.mxu0 0
        %656 = vmatpush1.bf16.msra.mxu0 0
        %657 = vmatprep.subr.bf16.mxu0 0
        %658 = vmatpush1.bf16.msra.mxu0 0
        %659 = vmatprep.subr.bf16.mxu0 0
        %660 = vmatpush1.bf16.msra.mxu0 0
        %661 = vmatprep.subr.bf16.mxu0 0
        %662 = vmatpush1.bf16.msra.mxu0 0
        %663 = vmatprep.subr.bf16.mxu0 0
        %664 = vmatpush1.bf16.msra.mxu0 0
        %665 = vmatprep.subr.bf16.mxu0 0
        %666 = vmatpush1.bf16.msra.mxu0 0
        %667 = vmatprep.mubr.bf16.mxu0 0
        %668 = vmatmul.mubr.bf16.gmra.mrb[0].mxu0 %v621
        %v669 = vpop.f32.mrb[0].mxu0
        %v670 = vadd.f32 0.0, %v669
        %v671 = vpop.f32.mrb[0].mxu0
        %v672 = vpop.f32.mrb[0].mxu0
        %v673 = vadd.f32 0.0, %v672
        %v674 = vpop.f32.mrb[0].mxu0
        %675 = vmatprep.mubr.bf16.mxu0 0
        %676 = vmatmul.mubr.bf16.gmra.mrb[0].mxu0 %v622
        %v677 = vpop.f32.mrb[0].mxu0
        %v678 = vadd.f32 0.0, %v677
        %v679 = vpop.f32.mrb[0].mxu0
        %v680 = vpop.f32.mrb[0].mxu0
        %v681 = vadd.f32 0.0, %v680
        %v682 = vpop.f32.mrb[0].mxu0
        %683 = vmatprep.mubr.bf16.mxu0 0
        %684 = vmatmul.mubr.bf16.gmra.mrb[0].mxu0 %v623
        %v685 = vpop.f32.mrb[0].mxu0
        %v686 = vadd.f32 0.0, %v685
        %v687 = vpop.f32.mrb[0].mxu0
        %v688 = vpop.f32.mrb[0].mxu0
        %v689 = vadd.f32 0.0, %v688
        %v690 = vpop.f32.mrb[0].mxu0
        %691 = vmatprep.mubr.bf16.mxu0 0
        %692 = vmatmul.mubr.bf16.gmra.mrb[0].mxu0 %v624
        %v693 = vpop.f32.mrb[0].mxu0
        %v694 = vadd.f32 0.0, %v693
        %v695 = vpop.f32.mrb[0].mxu0
        %v696 = vpop.f32.mrb[0].mxu0
        %v697 = vadd.f32 0.0, %v696
        %v698 = vpop.f32.mrb[0].mxu0
        %699 = vmatprep.mubr.bf16.mxu0 0
        %700 = vmatmul.mubr.bf16.gmra.mrb[0].mxu0 %v625
        %v701 = vpop.f32.mrb[0].mxu0
        %v702 = vadd.f32 0.0, %v701
        %v703 = vpop.f32.mrb[0].mxu0
        %v704 = vpop.f32.mrb[0].mxu0
        %v705 = vadd.f32 0.0, %v704
        %v706 = vpop.f32.mrb[0].mxu0
        %707 = vmatprep.mubr.bf16.mxu0 0
        %708 = vmatmul.mubr.bf16.gmra.mrb[0].mxu0 %v626
        %v709 = vpop.f32.mrb[0].mxu0
        %v710 = vadd.f32 0.0, %v709
        %v711 = vpop.f32.mrb[0].mxu0
        %v712 = vpop.f32.mrb[0].mxu0
        %v713 = vadd.f32 0.0, %v712
        %v714 = vpop.f32.mrb[0].mxu0
        %715 = vmatprep.mubr.bf16.mxu0 0
        %716 = vmatmul.mubr.bf16.gmra.mrb[0].mxu0 %v627
        %v717 = vpop.f32.mrb[0].mxu0
        %v718 = vadd.f32 0.0, %v717
        %v719 = vpop.f32.mrb[0].mxu0
        %v720 = vpop.f32.mrb[0].mxu0
        %v721 = vpop.f32.mrb[0].mxu0
        %722 = vdwg.mxu0
        %v723 = vmul.f32 %v670, %v573
        %v724 = vmul.f32 %v673, %v573
        %v725 = vmul.f32 %v678, %v573
        %v726 = vmul.f32 %v681, %v573
        %v727 = vmul.f32 %v686, %v573
        %v728 = vmul.f32 %v689, %v573
        %v729 = vmul.f32 %v694, %v573
        %v730 = vmul.f32 %v697, %v573
        %v731 = vmul.f32 %v702, %v573
        %v732 = vmul.f32 %v705, %v573
        %v733 = vmul.f32 %v710, %v573
        %v734 = vmul.f32 %v713, %v573
        %v735 = vmul.f32 %v718, %v573
        %v738 = vunpack.c.l.s4 1966171168
        %v739 = vunpack.c.0.s8 %v738
        %v740 = vlaneseq
        %v741 = vshrl.u32 %v740, 7
        %v742 = vsub.s32 %v739, %v741
        %v743 = vrot.slane %v735, %v742
        %v744 = vcombine.high %v743, %v743
        %v746 = vunpack.c.l.s4 1966171168
        %v747 = vunpack.c.0.s8 %v746
        %v748 = vlaneseq
        %v749 = vshrl.u32 %v748, 7
        %v750 = vsub.s32 %v747, %v749
        %v751 = vrot.slane %v743, %v750
        %v753 = vunpack.c.l.s4 1966171168
        %v754 = vunpack.c.0.s8 %v753
        %v755 = vlaneseq
        %v756 = vshrl.u32 %v755, 7
        %v757 = vsub.s32 %v754, %v756
        %v758 = vrot.slane %v744, %v757
        %v759 = vcombine.high %v751, %v751
        %760 = vst [vmem:[%s287] sm:$0xff] %v723
        %761 = vst [vmem:[%s287 + $0x8] sm:$0xff] %v724
        %762 = vst [vmem:[%s287 + $0x10] sm:$0xff] %v725
        %763 = vst [vmem:[%s287 + $0x18] sm:$0xff] %v726
        %764 = vst [vmem:[%s287 + $0x40] sm:$0xff] %v727
        %765 = vst [vmem:[%s287 + $0x48] sm:$0xff] %v728
        %766 = vst [vmem:[%s287 + $0x50] sm:$0xff] %v729
        %767 = vst [vmem:[%s287 + $0x58] sm:$0xff] %v730
        %768 = vst [vmem:[%s287 + $0x80] sm:$0xff] %v731
        %769 = vst [vmem:[%s287 + $0x88] sm:$0xff] %v732
        %770 = vst [vmem:[%s287 + $0x90] sm:$0xff] %v733
        %771 = vst [vmem:[%s287 + $0x98] sm:$0xff] %v734
        %v772 = vld [vmem:[%s259] sm:$0xff]
        %v773 = vld [vmem:[%s259 + $0x8] sm:$0xff]
        %v774 = vld [vmem:[%s259 + $0x10] sm:$0xff]
        %v775 = vld [vmem:[%s259 + $0x18] sm:$0xff]
        %v776 = vld [vmem:[%s259 + $0x20] sm:$0xff]
        %v777 = vld [vmem:[%s259 + $0x28] sm:$0xff]
        %v778 = vld [vmem:[%s259 + $0x30] sm:$0xff]
        %v779 = vld [vmem:[%s259 + $0x38] sm:$0xff]
        %v780 = vld [vmem:[%s259 + $0x40] sm:$0xff]
        %v781 = vld [vmem:[%s259 + $0x48] sm:$0xff]
        %v782 = vld [vmem:[%s259 + $0x50] sm:$0xff]
        %v783 = vld [vmem:[%s259 + $0x58] sm:$0xff]
        %v784 = vlaneseq
        %v785 = vshrl.u32 %v784, 7
        %v786 = vsub.s32 0, %v785
        %v787 = vrot.slane %v751, %v786
        %v788 = vlaneseq
        %v789 = vshrl.u32 %v788, 7
        %v790 = vsub.s32 0, %v789
        %v791 = vrot.slane %v758, %v790
        %v792 = vlaneseq
        %v793 = vshrl.u32 %v792, 7
        %v794 = vsub.s32 0, %v793
        %v795 = vrot.slane %v759, %v794
        %v799 = vmul.f32 %v772, %v787
        %v800 = vmul.f32 %v773, %v787
        %v801 = vmul.f32 %v774, %v787
        %v802 = vmul.f32 %v775, %v787
        %v803 = vmul.f32 %v776, %v791
        %v804 = vmul.f32 %v777, %v791
        %v805 = vmul.f32 %v778, %v791
        %v806 = vmul.f32 %v779, %v791
        %v807 = vmul.f32 %v780, %v795
        %v808 = vmul.f32 %v781, %v795
        %v809 = vmul.f32 %v782, %v795
        %v810 = vmul.f32 %v783, %v795
        %811 = vst [vmem:[%s287 + $0x20] sm:$0xff] %v799
        %812 = vst [vmem:[%s287 + $0x28] sm:$0xff] %v800
        %813 = vst [vmem:[%s287 + $0x30] sm:$0xff] %v801
        %814 = vst [vmem:[%s287 + $0x38] sm:$0xff] %v802
        %815 = vst [vmem:[%s287 + $0x60] sm:$0xff] %v803
        %816 = vst [vmem:[%s287 + $0x68] sm:$0xff] %v804
        %817 = vst [vmem:[%s287 + $0x70] sm:$0xff] %v805
        %818 = vst [vmem:[%s287 + $0x78] sm:$0xff] %v806
        %819 = vst [vmem:[%s287 + $0xa0] sm:$0xff] %v807
        %820 = vst [vmem:[%s287 + $0xa8] sm:$0xff] %v808
        %821 = vst [vmem:[%s287 + $0xb0] sm:$0xff] %v809
        %822 = vst [vmem:[%s287 + $0xb8] sm:$0xff] %v810
        %s823 = sand.u32 %s123, 1
        %s824 = scalar_lea.sflag [#allocation5], %s823
        %s825 = sand.u32 %s123, 1
        %s826 = smul.addr %s825, 192
        %s827 = scalar_lea.vmem [#allocation6], %s826
        // Predicated region
        $region82: #{tpu_custom_call.1} parent=72 // pred_check
          %p828 = pneg %p133
        $region83: #{tpu_custom_call.1} parent=72 // pred_check_branch
          %830 = sbr.rel (%p828) target = $region85
        $region84: #{tpu_custom_call.1} parent=72 // pred_region
          %s832 = ssub.s32 3072, 3072
          %833 = vsyncadd %s824, %s832
          %s834 = smul.addr %s21, 128
          %s835 = scalar_lea.hbm %s4, %s834
          %s836 = sshll.u32 %s827, 4
          %s837 = int_to_ptr.vmem [resolvable:$true] %s836
          %842 = dma.vmem_to_hbm [thread:$0]  %s837, 3072, %s835, %s824, 128, 256, 8
        $region85: #{tpu_custom_call.1} parent=72 // pred_fallthru
          _
      $region73: #{tpu_custom_call.1} parent=5 // pred_fallthru
        _
      %p843 = scmp.le.s32.totalorder 2, %s16
      // Predicated region
      $region86: #{tpu_custom_call.1} parent=5 // pred_check
        %p844 = pneg %p843
      $region87: #{tpu_custom_call.1} parent=5 // pred_check_branch
        %846 = sbr.rel (%p844) target = $region89
      $region88: #{tpu_custom_call.1} parent=5 // pred_region
        %s847 = ssub.s32 %s16, 2
        // Predicated region
        $region90: #{tpu_custom_call.1} parent=88 // pred_check
          %p848 = pneg %p139
        $region91: #{tpu_custom_call.1} parent=88 // pred_check_branch
          %850 = sbr.rel (%p848) target = $region93
        $region92: #{tpu_custom_call.1} parent=88 // pred_region
          %s851 = sand.u32 %s124, 1
          %s852 = scalar_lea.sflag [#allocation5], %s851
          %s853 = sand.u32 %s124, 1
          %s854 = smul.addr %s853, 192
          %s855 = scalar_lea.vmem [#allocation6], %s854
          %856 = dma.done %s852, 3072
        $region93: #{tpu_custom_call.1} parent=88 // pred_fallthru
          _
      $region89: #{tpu_custom_call.1} parent=5 // pred_fallthru
        _
    $region6: #{tpu_custom_call.1} parent=1 // loop_footer
      %s20 = sadd.s32 1, %s16
    $region7: #{tpu_custom_call.1} parent=1 // loop_footer_branch
      %15 = sbr.rel target = $region3
    $region8: #{tpu_custom_call.1} parent=1 // loop_exit
      _
    %857 = vsyncpa [#allocation4], 1
    %s858 = scalar_lea.sflag [#allocation4], 1
    %859 = vsyncpa %s858, 1
    %860 = vsyncpa [#allocation5], 1
    %s861 = scalar_lea.sflag [#allocation5], 1
    %862 = vsyncpa %s861, 1

</llo_original>
